<compile_context>
chip_gen: v7x
topology: tpu7x:2x2x1
jax: 0.10.0
libtpu: 0.0.40
codegen_flags: <defaults>
</compile_context>

<pallas_src>
import functools
import math

import jax
import jax.numpy as jnp
import numpy as np
from jax.experimental import pallas as pl
from jax.experimental.pallas import tpu as pltpu


# ----------------------------------------------------------------------------
# Fused encoder kernel: embedding (as one-hot matmul) + N bidirectional LSTM
# layers, single grid step, whole sequence VMEM-resident.
# ----------------------------------------------------------------------------
def _encoder_kernel(seq, batch, hidden, num_layers, *refs):
    S, B, H = seq, batch, hidden
    N = S * B
    f32 = jnp.float32

    out_ref = refs[-1]
    ids_ref, ew1_ref, b1_ref, whh1f_ref, whh1b_ref = refs[0:5]
    layer_refs = refs[5:-1]          # 5 refs per extra layer

    def cell(gates, c):
        # PyTorch gate order: i, f, g, o along the 4H lane axis.
        i_g = jax.nn.sigmoid(gates[:, 0 * H:1 * H])
        f_g = jax.nn.sigmoid(gates[:, 1 * H:2 * H])
        g_g = jnp.tanh(gates[:, 2 * H:3 * H])
        o_g = jax.nn.sigmoid(gates[:, 3 * H:4 * H])
        c_new = f_g * c + i_g * g_g
        h_new = o_g * jnp.tanh(c_new)
        return h_new, c_new

    def bilstm(gx, whhf, whhb):
        """gx: (N, 8H) precomputed input gates (fwd lanes [0:4H], bwd [4H:8H]).
        Returns (hf_seq, hb_seq), each (N, H), time-major."""
        zero = jnp.zeros((B, H), f32)
        hf, cf = zero, zero
        hb, cb = zero, zero
        hf_list = [None] * S
        hb_list = [None] * S
        # Static unroll (S is small); both directions interleaved so their
        # independent h @ W_hh matmuls overlap with the gate math.
        for t in range(S):
            tb = S - 1 - t
            gf = gx[t * B:(t + 1) * B, 0:4 * H]
            gb = gx[tb * B:(tb + 1) * B, 4 * H:8 * H]
            gates_f = gf + jnp.dot(hf, whhf, preferred_element_type=f32)
            gates_b = gb + jnp.dot(hb, whhb, preferred_element_type=f32)
            hf, cf = cell(gates_f, cf)
            hb, cb = cell(gates_b, cb)
            hf_list[t] = hf
            hb_list[tb] = hb        # PyTorch reverse-dir alignment: out[tb]
        hf_seq = jnp.concatenate(hf_list, axis=0)      # (N, H)
        hb_seq = jnp.concatenate(hb_list, axis=0)      # (N, H)
        return hf_seq, hb_seq

    # ---- layer 1: embedding folded into the input projection (one matmul) --
    vocab = ew1_ref.shape[0]
    ids = ids_ref[...]                                             # (N, 1)
    onehot = (jax.lax.broadcasted_iota(jnp.int32, (N, vocab), 1) == ids
              ).astype(f32)                                        # (N, V)
    gx = jnp.dot(onehot, ew1_ref[...],
                 preferred_element_type=f32) + b1_ref[...]         # (N, 8H)
    hf, hb = bilstm(gx, whh1f_ref[...], whh1b_ref[...])

    # ---- layers 2..L: whole-sequence input projection, then recurrence -----
    for l in range(num_layers - 1):
        wf_ref, wb_ref, b_ref, whhf_ref, whhb_ref = layer_refs[5 * l:5 * l + 5]
        gx = (jnp.dot(hf, wf_ref[...], preferred_element_type=f32)
              + jnp.dot(hb, wb_ref[...], preferred_element_type=f32)
              + b_ref[...])                                        # (N, 8H)
        hf, hb = bilstm(gx, whhf_ref[...], whhb_ref[...])

    # ---- single bulk store of the final [fwd | bwd] sequence ----------------
    out_ref[...] = jnp.concatenate([hf, hb], axis=-1)              # (N, 2H)


# ----------------------------------------------------------------------------
# TextEncoder wrapper: weight prep + one pallas_call
# ----------------------------------------------------------------------------
def text_encoder_forward(params, y_noised):
    """y_noised: int32 [batch, seq] -> f32 [batch, seq, 2*state_size]."""
    table = jnp.asarray(params["emb"], jnp.float32)                # (V, E)
    layers = params["lstm"]
    num_layers = len(layers)
    hidden = layers[0]["fwd"][1].shape[1]
    batch, seq = y_noised.shape
    n = seq * batch

    def prep_layer(layer):
        w_ih_f, w_hh_f, b_ih_f, b_hh_f = [jnp.asarray(a, jnp.float32)
                                          for a in layer["fwd"]]
        w_ih_b, w_hh_b, b_ih_b, b_hh_b = [jnp.asarray(a, jnp.float32)
                                          for a in layer["bwd"]]
        wih = jnp.concatenate([w_ih_f.T, w_ih_b.T], axis=1)        # (in, 8H)
        bias = jnp.concatenate([b_ih_f + b_hh_f,
                                b_ih_b + b_hh_b]).reshape(1, 8 * hidden)
        return wih, bias, w_hh_f.T, w_hh_b.T

    # Layer 1: fold the embedding table into the input projection.
    wih1, b1, whh1f, whh1b = prep_layer(layers[0])
    ew1 = jnp.dot(table, wih1)                                     # (V, 8H)

    inputs, in_specs = [], []

    def add(x):
        inputs.append(x)
        in_specs.append(pl.BlockSpec(x.shape,
                                     lambda i, nd=x.ndim: (0,) * nd))

    # time-major flattened ids: row n = t*B + b
    ids_tm = jnp.transpose(y_noised.astype(jnp.int32), (1, 0)).reshape(n, 1)
    add(ids_tm)
    add(ew1)
    add(b1)
    add(whh1f)
    add(whh1b)

    for layer in layers[1:]:
        wih, bias, whhf, whhb = prep_layer(layer)
        # Split the input projection by the fwd/bwd halves of this layer's
        # input (PyTorch concat order: [h_fwd | h_bwd]).
        add(wih[:hidden, :])     # applied to h_fwd   (H, 8H)
        add(wih[hidden:, :])     # applied to h_bwd   (H, 8H)
        add(bias)
        add(whhf)
        add(whhb)

    out = pl.pallas_call(
        functools.partial(_encoder_kernel, seq, batch, hidden, num_layers),
        out_shape=jax.ShapeDtypeStruct((n, 2 * hidden), jnp.float32),
        grid=(1,),
        in_specs=in_specs,
        out_specs=pl.BlockSpec((n, 2 * hidden), lambda i: (0, 0)),
        compiler_params=pltpu.CompilerParams(
            dimension_semantics=("arbitrary",)),
    )(*inputs)

    out = out.reshape(seq, batch, 2 * hidden)
    return jnp.transpose(out, (1, 0, 2))                           # [B, S, 2H]


def text_autoencoder_forward(params, y, y_noised, decode_step, noise_lens=None):
    """Mirrors TextAutoEncoder.forward.

    Computes y_encoded = self.encoder(y_noised) with a single fused Pallas
    kernel.
    # TODO(synk): the attend-and-spell loop (asr.attention, asr.decoder,
    # asr.embed, asr.char_trans, teacher forcing / Categorical sampling)
    # depends on the external `asr` module which is not defined in this file,
    # so it is not translated; we return the encoder output instead of
    # att_output.
    """
    del y, decode_step
    y_encoded = text_encoder_forward(params, y_noised)
    return noise_lens, y_encoded


# ----------------------------------------------------------------------------
# Deterministic parameter init (matches nn.Embedding / nn.LSTM shapes)
# ----------------------------------------------------------------------------
def init_params(key, char_dim, emb_dim, state_size, num_layers):
    bound = 1.0 / math.sqrt(state_size)
    keys = jax.random.split(key, 1 + num_layers * 2 * 4)
    params = {"emb": jax.random.normal(keys[0], (char_dim, emb_dim), jnp.float32)}
    lstm = []
    in_dim = emb_dim
    k = 1
    for _ in range(num_layers):
        layer = {}
        for direction in ("fwd", "bwd"):
            w_ih = jax.random.uniform(keys[k + 0], (4 * state_size, in_dim),
                                      jnp.float32, -bound, bound)
            w_hh = jax.random.uniform(keys[k + 1], (4 * state_size, state_size),
                                      jnp.float32, -bound, bound)
            b_ih = jax.random.uniform(keys[k + 2], (4 * state_size,),
                                      jnp.float32, -bound, bound)
            b_hh = jax.random.uniform(keys[k + 3], (4 * state_size,),
                                      jnp.float32, -bound, bound)
            layer[direction] = (w_ih, w_hh, b_ih, b_hh)
            k += 4
        lstm.append(layer)
        in_dim = 2 * state_size
    params["lstm"] = lstm
    return params


# ----------------------------------------------------------------------------
# Pure-JAX reference (sanity check of the Pallas kernel)
# ----------------------------------------------------------------------------
def _ref_lstm_dir(x_tm, w_ih, w_hh, b_ih, b_hh, reverse):
    hidden = w_hh.shape[1]
    batch = x_tm.shape[1]
    xs = x_tm[::-1] if reverse else x_tm

    def step(carry, x):
        h, c = carry
        gates = x @ w_ih.T + h @ w_hh.T + b_ih + b_hh
        i, f, g, o = jnp.split(gates, 4, axis=-1)
        i, f, o = jax.nn.sigmoid(i), jax.nn.sigmoid(f), jax.nn.sigmoid(o)
        g = jnp.tanh(g)
        c = f * c + i * g
        h = o * jnp.tanh(c)
        return (h, c), h

    init = (jnp.zeros((batch, hidden), jnp.float32),
            jnp.zeros((batch, hidden), jnp.float32))
    _, ys = jax.lax.scan(step, init, xs)
    return ys[::-1] if reverse else ys


def _ref_encoder(params, y_noised):
    emb = params["emb"][y_noised]
    x_tm = jnp.transpose(emb, (1, 0, 2))
    for layer in params["lstm"]:
        fwd = _ref_lstm_dir(x_tm, *layer["fwd"], reverse=False)
        bwd = _ref_lstm_dir(x_tm, *layer["bwd"], reverse=True)
        x_tm = jnp.concatenate([fwd, bwd], axis=-1)
    return jnp.transpose(x_tm, (1, 0, 2))


# ----------------------------------------------------------------------------
if __name__ == "__main__":
    char_dim, emb_dim, state_size, num_layers = 40, 32, 32, 2
    batch, seq = 2, 8
    decode_step = seq

    root = jax.random.PRNGKey(0)
    pkey, dkey = jax.random.split(root)
    params = init_params(pkey, char_dim, emb_dim, state_size, num_layers)

    y = jax.random.randint(dkey, (batch, seq), 0, char_dim, dtype=jnp.int32)
    y_noised = y                                           # no noise
    noise_lens = jnp.full((batch,), seq, dtype=jnp.int32)

    lens_out, y_encoded = text_autoencoder_forward(
        params, y, y_noised, decode_step, noise_lens)
    y_encoded = jax.block_until_ready(y_encoded)

    assert y_encoded.shape == (batch, seq, 2 * state_size)

    ref = _ref_encoder(params, y_noised)
    np.testing.assert_allclose(np.asarray(y_encoded), np.asarray(ref),
                               rtol=5e-2, atol=5e-2)

    print("KERNEL_OK")
</pallas_src>

<mosaic_0001>
module attributes {stable_mosaic.version = 11 : i64} {
  func.func @_encoder_kernel(%arg0: i32, %arg1: memref<16x1xi32, #tpu.memory_space<vmem>>, %arg2: memref<40x256xf32, #tpu.memory_space<vmem>>, %arg3: memref<1x256xf32, #tpu.memory_space<vmem>>, %arg4: memref<32x128xf32, #tpu.memory_space<vmem>>, %arg5: memref<32x128xf32, #tpu.memory_space<vmem>>, %arg6: memref<32x256xf32, #tpu.memory_space<vmem>>, %arg7: memref<32x256xf32, #tpu.memory_space<vmem>>, %arg8: memref<1x256xf32, #tpu.memory_space<vmem>>, %arg9: memref<32x128xf32, #tpu.memory_space<vmem>>, %arg10: memref<32x128xf32, #tpu.memory_space<vmem>>, %arg11: memref<16x64xf32, #tpu.memory_space<vmem>>) attributes {dimension_semantics = [#tpu.dimension_semantics<arbitrary>], iteration_bounds = array<i64: 1>, scalar_prefetch = 0 : i64, scratch_operands = 0 : i64, tpu.core_type = #tpu.core_type<tc>, window_params = [{pipeline_mode = #tpu.pipeline_mode<synchronous>, transform_indices = @transform_0, window_bounds = array<i64: 16, 1>}, {pipeline_mode = #tpu.pipeline_mode<synchronous>, transform_indices = @transform_1, window_bounds = array<i64: 40, 256>}, {pipeline_mode = #tpu.pipeline_mode<synchronous>, transform_indices = @transform_2, window_bounds = array<i64: 1, 256>}, {pipeline_mode = #tpu.pipeline_mode<synchronous>, transform_indices = @transform_3, window_bounds = array<i64: 32, 128>}, {pipeline_mode = #tpu.pipeline_mode<synchronous>, transform_indices = @transform_4, window_bounds = array<i64: 32, 128>}, {pipeline_mode = #tpu.pipeline_mode<synchronous>, transform_indices = @transform_5, window_bounds = array<i64: 32, 256>}, {pipeline_mode = #tpu.pipeline_mode<synchronous>, transform_indices = @transform_6, window_bounds = array<i64: 32, 256>}, {pipeline_mode = #tpu.pipeline_mode<synchronous>, transform_indices = @transform_7, window_bounds = array<i64: 1, 256>}, {pipeline_mode = #tpu.pipeline_mode<synchronous>, transform_indices = @transform_8, window_bounds = array<i64: 32, 128>}, {pipeline_mode = #tpu.pipeline_mode<synchronous>, transform_indices = @transform_9, window_bounds = array<i64: 32, 128>}, {pipeline_mode = #tpu.pipeline_mode<synchronous>, transform_indices = @transform_10, window_bounds = array<i64: 16, 64>}]} {
    %c0 = arith.constant 0 : index
    %c0_0 = arith.constant 0 : index
    %0 = vector.load %arg1[%c0, %c0_0] : memref<16x1xi32, #tpu.memory_space<vmem>>, vector<16x1xi32>
    %1 = tpu.iota {dimensions = array<i32: 1>} : vector<16x40xi32>
    %2 = vector.broadcast %0 : vector<16x1xi32> to vector<16x40xi32>
    %3 = arith.cmpi eq, %1, %2 : vector<16x40xi32>
    %4 = arith.extui %3 : vector<16x40xi1> to vector<16x40xi32>
    %5 = arith.sitofp %4 : vector<16x40xi32> to vector<16x40xf32>
    %c0_1 = arith.constant 0 : index
    %c0_2 = arith.constant 0 : index
    %6 = vector.load %arg2[%c0_1, %c0_2] : memref<40x256xf32, #tpu.memory_space<vmem>>, vector<40x256xf32>
    %cst = arith.constant dense<0.000000e+00> : vector<16x256xf32>
    %7 = tpu.matmul %5, %6, %cst {dimension_numbers = #tpu.dot_dimension_numbers<[1], [0], [0], [1], [0, 0, 1, 1], [], []>} : vector<16x40xf32>, vector<40x256xf32>, vector<16x256xf32> -> vector<16x256xf32>
    %c0_3 = arith.constant 0 : index
    %c0_4 = arith.constant 0 : index
    %8 = vector.load %arg3[%c0_3, %c0_4] : memref<1x256xf32, #tpu.memory_space<vmem>>, vector<1x256xf32>
    %9 = vector.broadcast %8 : vector<1x256xf32> to vector<16x256xf32>
    %10 = arith.addf %7, %9 : vector<16x256xf32>
    %c0_5 = arith.constant 0 : index
    %c0_6 = arith.constant 0 : index
    %11 = vector.load %arg4[%c0_5, %c0_6] : memref<32x128xf32, #tpu.memory_space<vmem>>, vector<32x128xf32>
    %c0_7 = arith.constant 0 : index
    %c0_8 = arith.constant 0 : index
    %12 = vector.load %arg5[%c0_7, %c0_8] : memref<32x128xf32, #tpu.memory_space<vmem>>, vector<32x128xf32>
    %cst_9 = arith.constant 0.000000e+00 : f32
    %13 = vector.broadcast %cst_9 : f32 to vector<2x32xf32>
    %14 = vector.extract_strided_slice %10 {offsets = [0, 0], sizes = [2, 128], strides = [1, 1]} : vector<16x256xf32> to vector<2x128xf32>
    %15 = vector.extract_strided_slice %10 {offsets = [14, 128], sizes = [2, 128], strides = [1, 1]} : vector<16x256xf32> to vector<2x128xf32>
    %cst_10 = arith.constant dense<0.000000e+00> : vector<2x128xf32>
    %16 = tpu.matmul %13, %11, %cst_10 {dimension_numbers = #tpu.dot_dimension_numbers<[1], [0], [0], [1], [0, 0, 1, 1], [], []>} : vector<2x32xf32>, vector<32x128xf32>, vector<2x128xf32> -> vector<2x128xf32>
    %17 = arith.addf %14, %16 : vector<2x128xf32>
    %cst_11 = arith.constant dense<0.000000e+00> : vector<2x128xf32>
    %18 = tpu.matmul %13, %12, %cst_11 {dimension_numbers = #tpu.dot_dimension_numbers<[1], [0], [0], [1], [0, 0, 1, 1], [], []>} : vector<2x32xf32>, vector<32x128xf32>, vector<2x128xf32> -> vector<2x128xf32>
    %19 = arith.addf %15, %18 : vector<2x128xf32>
    %20 = vector.extract_strided_slice %17 {offsets = [0, 0], sizes = [2, 32], strides = [1, 1]} : vector<2x128xf32> to vector<2x32xf32>
    %21 = arith.negf %20 : vector<2x32xf32>
    %22 = math.exp %21 : vector<2x32xf32>
    %cst_12 = arith.constant 1.000000e+00 : f32
    %23 = vector.broadcast %cst_12 : f32 to vector<2x32xf32>
    %24 = arith.addf %23, %22 : vector<2x32xf32>
    %25 = arith.divf %23, %24 : vector<2x32xf32>
    %26 = vector.extract_strided_slice %17 {offsets = [0, 32], sizes = [2, 32], strides = [1, 1]} : vector<2x128xf32> to vector<2x32xf32>
    %27 = arith.negf %26 : vector<2x32xf32>
    %28 = math.exp %27 : vector<2x32xf32>
    %cst_13 = arith.constant 1.000000e+00 : f32
    %29 = vector.broadcast %cst_13 : f32 to vector<2x32xf32>
    %30 = arith.addf %29, %28 : vector<2x32xf32>
    %31 = arith.divf %29, %30 : vector<2x32xf32>
    %32 = vector.extract_strided_slice %17 {offsets = [0, 64], sizes = [2, 32], strides = [1, 1]} : vector<2x128xf32> to vector<2x32xf32>
    %33 = math.tanh %32 : vector<2x32xf32>
    %34 = vector.extract_strided_slice %17 {offsets = [0, 96], sizes = [2, 32], strides = [1, 1]} : vector<2x128xf32> to vector<2x32xf32>
    %35 = arith.negf %34 : vector<2x32xf32>
    %36 = math.exp %35 : vector<2x32xf32>
    %cst_14 = arith.constant 1.000000e+00 : f32
    %37 = vector.broadcast %cst_14 : f32 to vector<2x32xf32>
    %38 = arith.addf %37, %36 : vector<2x32xf32>
    %39 = arith.divf %37, %38 : vector<2x32xf32>
    %40 = arith.mulf %31, %13 : vector<2x32xf32>
    %41 = arith.mulf %25, %33 : vector<2x32xf32>
    %42 = arith.addf %40, %41 : vector<2x32xf32>
    %43 = math.tanh %42 : vector<2x32xf32>
    %44 = arith.mulf %39, %43 : vector<2x32xf32>
    %45 = vector.extract_strided_slice %19 {offsets = [0, 0], sizes = [2, 32], strides = [1, 1]} : vector<2x128xf32> to vector<2x32xf32>
    %46 = arith.negf %45 : vector<2x32xf32>
    %47 = math.exp %46 : vector<2x32xf32>
    %cst_15 = arith.constant 1.000000e+00 : f32
    %48 = vector.broadcast %cst_15 : f32 to vector<2x32xf32>
    %49 = arith.addf %48, %47 : vector<2x32xf32>
    %50 = arith.divf %48, %49 : vector<2x32xf32>
    %51 = vector.extract_strided_slice %19 {offsets = [0, 32], sizes = [2, 32], strides = [1, 1]} : vector<2x128xf32> to vector<2x32xf32>
    %52 = arith.negf %51 : vector<2x32xf32>
    %53 = math.exp %52 : vector<2x32xf32>
    %cst_16 = arith.constant 1.000000e+00 : f32
    %54 = vector.broadcast %cst_16 : f32 to vector<2x32xf32>
    %55 = arith.addf %54, %53 : vector<2x32xf32>
    %56 = arith.divf %54, %55 : vector<2x32xf32>
    %57 = vector.extract_strided_slice %19 {offsets = [0, 64], sizes = [2, 32], strides = [1, 1]} : vector<2x128xf32> to vector<2x32xf32>
    %58 = math.tanh %57 : vector<2x32xf32>
    %59 = vector.extract_strided_slice %19 {offsets = [0, 96], sizes = [2, 32], strides = [1, 1]} : vector<2x128xf32> to vector<2x32xf32>
    %60 = arith.negf %59 : vector<2x32xf32>
    %61 = math.exp %60 : vector<2x32xf32>
    %cst_17 = arith.constant 1.000000e+00 : f32
    %62 = vector.broadcast %cst_17 : f32 to vector<2x32xf32>
    %63 = arith.addf %62, %61 : vector<2x32xf32>
    %64 = arith.divf %62, %63 : vector<2x32xf32>
    %65 = arith.mulf %56, %13 : vector<2x32xf32>
    %66 = arith.mulf %50, %58 : vector<2x32xf32>
    %67 = arith.addf %65, %66 : vector<2x32xf32>
    %68 = math.tanh %67 : vector<2x32xf32>
    %69 = arith.mulf %64, %68 : vector<2x32xf32>
    %70 = vector.extract_strided_slice %10 {offsets = [2, 0], sizes = [2, 128], strides = [1, 1]} : vector<16x256xf32> to vector<2x128xf32>
    %71 = vector.extract_strided_slice %10 {offsets = [12, 128], sizes = [2, 128], strides = [1, 1]} : vector<16x256xf32> to vector<2x128xf32>
    %cst_18 = arith.constant dense<0.000000e+00> : vector<2x128xf32>
    %72 = tpu.matmul %44, %11, %cst_18 {dimension_numbers = #tpu.dot_dimension_numbers<[1], [0], [0], [1], [0, 0, 1, 1], [], []>} : vector<2x32xf32>, vector<32x128xf32>, vector<2x128xf32> -> vector<2x128xf32>
    %73 = arith.addf %70, %72 : vector<2x128xf32>
    %cst_19 = arith.constant dense<0.000000e+00> : vector<2x128xf32>
    %74 = tpu.matmul %69, %12, %cst_19 {dimension_numbers = #tpu.dot_dimension_numbers<[1], [0], [0], [1], [0, 0, 1, 1], [], []>} : vector<2x32xf32>, vector<32x128xf32>, vector<2x128xf32> -> vector<2x128xf32>
    %75 = arith.addf %71, %74 : vector<2x128xf32>
    %76 = vector.extract_strided_slice %73 {offsets = [0, 0], sizes = [2, 32], strides = [1, 1]} : vector<2x128xf32> to vector<2x32xf32>
    %77 = arith.negf %76 : vector<2x32xf32>
    %78 = math.exp %77 : vector<2x32xf32>
    %cst_20 = arith.constant 1.000000e+00 : f32
    %79 = vector.broadcast %cst_20 : f32 to vector<2x32xf32>
    %80 = arith.addf %79, %78 : vector<2x32xf32>
    %81 = arith.divf %79, %80 : vector<2x32xf32>
    %82 = vector.extract_strided_slice %73 {offsets = [0, 32], sizes = [2, 32], strides = [1, 1]} : vector<2x128xf32> to vector<2x32xf32>
    %83 = arith.negf %82 : vector<2x32xf32>
    %84 = math.exp %83 : vector<2x32xf32>
    %cst_21 = arith.constant 1.000000e+00 : f32
    %85 = vector.broadcast %cst_21 : f32 to vector<2x32xf32>
    %86 = arith.addf %85, %84 : vector<2x32xf32>
    %87 = arith.divf %85, %86 : vector<2x32xf32>
    %88 = vector.extract_strided_slice %73 {offsets = [0, 64], sizes = [2, 32], strides = [1, 1]} : vector<2x128xf32> to vector<2x32xf32>
    %89 = math.tanh %88 : vector<2x32xf32>
    %90 = vector.extract_strided_slice %73 {offsets = [0, 96], sizes = [2, 32], strides = [1, 1]} : vector<2x128xf32> to vector<2x32xf32>
    %91 = arith.negf %90 : vector<2x32xf32>
    %92 = math.exp %91 : vector<2x32xf32>
    %cst_22 = arith.constant 1.000000e+00 : f32
    %93 = vector.broadcast %cst_22 : f32 to vector<2x32xf32>
    %94 = arith.addf %93, %92 : vector<2x32xf32>
    %95 = arith.divf %93, %94 : vector<2x32xf32>
    %96 = arith.mulf %87, %42 : vector<2x32xf32>
    %97 = arith.mulf %81, %89 : vector<2x32xf32>
    %98 = arith.addf %96, %97 : vector<2x32xf32>
    %99 = math.tanh %98 : vector<2x32xf32>
    %100 = arith.mulf %95, %99 : vector<2x32xf32>
    %101 = vector.extract_strided_slice %75 {offsets = [0, 0], sizes = [2, 32], strides = [1, 1]} : vector<2x128xf32> to vector<2x32xf32>
    %102 = arith.negf %101 : vector<2x32xf32>
    %103 = math.exp %102 : vector<2x32xf32>
    %cst_23 = arith.constant 1.000000e+00 : f32
    %104 = vector.broadcast %cst_23 : f32 to vector<2x32xf32>
    %105 = arith.addf %104, %103 : vector<2x32xf32>
    %106 = arith.divf %104, %105 : vector<2x32xf32>
    %107 = vector.extract_strided_slice %75 {offsets = [0, 32], sizes = [2, 32], strides = [1, 1]} : vector<2x128xf32> to vector<2x32xf32>
    %108 = arith.negf %107 : vector<2x32xf32>
    %109 = math.exp %108 : vector<2x32xf32>
    %cst_24 = arith.constant 1.000000e+00 : f32
    %110 = vector.broadcast %cst_24 : f32 to vector<2x32xf32>
    %111 = arith.addf %110, %109 : vector<2x32xf32>
    %112 = arith.divf %110, %111 : vector<2x32xf32>
    %113 = vector.extract_strided_slice %75 {offsets = [0, 64], sizes = [2, 32], strides = [1, 1]} : vector<2x128xf32> to vector<2x32xf32>
    %114 = math.tanh %113 : vector<2x32xf32>
    %115 = vector.extract_strided_slice %75 {offsets = [0, 96], sizes = [2, 32], strides = [1, 1]} : vector<2x128xf32> to vector<2x32xf32>
    %116 = arith.negf %115 : vector<2x32xf32>
    %117 = math.exp %116 : vector<2x32xf32>
    %cst_25 = arith.constant 1.000000e+00 : f32
    %118 = vector.broadcast %cst_25 : f32 to vector<2x32xf32>
    %119 = arith.addf %118, %117 : vector<2x32xf32>
    %120 = arith.divf %118, %119 : vector<2x32xf32>
    %121 = arith.mulf %112, %67 : vector<2x32xf32>
    %122 = arith.mulf %106, %114 : vector<2x32xf32>
    %123 = arith.addf %121, %122 : vector<2x32xf32>
    %124 = math.tanh %123 : vector<2x32xf32>
    %125 = arith.mulf %120, %124 : vector<2x32xf32>
    %126 = vector.extract_strided_slice %10 {offsets = [4, 0], sizes = [2, 128], strides = [1, 1]} : vector<16x256xf32> to vector<2x128xf32>
    %127 = vector.extract_strided_slice %10 {offsets = [10, 128], sizes = [2, 128], strides = [1, 1]} : vector<16x256xf32> to vector<2x128xf32>
    %cst_26 = arith.constant dense<0.000000e+00> : vector<2x128xf32>
    %128 = tpu.matmul %100, %11, %cst_26 {dimension_numbers = #tpu.dot_dimension_numbers<[1], [0], [0], [1], [0, 0, 1, 1], [], []>} : vector<2x32xf32>, vector<32x128xf32>, vector<2x128xf32> -> vector<2x128xf32>
    %129 = arith.addf %126, %128 : vector<2x128xf32>
    %cst_27 = arith.constant dense<0.000000e+00> : vector<2x128xf32>
    %130 = tpu.matmul %125, %12, %cst_27 {dimension_numbers = #tpu.dot_dimension_numbers<[1], [0], [0], [1], [0, 0, 1, 1], [], []>} : vector<2x32xf32>, vector<32x128xf32>, vector<2x128xf32> -> vector<2x128xf32>
    %131 = arith.addf %127, %130 : vector<2x128xf32>
    %132 = vector.extract_strided_slice %129 {offsets = [0, 0], sizes = [2, 32], strides = [1, 1]} : vector<2x128xf32> to vector<2x32xf32>
    %133 = arith.negf %132 : vector<2x32xf32>
    %134 = math.exp %133 : vector<2x32xf32>
    %cst_28 = arith.constant 1.000000e+00 : f32
    %135 = vector.broadcast %cst_28 : f32 to vector<2x32xf32>
    %136 = arith.addf %135, %134 : vector<2x32xf32>
    %137 = arith.divf %135, %136 : vector<2x32xf32>
    %138 = vector.extract_strided_slice %129 {offsets = [0, 32], sizes = [2, 32], strides = [1, 1]} : vector<2x128xf32> to vector<2x32xf32>
    %139 = arith.negf %138 : vector<2x32xf32>
    %140 = math.exp %139 : vector<2x32xf32>
    %cst_29 = arith.constant 1.000000e+00 : f32
    %141 = vector.broadcast %cst_29 : f32 to vector<2x32xf32>
    %142 = arith.addf %141, %140 : vector<2x32xf32>
    %143 = arith.divf %141, %142 : vector<2x32xf32>
    %144 = vector.extract_strided_slice %129 {offsets = [0, 64], sizes = [2, 32], strides = [1, 1]} : vector<2x128xf32> to vector<2x32xf32>
    %145 = math.tanh %144 : vector<2x32xf32>
    %146 = vector.extract_strided_slice %129 {offsets = [0, 96], sizes = [2, 32], strides = [1, 1]} : vector<2x128xf32> to vector<2x32xf32>
    %147 = arith.negf %146 : vector<2x32xf32>
    %148 = math.exp %147 : vector<2x32xf32>
    %cst_30 = arith.constant 1.000000e+00 : f32
    %149 = vector.broadcast %cst_30 : f32 to vector<2x32xf32>
    %150 = arith.addf %149, %148 : vector<2x32xf32>
    %151 = arith.divf %149, %150 : vector<2x32xf32>
    %152 = arith.mulf %143, %98 : vector<2x32xf32>
    %153 = arith.mulf %137, %145 : vector<2x32xf32>
    %154 = arith.addf %152, %153 : vector<2x32xf32>
    %155 = math.tanh %154 : vector<2x32xf32>
    %156 = arith.mulf %151, %155 : vector<2x32xf32>
    %157 = vector.extract_strided_slice %131 {offsets = [0, 0], sizes = [2, 32], strides = [1, 1]} : vector<2x128xf32> to vector<2x32xf32>
    %158 = arith.negf %157 : vector<2x32xf32>
    %159 = math.exp %158 : vector<2x32xf32>
    %cst_31 = arith.constant 1.000000e+00 : f32
    %160 = vector.broadcast %cst_31 : f32 to vector<2x32xf32>
    %161 = arith.addf %160, %159 : vector<2x32xf32>
    %162 = arith.divf %160, %161 : vector<2x32xf32>
    %163 = vector.extract_strided_slice %131 {offsets = [0, 32], sizes = [2, 32], strides = [1, 1]} : vector<2x128xf32> to vector<2x32xf32>
    %164 = arith.negf %163 : vector<2x32xf32>
    %165 = math.exp %164 : vector<2x32xf32>
    %cst_32 = arith.constant 1.000000e+00 : f32
    %166 = vector.broadcast %cst_32 : f32 to vector<2x32xf32>
    %167 = arith.addf %166, %165 : vector<2x32xf32>
    %168 = arith.divf %166, %167 : vector<2x32xf32>
    %169 = vector.extract_strided_slice %131 {offsets = [0, 64], sizes = [2, 32], strides = [1, 1]} : vector<2x128xf32> to vector<2x32xf32>
    %170 = math.tanh %169 : vector<2x32xf32>
    %171 = vector.extract_strided_slice %131 {offsets = [0, 96], sizes = [2, 32], strides = [1, 1]} : vector<2x128xf32> to vector<2x32xf32>
    %172 = arith.negf %171 : vector<2x32xf32>
    %173 = math.exp %172 : vector<2x32xf32>
    %cst_33 = arith.constant 1.000000e+00 : f32
    %174 = vector.broadcast %cst_33 : f32 to vector<2x32xf32>
    %175 = arith.addf %174, %173 : vector<2x32xf32>
    %176 = arith.divf %174, %175 : vector<2x32xf32>
    %177 = arith.mulf %168, %123 : vector<2x32xf32>
    %178 = arith.mulf %162, %170 : vector<2x32xf32>
    %179 = arith.addf %177, %178 : vector<2x32xf32>
    %180 = math.tanh %179 : vector<2x32xf32>
    %181 = arith.mulf %176, %180 : vector<2x32xf32>
    %182 = vector.extract_strided_slice %10 {offsets = [6, 0], sizes = [2, 128], strides = [1, 1]} : vector<16x256xf32> to vector<2x128xf32>
    %183 = vector.extract_strided_slice %10 {offsets = [8, 128], sizes = [2, 128], strides = [1, 1]} : vector<16x256xf32> to vector<2x128xf32>
    %cst_34 = arith.constant dense<0.000000e+00> : vector<2x128xf32>
    %184 = tpu.matmul %156, %11, %cst_34 {dimension_numbers = #tpu.dot_dimension_numbers<[1], [0], [0], [1], [0, 0, 1, 1], [], []>} : vector<2x32xf32>, vector<32x128xf32>, vector<2x128xf32> -> vector<2x128xf32>
    %185 = arith.addf %182, %184 : vector<2x128xf32>
    %cst_35 = arith.constant dense<0.000000e+00> : vector<2x128xf32>
    %186 = tpu.matmul %181, %12, %cst_35 {dimension_numbers = #tpu.dot_dimension_numbers<[1], [0], [0], [1], [0, 0, 1, 1], [], []>} : vector<2x32xf32>, vector<32x128xf32>, vector<2x128xf32> -> vector<2x128xf32>
    %187 = arith.addf %183, %186 : vector<2x128xf32>
    %188 = vector.extract_strided_slice %185 {offsets = [0, 0], sizes = [2, 32], strides = [1, 1]} : vector<2x128xf32> to vector<2x32xf32>
    %189 = arith.negf %188 : vector<2x32xf32>
    %190 = math.exp %189 : vector<2x32xf32>
    %cst_36 = arith.constant 1.000000e+00 : f32
    %191 = vector.broadcast %cst_36 : f32 to vector<2x32xf32>
    %192 = arith.addf %191, %190 : vector<2x32xf32>
    %193 = arith.divf %191, %192 : vector<2x32xf32>
    %194 = vector.extract_strided_slice %185 {offsets = [0, 32], sizes = [2, 32], strides = [1, 1]} : vector<2x128xf32> to vector<2x32xf32>
    %195 = arith.negf %194 : vector<2x32xf32>
    %196 = math.exp %195 : vector<2x32xf32>
    %cst_37 = arith.constant 1.000000e+00 : f32
    %197 = vector.broadcast %cst_37 : f32 to vector<2x32xf32>
    %198 = arith.addf %197, %196 : vector<2x32xf32>
    %199 = arith.divf %197, %198 : vector<2x32xf32>
    %200 = vector.extract_strided_slice %185 {offsets = [0, 64], sizes = [2, 32], strides = [1, 1]} : vector<2x128xf32> to vector<2x32xf32>
    %201 = math.tanh %200 : vector<2x32xf32>
    %202 = vector.extract_strided_slice %185 {offsets = [0, 96], sizes = [2, 32], strides = [1, 1]} : vector<2x128xf32> to vector<2x32xf32>
    %203 = arith.negf %202 : vector<2x32xf32>
    %204 = math.exp %203 : vector<2x32xf32>
    %cst_38 = arith.constant 1.000000e+00 : f32
    %205 = vector.broadcast %cst_38 : f32 to vector<2x32xf32>
    %206 = arith.addf %205, %204 : vector<2x32xf32>
    %207 = arith.divf %205, %206 : vector<2x32xf32>
    %208 = arith.mulf %199, %154 : vector<2x32xf32>
    %209 = arith.mulf %193, %201 : vector<2x32xf32>
    %210 = arith.addf %208, %209 : vector<2x32xf32>
    %211 = math.tanh %210 : vector<2x32xf32>
    %212 = arith.mulf %207, %211 : vector<2x32xf32>
    %213 = vector.extract_strided_slice %187 {offsets = [0, 0], sizes = [2, 32], strides = [1, 1]} : vector<2x128xf32> to vector<2x32xf32>
    %214 = arith.negf %213 : vector<2x32xf32>
    %215 = math.exp %214 : vector<2x32xf32>
    %cst_39 = arith.constant 1.000000e+00 : f32
    %216 = vector.broadcast %cst_39 : f32 to vector<2x32xf32>
    %217 = arith.addf %216, %215 : vector<2x32xf32>
    %218 = arith.divf %216, %217 : vector<2x32xf32>
    %219 = vector.extract_strided_slice %187 {offsets = [0, 32], sizes = [2, 32], strides = [1, 1]} : vector<2x128xf32> to vector<2x32xf32>
    %220 = arith.negf %219 : vector<2x32xf32>
    %221 = math.exp %220 : vector<2x32xf32>
    %cst_40 = arith.constant 1.000000e+00 : f32
    %222 = vector.broadcast %cst_40 : f32 to vector<2x32xf32>
    %223 = arith.addf %222, %221 : vector<2x32xf32>
    %224 = arith.divf %222, %223 : vector<2x32xf32>
    %225 = vector.extract_strided_slice %187 {offsets = [0, 64], sizes = [2, 32], strides = [1, 1]} : vector<2x128xf32> to vector<2x32xf32>
    %226 = math.tanh %225 : vector<2x32xf32>
    %227 = vector.extract_strided_slice %187 {offsets = [0, 96], sizes = [2, 32], strides = [1, 1]} : vector<2x128xf32> to vector<2x32xf32>
    %228 = arith.negf %227 : vector<2x32xf32>
    %229 = math.exp %228 : vector<2x32xf32>
    %cst_41 = arith.constant 1.000000e+00 : f32
    %230 = vector.broadcast %cst_41 : f32 to vector<2x32xf32>
    %231 = arith.addf %230, %229 : vector<2x32xf32>
    %232 = arith.divf %230, %231 : vector<2x32xf32>
    %233 = arith.mulf %224, %179 : vector<2x32xf32>
    %234 = arith.mulf %218, %226 : vector<2x32xf32>
    %235 = arith.addf %233, %234 : vector<2x32xf32>
    %236 = math.tanh %235 : vector<2x32xf32>
    %237 = arith.mulf %232, %236 : vector<2x32xf32>
    %238 = vector.extract_strided_slice %10 {offsets = [8, 0], sizes = [2, 128], strides = [1, 1]} : vector<16x256xf32> to vector<2x128xf32>
    %239 = vector.extract_strided_slice %10 {offsets = [6, 128], sizes = [2, 128], strides = [1, 1]} : vector<16x256xf32> to vector<2x128xf32>
    %cst_42 = arith.constant dense<0.000000e+00> : vector<2x128xf32>
    %240 = tpu.matmul %212, %11, %cst_42 {dimension_numbers = #tpu.dot_dimension_numbers<[1], [0], [0], [1], [0, 0, 1, 1], [], []>} : vector<2x32xf32>, vector<32x128xf32>, vector<2x128xf32> -> vector<2x128xf32>
    %241 = arith.addf %238, %240 : vector<2x128xf32>
    %cst_43 = arith.constant dense<0.000000e+00> : vector<2x128xf32>
    %242 = tpu.matmul %237, %12, %cst_43 {dimension_numbers = #tpu.dot_dimension_numbers<[1], [0], [0], [1], [0, 0, 1, 1], [], []>} : vector<2x32xf32>, vector<32x128xf32>, vector<2x128xf32> -> vector<2x128xf32>
    %243 = arith.addf %239, %242 : vector<2x128xf32>
    %244 = vector.extract_strided_slice %241 {offsets = [0, 0], sizes = [2, 32], strides = [1, 1]} : vector<2x128xf32> to vector<2x32xf32>
    %245 = arith.negf %244 : vector<2x32xf32>
    %246 = math.exp %245 : vector<2x32xf32>
    %cst_44 = arith.constant 1.000000e+00 : f32
    %247 = vector.broadcast %cst_44 : f32 to vector<2x32xf32>
    %248 = arith.addf %247, %246 : vector<2x32xf32>
    %249 = arith.divf %247, %248 : vector<2x32xf32>
    %250 = vector.extract_strided_slice %241 {offsets = [0, 32], sizes = [2, 32], strides = [1, 1]} : vector<2x128xf32> to vector<2x32xf32>
    %251 = arith.negf %250 : vector<2x32xf32>
    %252 = math.exp %251 : vector<2x32xf32>
    %cst_45 = arith.constant 1.000000e+00 : f32
    %253 = vector.broadcast %cst_45 : f32 to vector<2x32xf32>
    %254 = arith.addf %253, %252 : vector<2x32xf32>
    %255 = arith.divf %253, %254 : vector<2x32xf32>
    %256 = vector.extract_strided_slice %241 {offsets = [0, 64], sizes = [2, 32], strides = [1, 1]} : vector<2x128xf32> to vector<2x32xf32>
    %257 = math.tanh %256 : vector<2x32xf32>
    %258 = vector.extract_strided_slice %241 {offsets = [0, 96], sizes = [2, 32], strides = [1, 1]} : vector<2x128xf32> to vector<2x32xf32>
    %259 = arith.negf %258 : vector<2x32xf32>
    %260 = math.exp %259 : vector<2x32xf32>
    %cst_46 = arith.constant 1.000000e+00 : f32
    %261 = vector.broadcast %cst_46 : f32 to vector<2x32xf32>
    %262 = arith.addf %261, %260 : vector<2x32xf32>
    %263 = arith.divf %261, %262 : vector<2x32xf32>
    %264 = arith.mulf %255, %210 : vector<2x32xf32>
    %265 = arith.mulf %249, %257 : vector<2x32xf32>
    %266 = arith.addf %264, %265 : vector<2x32xf32>
    %267 = math.tanh %266 : vector<2x32xf32>
    %268 = arith.mulf %263, %267 : vector<2x32xf32>
    %269 = vector.extract_strided_slice %243 {offsets = [0, 0], sizes = [2, 32], strides = [1, 1]} : vector<2x128xf32> to vector<2x32xf32>
    %270 = arith.negf %269 : vector<2x32xf32>
    %271 = math.exp %270 : vector<2x32xf32>
    %cst_47 = arith.constant 1.000000e+00 : f32
    %272 = vector.broadcast %cst_47 : f32 to vector<2x32xf32>
    %273 = arith.addf %272, %271 : vector<2x32xf32>
    %274 = arith.divf %272, %273 : vector<2x32xf32>
    %275 = vector.extract_strided_slice %243 {offsets = [0, 32], sizes = [2, 32], strides = [1, 1]} : vector<2x128xf32> to vector<2x32xf32>
    %276 = arith.negf %275 : vector<2x32xf32>
    %277 = math.exp %276 : vector<2x32xf32>
    %cst_48 = arith.constant 1.000000e+00 : f32
    %278 = vector.broadcast %cst_48 : f32 to vector<2x32xf32>
    %279 = arith.addf %278, %277 : vector<2x32xf32>
    %280 = arith.divf %278, %279 : vector<2x32xf32>
    %281 = vector.extract_strided_slice %243 {offsets = [0, 64], sizes = [2, 32], strides = [1, 1]} : vector<2x128xf32> to vector<2x32xf32>
    %282 = math.tanh %281 : vector<2x32xf32>
    %283 = vector.extract_strided_slice %243 {offsets = [0, 96], sizes = [2, 32], strides = [1, 1]} : vector<2x128xf32> to vector<2x32xf32>
    %284 = arith.negf %283 : vector<2x32xf32>
    %285 = math.exp %284 : vector<2x32xf32>
    %cst_49 = arith.constant 1.000000e+00 : f32
    %286 = vector.broadcast %cst_49 : f32 to vector<2x32xf32>
    %287 = arith.addf %286, %285 : vector<2x32xf32>
    %288 = arith.divf %286, %287 : vector<2x32xf32>
    %289 = arith.mulf %280, %235 : vector<2x32xf32>
    %290 = arith.mulf %274, %282 : vector<2x32xf32>
    %291 = arith.addf %289, %290 : vector<2x32xf32>
    %292 = math.tanh %291 : vector<2x32xf32>
    %293 = arith.mulf %288, %292 : vector<2x32xf32>
    %294 = vector.extract_strided_slice %10 {offsets = [10, 0], sizes = [2, 128], strides = [1, 1]} : vector<16x256xf32> to vector<2x128xf32>
    %295 = vector.extract_strided_slice %10 {offsets = [4, 128], sizes = [2, 128], strides = [1, 1]} : vector<16x256xf32> to vector<2x128xf32>
    %cst_50 = arith.constant dense<0.000000e+00> : vector<2x128xf32>
    %296 = tpu.matmul %268, %11, %cst_50 {dimension_numbers = #tpu.dot_dimension_numbers<[1], [0], [0], [1], [0, 0, 1, 1], [], []>} : vector<2x32xf32>, vector<32x128xf32>, vector<2x128xf32> -> vector<2x128xf32>
    %297 = arith.addf %294, %296 : vector<2x128xf32>
    %cst_51 = arith.constant dense<0.000000e+00> : vector<2x128xf32>
    %298 = tpu.matmul %293, %12, %cst_51 {dimension_numbers = #tpu.dot_dimension_numbers<[1], [0], [0], [1], [0, 0, 1, 1], [], []>} : vector<2x32xf32>, vector<32x128xf32>, vector<2x128xf32> -> vector<2x128xf32>
    %299 = arith.addf %295, %298 : vector<2x128xf32>
    %300 = vector.extract_strided_slice %297 {offsets = [0, 0], sizes = [2, 32], strides = [1, 1]} : vector<2x128xf32> to vector<2x32xf32>
    %301 = arith.negf %300 : vector<2x32xf32>
    %302 = math.exp %301 : vector<2x32xf32>
    %cst_52 = arith.constant 1.000000e+00 : f32
    %303 = vector.broadcast %cst_52 : f32 to vector<2x32xf32>
    %304 = arith.addf %303, %302 : vector<2x32xf32>
    %305 = arith.divf %303, %304 : vector<2x32xf32>
    %306 = vector.extract_strided_slice %297 {offsets = [0, 32], sizes = [2, 32], strides = [1, 1]} : vector<2x128xf32> to vector<2x32xf32>
    %307 = arith.negf %306 : vector<2x32xf32>
    %308 = math.exp %307 : vector<2x32xf32>
    %cst_53 = arith.constant 1.000000e+00 : f32
    %309 = vector.broadcast %cst_53 : f32 to vector<2x32xf32>
    %310 = arith.addf %309, %308 : vector<2x32xf32>
    %311 = arith.divf %309, %310 : vector<2x32xf32>
    %312 = vector.extract_strided_slice %297 {offsets = [0, 64], sizes = [2, 32], strides = [1, 1]} : vector<2x128xf32> to vector<2x32xf32>
    %313 = math.tanh %312 : vector<2x32xf32>
    %314 = vector.extract_strided_slice %297 {offsets = [0, 96], sizes = [2, 32], strides = [1, 1]} : vector<2x128xf32> to vector<2x32xf32>
    %315 = arith.negf %314 : vector<2x32xf32>
    %316 = math.exp %315 : vector<2x32xf32>
    %cst_54 = arith.constant 1.000000e+00 : f32
    %317 = vector.broadcast %cst_54 : f32 to vector<2x32xf32>
    %318 = arith.addf %317, %316 : vector<2x32xf32>
    %319 = arith.divf %317, %318 : vector<2x32xf32>
    %320 = arith.mulf %311, %266 : vector<2x32xf32>
    %321 = arith.mulf %305, %313 : vector<2x32xf32>
    %322 = arith.addf %320, %321 : vector<2x32xf32>
    %323 = math.tanh %322 : vector<2x32xf32>
    %324 = arith.mulf %319, %323 : vector<2x32xf32>
    %325 = vector.extract_strided_slice %299 {offsets = [0, 0], sizes = [2, 32], strides = [1, 1]} : vector<2x128xf32> to vector<2x32xf32>
    %326 = arith.negf %325 : vector<2x32xf32>
    %327 = math.exp %326 : vector<2x32xf32>
    %cst_55 = arith.constant 1.000000e+00 : f32
    %328 = vector.broadcast %cst_55 : f32 to vector<2x32xf32>
    %329 = arith.addf %328, %327 : vector<2x32xf32>
    %330 = arith.divf %328, %329 : vector<2x32xf32>
    %331 = vector.extract_strided_slice %299 {offsets = [0, 32], sizes = [2, 32], strides = [1, 1]} : vector<2x128xf32> to vector<2x32xf32>
    %332 = arith.negf %331 : vector<2x32xf32>
    %333 = math.exp %332 : vector<2x32xf32>
    %cst_56 = arith.constant 1.000000e+00 : f32
    %334 = vector.broadcast %cst_56 : f32 to vector<2x32xf32>
    %335 = arith.addf %334, %333 : vector<2x32xf32>
    %336 = arith.divf %334, %335 : vector<2x32xf32>
    %337 = vector.extract_strided_slice %299 {offsets = [0, 64], sizes = [2, 32], strides = [1, 1]} : vector<2x128xf32> to vector<2x32xf32>
    %338 = math.tanh %337 : vector<2x32xf32>
    %339 = vector.extract_strided_slice %299 {offsets = [0, 96], sizes = [2, 32], strides = [1, 1]} : vector<2x128xf32> to vector<2x32xf32>
    %340 = arith.negf %339 : vector<2x32xf32>
    %341 = math.exp %340 : vector<2x32xf32>
    %cst_57 = arith.constant 1.000000e+00 : f32
    %342 = vector.broadcast %cst_57 : f32 to vector<2x32xf32>
    %343 = arith.addf %342, %341 : vector<2x32xf32>
    %344 = arith.divf %342, %343 : vector<2x32xf32>
    %345 = arith.mulf %336, %291 : vector<2x32xf32>
    %346 = arith.mulf %330, %338 : vector<2x32xf32>
    %347 = arith.addf %345, %346 : vector<2x32xf32>
    %348 = math.tanh %347 : vector<2x32xf32>
    %349 = arith.mulf %344, %348 : vector<2x32xf32>
    %350 = vector.extract_strided_slice %10 {offsets = [12, 0], sizes = [2, 128], strides = [1, 1]} : vector<16x256xf32> to vector<2x128xf32>
    %351 = vector.extract_strided_slice %10 {offsets = [2, 128], sizes = [2, 128], strides = [1, 1]} : vector<16x256xf32> to vector<2x128xf32>
    %cst_58 = arith.constant dense<0.000000e+00> : vector<2x128xf32>
    %352 = tpu.matmul %324, %11, %cst_58 {dimension_numbers = #tpu.dot_dimension_numbers<[1], [0], [0], [1], [0, 0, 1, 1], [], []>} : vector<2x32xf32>, vector<32x128xf32>, vector<2x128xf32> -> vector<2x128xf32>
    %353 = arith.addf %350, %352 : vector<2x128xf32>
    %cst_59 = arith.constant dense<0.000000e+00> : vector<2x128xf32>
    %354 = tpu.matmul %349, %12, %cst_59 {dimension_numbers = #tpu.dot_dimension_numbers<[1], [0], [0], [1], [0, 0, 1, 1], [], []>} : vector<2x32xf32>, vector<32x128xf32>, vector<2x128xf32> -> vector<2x128xf32>
    %355 = arith.addf %351, %354 : vector<2x128xf32>
    %356 = vector.extract_strided_slice %353 {offsets = [0, 0], sizes = [2, 32], strides = [1, 1]} : vector<2x128xf32> to vector<2x32xf32>
    %357 = arith.negf %356 : vector<2x32xf32>
    %358 = math.exp %357 : vector<2x32xf32>
    %cst_60 = arith.constant 1.000000e+00 : f32
    %359 = vector.broadcast %cst_60 : f32 to vector<2x32xf32>
    %360 = arith.addf %359, %358 : vector<2x32xf32>
    %361 = arith.divf %359, %360 : vector<2x32xf32>
    %362 = vector.extract_strided_slice %353 {offsets = [0, 32], sizes = [2, 32], strides = [1, 1]} : vector<2x128xf32> to vector<2x32xf32>
    %363 = arith.negf %362 : vector<2x32xf32>
    %364 = math.exp %363 : vector<2x32xf32>
    %cst_61 = arith.constant 1.000000e+00 : f32
    %365 = vector.broadcast %cst_61 : f32 to vector<2x32xf32>
    %366 = arith.addf %365, %364 : vector<2x32xf32>
    %367 = arith.divf %365, %366 : vector<2x32xf32>
    %368 = vector.extract_strided_slice %353 {offsets = [0, 64], sizes = [2, 32], strides = [1, 1]} : vector<2x128xf32> to vector<2x32xf32>
    %369 = math.tanh %368 : vector<2x32xf32>
    %370 = vector.extract_strided_slice %353 {offsets = [0, 96], sizes = [2, 32], strides = [1, 1]} : vector<2x128xf32> to vector<2x32xf32>
    %371 = arith.negf %370 : vector<2x32xf32>
    %372 = math.exp %371 : vector<2x32xf32>
    %cst_62 = arith.constant 1.000000e+00 : f32
    %373 = vector.broadcast %cst_62 : f32 to vector<2x32xf32>
    %374 = arith.addf %373, %372 : vector<2x32xf32>
    %375 = arith.divf %373, %374 : vector<2x32xf32>
    %376 = arith.mulf %367, %322 : vector<2x32xf32>
    %377 = arith.mulf %361, %369 : vector<2x32xf32>
    %378 = arith.addf %376, %377 : vector<2x32xf32>
    %379 = math.tanh %378 : vector<2x32xf32>
    %380 = arith.mulf %375, %379 : vector<2x32xf32>
    %381 = vector.extract_strided_slice %355 {offsets = [0, 0], sizes = [2, 32], strides = [1, 1]} : vector<2x128xf32> to vector<2x32xf32>
    %382 = arith.negf %381 : vector<2x32xf32>
    %383 = math.exp %382 : vector<2x32xf32>
    %cst_63 = arith.constant 1.000000e+00 : f32
    %384 = vector.broadcast %cst_63 : f32 to vector<2x32xf32>
    %385 = arith.addf %384, %383 : vector<2x32xf32>
    %386 = arith.divf %384, %385 : vector<2x32xf32>
    %387 = vector.extract_strided_slice %355 {offsets = [0, 32], sizes = [2, 32], strides = [1, 1]} : vector<2x128xf32> to vector<2x32xf32>
    %388 = arith.negf %387 : vector<2x32xf32>
    %389 = math.exp %388 : vector<2x32xf32>
    %cst_64 = arith.constant 1.000000e+00 : f32
    %390 = vector.broadcast %cst_64 : f32 to vector<2x32xf32>
    %391 = arith.addf %390, %389 : vector<2x32xf32>
    %392 = arith.divf %390, %391 : vector<2x32xf32>
    %393 = vector.extract_strided_slice %355 {offsets = [0, 64], sizes = [2, 32], strides = [1, 1]} : vector<2x128xf32> to vector<2x32xf32>
    %394 = math.tanh %393 : vector<2x32xf32>
    %395 = vector.extract_strided_slice %355 {offsets = [0, 96], sizes = [2, 32], strides = [1, 1]} : vector<2x128xf32> to vector<2x32xf32>
    %396 = arith.negf %395 : vector<2x32xf32>
    %397 = math.exp %396 : vector<2x32xf32>
    %cst_65 = arith.constant 1.000000e+00 : f32
    %398 = vector.broadcast %cst_65 : f32 to vector<2x32xf32>
    %399 = arith.addf %398, %397 : vector<2x32xf32>
    %400 = arith.divf %398, %399 : vector<2x32xf32>
    %401 = arith.mulf %392, %347 : vector<2x32xf32>
    %402 = arith.mulf %386, %394 : vector<2x32xf32>
    %403 = arith.addf %401, %402 : vector<2x32xf32>
    %404 = math.tanh %403 : vector<2x32xf32>
    %405 = arith.mulf %400, %404 : vector<2x32xf32>
    %406 = vector.extract_strided_slice %10 {offsets = [14, 0], sizes = [2, 128], strides = [1, 1]} : vector<16x256xf32> to vector<2x128xf32>
    %407 = vector.extract_strided_slice %10 {offsets = [0, 128], sizes = [2, 128], strides = [1, 1]} : vector<16x256xf32> to vector<2x128xf32>
    %cst_66 = arith.constant dense<0.000000e+00> : vector<2x128xf32>
    %408 = tpu.matmul %380, %11, %cst_66 {dimension_numbers = #tpu.dot_dimension_numbers<[1], [0], [0], [1], [0, 0, 1, 1], [], []>} : vector<2x32xf32>, vector<32x128xf32>, vector<2x128xf32> -> vector<2x128xf32>
    %409 = arith.addf %406, %408 : vector<2x128xf32>
    %cst_67 = arith.constant dense<0.000000e+00> : vector<2x128xf32>
    %410 = tpu.matmul %405, %12, %cst_67 {dimension_numbers = #tpu.dot_dimension_numbers<[1], [0], [0], [1], [0, 0, 1, 1], [], []>} : vector<2x32xf32>, vector<32x128xf32>, vector<2x128xf32> -> vector<2x128xf32>
    %411 = arith.addf %407, %410 : vector<2x128xf32>
    %412 = vector.extract_strided_slice %409 {offsets = [0, 0], sizes = [2, 32], strides = [1, 1]} : vector<2x128xf32> to vector<2x32xf32>
    %413 = arith.negf %412 : vector<2x32xf32>
    %414 = math.exp %413 : vector<2x32xf32>
    %cst_68 = arith.constant 1.000000e+00 : f32
    %415 = vector.broadcast %cst_68 : f32 to vector<2x32xf32>
    %416 = arith.addf %415, %414 : vector<2x32xf32>
    %417 = arith.divf %415, %416 : vector<2x32xf32>
    %418 = vector.extract_strided_slice %409 {offsets = [0, 32], sizes = [2, 32], strides = [1, 1]} : vector<2x128xf32> to vector<2x32xf32>
    %419 = arith.negf %418 : vector<2x32xf32>
    %420 = math.exp %419 : vector<2x32xf32>
    %cst_69 = arith.constant 1.000000e+00 : f32
    %421 = vector.broadcast %cst_69 : f32 to vector<2x32xf32>
    %422 = arith.addf %421, %420 : vector<2x32xf32>
    %423 = arith.divf %421, %422 : vector<2x32xf32>
    %424 = vector.extract_strided_slice %409 {offsets = [0, 64], sizes = [2, 32], strides = [1, 1]} : vector<2x128xf32> to vector<2x32xf32>
    %425 = math.tanh %424 : vector<2x32xf32>
    %426 = vector.extract_strided_slice %409 {offsets = [0, 96], sizes = [2, 32], strides = [1, 1]} : vector<2x128xf32> to vector<2x32xf32>
    %427 = arith.negf %426 : vector<2x32xf32>
    %428 = math.exp %427 : vector<2x32xf32>
    %cst_70 = arith.constant 1.000000e+00 : f32
    %429 = vector.broadcast %cst_70 : f32 to vector<2x32xf32>
    %430 = arith.addf %429, %428 : vector<2x32xf32>
    %431 = arith.divf %429, %430 : vector<2x32xf32>
    %432 = arith.mulf %423, %378 : vector<2x32xf32>
    %433 = arith.mulf %417, %425 : vector<2x32xf32>
    %434 = arith.addf %432, %433 : vector<2x32xf32>
    %435 = math.tanh %434 : vector<2x32xf32>
    %436 = arith.mulf %431, %435 : vector<2x32xf32>
    %437 = vector.extract_strided_slice %411 {offsets = [0, 0], sizes = [2, 32], strides = [1, 1]} : vector<2x128xf32> to vector<2x32xf32>
    %438 = arith.negf %437 : vector<2x32xf32>
    %439 = math.exp %438 : vector<2x32xf32>
    %cst_71 = arith.constant 1.000000e+00 : f32
    %440 = vector.broadcast %cst_71 : f32 to vector<2x32xf32>
    %441 = arith.addf %440, %439 : vector<2x32xf32>
    %442 = arith.divf %440, %441 : vector<2x32xf32>
    %443 = vector.extract_strided_slice %411 {offsets = [0, 32], sizes = [2, 32], strides = [1, 1]} : vector<2x128xf32> to vector<2x32xf32>
    %444 = arith.negf %443 : vector<2x32xf32>
    %445 = math.exp %444 : vector<2x32xf32>
    %cst_72 = arith.constant 1.000000e+00 : f32
    %446 = vector.broadcast %cst_72 : f32 to vector<2x32xf32>
    %447 = arith.addf %446, %445 : vector<2x32xf32>
    %448 = arith.divf %446, %447 : vector<2x32xf32>
    %449 = vector.extract_strided_slice %411 {offsets = [0, 64], sizes = [2, 32], strides = [1, 1]} : vector<2x128xf32> to vector<2x32xf32>
    %450 = math.tanh %449 : vector<2x32xf32>
    %451 = vector.extract_strided_slice %411 {offsets = [0, 96], sizes = [2, 32], strides = [1, 1]} : vector<2x128xf32> to vector<2x32xf32>
    %452 = arith.negf %451 : vector<2x32xf32>
    %453 = math.exp %452 : vector<2x32xf32>
    %cst_73 = arith.constant 1.000000e+00 : f32
    %454 = vector.broadcast %cst_73 : f32 to vector<2x32xf32>
    %455 = arith.addf %454, %453 : vector<2x32xf32>
    %456 = arith.divf %454, %455 : vector<2x32xf32>
    %457 = arith.mulf %448, %403 : vector<2x32xf32>
    %458 = arith.mulf %442, %450 : vector<2x32xf32>
    %459 = arith.addf %457, %458 : vector<2x32xf32>
    %460 = math.tanh %459 : vector<2x32xf32>
    %461 = arith.mulf %456, %460 : vector<2x32xf32>
    %462 = tpu.concatenate %44, %100, %156, %212, %268, %324, %380, %436 in 0 : vector<2x32xf32>, vector<2x32xf32>, vector<2x32xf32>, vector<2x32xf32>, vector<2x32xf32>, vector<2x32xf32>, vector<2x32xf32>, vector<2x32xf32> -> vector<16x32xf32>
    %463 = tpu.concatenate %461, %405, %349, %293, %237, %181, %125, %69 in 0 : vector<2x32xf32>, vector<2x32xf32>, vector<2x32xf32>, vector<2x32xf32>, vector<2x32xf32>, vector<2x32xf32>, vector<2x32xf32>, vector<2x32xf32> -> vector<16x32xf32>
    %c0_74 = arith.constant 0 : index
    %c0_75 = arith.constant 0 : index
    %464 = vector.load %arg6[%c0_74, %c0_75] : memref<32x256xf32, #tpu.memory_space<vmem>>, vector<32x256xf32>
    %cst_76 = arith.constant dense<0.000000e+00> : vector<16x256xf32>
    %465 = tpu.matmul %462, %464, %cst_76 {dimension_numbers = #tpu.dot_dimension_numbers<[1], [0], [0], [1], [0, 0, 1, 1], [], []>} : vector<16x32xf32>, vector<32x256xf32>, vector<16x256xf32> -> vector<16x256xf32>
    %c0_77 = arith.constant 0 : index
    %c0_78 = arith.constant 0 : index
    %466 = vector.load %arg7[%c0_77, %c0_78] : memref<32x256xf32, #tpu.memory_space<vmem>>, vector<32x256xf32>
    %cst_79 = arith.constant dense<0.000000e+00> : vector<16x256xf32>
    %467 = tpu.matmul %463, %466, %cst_79 {dimension_numbers = #tpu.dot_dimension_numbers<[1], [0], [0], [1], [0, 0, 1, 1], [], []>} : vector<16x32xf32>, vector<32x256xf32>, vector<16x256xf32> -> vector<16x256xf32>
    %468 = arith.addf %465, %467 : vector<16x256xf32>
    %c0_80 = arith.constant 0 : index
    %c0_81 = arith.constant 0 : index
    %469 = vector.load %arg8[%c0_80, %c0_81] : memref<1x256xf32, #tpu.memory_space<vmem>>, vector<1x256xf32>
    %470 = vector.broadcast %469 : vector<1x256xf32> to vector<16x256xf32>
    %471 = arith.addf %468, %470 : vector<16x256xf32>
    %c0_82 = arith.constant 0 : index
    %c0_83 = arith.constant 0 : index
    %472 = vector.load %arg9[%c0_82, %c0_83] : memref<32x128xf32, #tpu.memory_space<vmem>>, vector<32x128xf32>
    %c0_84 = arith.constant 0 : index
    %c0_85 = arith.constant 0 : index
    %473 = vector.load %arg10[%c0_84, %c0_85] : memref<32x128xf32, #tpu.memory_space<vmem>>, vector<32x128xf32>
    %cst_86 = arith.constant 0.000000e+00 : f32
    %474 = vector.broadcast %cst_86 : f32 to vector<2x32xf32>
    %475 = vector.extract_strided_slice %471 {offsets = [0, 0], sizes = [2, 128], strides = [1, 1]} : vector<16x256xf32> to vector<2x128xf32>
    %476 = vector.extract_strided_slice %471 {offsets = [14, 128], sizes = [2, 128], strides = [1, 1]} : vector<16x256xf32> to vector<2x128xf32>
    %cst_87 = arith.constant dense<0.000000e+00> : vector<2x128xf32>
    %477 = tpu.matmul %474, %472, %cst_87 {dimension_numbers = #tpu.dot_dimension_numbers<[1], [0], [0], [1], [0, 0, 1, 1], [], []>} : vector<2x32xf32>, vector<32x128xf32>, vector<2x128xf32> -> vector<2x128xf32>
    %478 = arith.addf %475, %477 : vector<2x128xf32>
    %cst_88 = arith.constant dense<0.000000e+00> : vector<2x128xf32>
    %479 = tpu.matmul %474, %473, %cst_88 {dimension_numbers = #tpu.dot_dimension_numbers<[1], [0], [0], [1], [0, 0, 1, 1], [], []>} : vector<2x32xf32>, vector<32x128xf32>, vector<2x128xf32> -> vector<2x128xf32>
    %480 = arith.addf %476, %479 : vector<2x128xf32>
    %481 = vector.extract_strided_slice %478 {offsets = [0, 0], sizes = [2, 32], strides = [1, 1]} : vector<2x128xf32> to vector<2x32xf32>
    %482 = arith.negf %481 : vector<2x32xf32>
    %483 = math.exp %482 : vector<2x32xf32>
    %cst_89 = arith.constant 1.000000e+00 : f32
    %484 = vector.broadcast %cst_89 : f32 to vector<2x32xf32>
    %485 = arith.addf %484, %483 : vector<2x32xf32>
    %486 = arith.divf %484, %485 : vector<2x32xf32>
    %487 = vector.extract_strided_slice %478 {offsets = [0, 32], sizes = [2, 32], strides = [1, 1]} : vector<2x128xf32> to vector<2x32xf32>
    %488 = arith.negf %487 : vector<2x32xf32>
    %489 = math.exp %488 : vector<2x32xf32>
    %cst_90 = arith.constant 1.000000e+00 : f32
    %490 = vector.broadcast %cst_90 : f32 to vector<2x32xf32>
    %491 = arith.addf %490, %489 : vector<2x32xf32>
    %492 = arith.divf %490, %491 : vector<2x32xf32>
    %493 = vector.extract_strided_slice %478 {offsets = [0, 64], sizes = [2, 32], strides = [1, 1]} : vector<2x128xf32> to vector<2x32xf32>
    %494 = math.tanh %493 : vector<2x32xf32>
    %495 = vector.extract_strided_slice %478 {offsets = [0, 96], sizes = [2, 32], strides = [1, 1]} : vector<2x128xf32> to vector<2x32xf32>
    %496 = arith.negf %495 : vector<2x32xf32>
    %497 = math.exp %496 : vector<2x32xf32>
    %cst_91 = arith.constant 1.000000e+00 : f32
    %498 = vector.broadcast %cst_91 : f32 to vector<2x32xf32>
    %499 = arith.addf %498, %497 : vector<2x32xf32>
    %500 = arith.divf %498, %499 : vector<2x32xf32>
    %501 = arith.mulf %492, %474 : vector<2x32xf32>
    %502 = arith.mulf %486, %494 : vector<2x32xf32>
    %503 = arith.addf %501, %502 : vector<2x32xf32>
    %504 = math.tanh %503 : vector<2x32xf32>
    %505 = arith.mulf %500, %504 : vector<2x32xf32>
    %506 = vector.extract_strided_slice %480 {offsets = [0, 0], sizes = [2, 32], strides = [1, 1]} : vector<2x128xf32> to vector<2x32xf32>
    %507 = arith.negf %506 : vector<2x32xf32>
    %508 = math.exp %507 : vector<2x32xf32>
    %cst_92 = arith.constant 1.000000e+00 : f32
    %509 = vector.broadcast %cst_92 : f32 to vector<2x32xf32>
    %510 = arith.addf %509, %508 : vector<2x32xf32>
    %511 = arith.divf %509, %510 : vector<2x32xf32>
    %512 = vector.extract_strided_slice %480 {offsets = [0, 32], sizes = [2, 32], strides = [1, 1]} : vector<2x128xf32> to vector<2x32xf32>
    %513 = arith.negf %512 : vector<2x32xf32>
    %514 = math.exp %513 : vector<2x32xf32>
    %cst_93 = arith.constant 1.000000e+00 : f32
    %515 = vector.broadcast %cst_93 : f32 to vector<2x32xf32>
    %516 = arith.addf %515, %514 : vector<2x32xf32>
    %517 = arith.divf %515, %516 : vector<2x32xf32>
    %518 = vector.extract_strided_slice %480 {offsets = [0, 64], sizes = [2, 32], strides = [1, 1]} : vector<2x128xf32> to vector<2x32xf32>
    %519 = math.tanh %518 : vector<2x32xf32>
    %520 = vector.extract_strided_slice %480 {offsets = [0, 96], sizes = [2, 32], strides = [1, 1]} : vector<2x128xf32> to vector<2x32xf32>
    %521 = arith.negf %520 : vector<2x32xf32>
    %522 = math.exp %521 : vector<2x32xf32>
    %cst_94 = arith.constant 1.000000e+00 : f32
    %523 = vector.broadcast %cst_94 : f32 to vector<2x32xf32>
    %524 = arith.addf %523, %522 : vector<2x32xf32>
    %525 = arith.divf %523, %524 : vector<2x32xf32>
    %526 = arith.mulf %517, %474 : vector<2x32xf32>
    %527 = arith.mulf %511, %519 : vector<2x32xf32>
    %528 = arith.addf %526, %527 : vector<2x32xf32>
    %529 = math.tanh %528 : vector<2x32xf32>
    %530 = arith.mulf %525, %529 : vector<2x32xf32>
    %531 = vector.extract_strided_slice %471 {offsets = [2, 0], sizes = [2, 128], strides = [1, 1]} : vector<16x256xf32> to vector<2x128xf32>
    %532 = vector.extract_strided_slice %471 {offsets = [12, 128], sizes = [2, 128], strides = [1, 1]} : vector<16x256xf32> to vector<2x128xf32>
    %cst_95 = arith.constant dense<0.000000e+00> : vector<2x128xf32>
    %533 = tpu.matmul %505, %472, %cst_95 {dimension_numbers = #tpu.dot_dimension_numbers<[1], [0], [0], [1], [0, 0, 1, 1], [], []>} : vector<2x32xf32>, vector<32x128xf32>, vector<2x128xf32> -> vector<2x128xf32>
    %534 = arith.addf %531, %533 : vector<2x128xf32>
    %cst_96 = arith.constant dense<0.000000e+00> : vector<2x128xf32>
    %535 = tpu.matmul %530, %473, %cst_96 {dimension_numbers = #tpu.dot_dimension_numbers<[1], [0], [0], [1], [0, 0, 1, 1], [], []>} : vector<2x32xf32>, vector<32x128xf32>, vector<2x128xf32> -> vector<2x128xf32>
    %536 = arith.addf %532, %535 : vector<2x128xf32>
    %537 = vector.extract_strided_slice %534 {offsets = [0, 0], sizes = [2, 32], strides = [1, 1]} : vector<2x128xf32> to vector<2x32xf32>
    %538 = arith.negf %537 : vector<2x32xf32>
    %539 = math.exp %538 : vector<2x32xf32>
    %cst_97 = arith.constant 1.000000e+00 : f32
    %540 = vector.broadcast %cst_97 : f32 to vector<2x32xf32>
    %541 = arith.addf %540, %539 : vector<2x32xf32>
    %542 = arith.divf %540, %541 : vector<2x32xf32>
    %543 = vector.extract_strided_slice %534 {offsets = [0, 32], sizes = [2, 32], strides = [1, 1]} : vector<2x128xf32> to vector<2x32xf32>
    %544 = arith.negf %543 : vector<2x32xf32>
    %545 = math.exp %544 : vector<2x32xf32>
    %cst_98 = arith.constant 1.000000e+00 : f32
    %546 = vector.broadcast %cst_98 : f32 to vector<2x32xf32>
    %547 = arith.addf %546, %545 : vector<2x32xf32>
    %548 = arith.divf %546, %547 : vector<2x32xf32>
    %549 = vector.extract_strided_slice %534 {offsets = [0, 64], sizes = [2, 32], strides = [1, 1]} : vector<2x128xf32> to vector<2x32xf32>
    %550 = math.tanh %549 : vector<2x32xf32>
    %551 = vector.extract_strided_slice %534 {offsets = [0, 96], sizes = [2, 32], strides = [1, 1]} : vector<2x128xf32> to vector<2x32xf32>
    %552 = arith.negf %551 : vector<2x32xf32>
    %553 = math.exp %552 : vector<2x32xf32>
    %cst_99 = arith.constant 1.000000e+00 : f32
    %554 = vector.broadcast %cst_99 : f32 to vector<2x32xf32>
    %555 = arith.addf %554, %553 : vector<2x32xf32>
    %556 = arith.divf %554, %555 : vector<2x32xf32>
    %557 = arith.mulf %548, %503 : vector<2x32xf32>
    %558 = arith.mulf %542, %550 : vector<2x32xf32>
    %559 = arith.addf %557, %558 : vector<2x32xf32>
    %560 = math.tanh %559 : vector<2x32xf32>
    %561 = arith.mulf %556, %560 : vector<2x32xf32>
    %562 = vector.extract_strided_slice %536 {offsets = [0, 0], sizes = [2, 32], strides = [1, 1]} : vector<2x128xf32> to vector<2x32xf32>
    %563 = arith.negf %562 : vector<2x32xf32>
    %564 = math.exp %563 : vector<2x32xf32>
    %cst_100 = arith.constant 1.000000e+00 : f32
    %565 = vector.broadcast %cst_100 : f32 to vector<2x32xf32>
    %566 = arith.addf %565, %564 : vector<2x32xf32>
    %567 = arith.divf %565, %566 : vector<2x32xf32>
    %568 = vector.extract_strided_slice %536 {offsets = [0, 32], sizes = [2, 32], strides = [1, 1]} : vector<2x128xf32> to vector<2x32xf32>
    %569 = arith.negf %568 : vector<2x32xf32>
    %570 = math.exp %569 : vector<2x32xf32>
    %cst_101 = arith.constant 1.000000e+00 : f32
    %571 = vector.broadcast %cst_101 : f32 to vector<2x32xf32>
    %572 = arith.addf %571, %570 : vector<2x32xf32>
    %573 = arith.divf %571, %572 : vector<2x32xf32>
    %574 = vector.extract_strided_slice %536 {offsets = [0, 64], sizes = [2, 32], strides = [1, 1]} : vector<2x128xf32> to vector<2x32xf32>
    %575 = math.tanh %574 : vector<2x32xf32>
    %576 = vector.extract_strided_slice %536 {offsets = [0, 96], sizes = [2, 32], strides = [1, 1]} : vector<2x128xf32> to vector<2x32xf32>
    %577 = arith.negf %576 : vector<2x32xf32>
    %578 = math.exp %577 : vector<2x32xf32>
    %cst_102 = arith.constant 1.000000e+00 : f32
    %579 = vector.broadcast %cst_102 : f32 to vector<2x32xf32>
    %580 = arith.addf %579, %578 : vector<2x32xf32>
    %581 = arith.divf %579, %580 : vector<2x32xf32>
    %582 = arith.mulf %573, %528 : vector<2x32xf32>
    %583 = arith.mulf %567, %575 : vector<2x32xf32>
    %584 = arith.addf %582, %583 : vector<2x32xf32>
    %585 = math.tanh %584 : vector<2x32xf32>
    %586 = arith.mulf %581, %585 : vector<2x32xf32>
    %587 = vector.extract_strided_slice %471 {offsets = [4, 0], sizes = [2, 128], strides = [1, 1]} : vector<16x256xf32> to vector<2x128xf32>
    %588 = vector.extract_strided_slice %471 {offsets = [10, 128], sizes = [2, 128], strides = [1, 1]} : vector<16x256xf32> to vector<2x128xf32>
    %cst_103 = arith.constant dense<0.000000e+00> : vector<2x128xf32>
    %589 = tpu.matmul %561, %472, %cst_103 {dimension_numbers = #tpu.dot_dimension_numbers<[1], [0], [0], [1], [0, 0, 1, 1], [], []>} : vector<2x32xf32>, vector<32x128xf32>, vector<2x128xf32> -> vector<2x128xf32>
    %590 = arith.addf %587, %589 : vector<2x128xf32>
    %cst_104 = arith.constant dense<0.000000e+00> : vector<2x128xf32>
    %591 = tpu.matmul %586, %473, %cst_104 {dimension_numbers = #tpu.dot_dimension_numbers<[1], [0], [0], [1], [0, 0, 1, 1], [], []>} : vector<2x32xf32>, vector<32x128xf32>, vector<2x128xf32> -> vector<2x128xf32>
    %592 = arith.addf %588, %591 : vector<2x128xf32>
    %593 = vector.extract_strided_slice %590 {offsets = [0, 0], sizes = [2, 32], strides = [1, 1]} : vector<2x128xf32> to vector<2x32xf32>
    %594 = arith.negf %593 : vector<2x32xf32>
    %595 = math.exp %594 : vector<2x32xf32>
    %cst_105 = arith.constant 1.000000e+00 : f32
    %596 = vector.broadcast %cst_105 : f32 to vector<2x32xf32>
    %597 = arith.addf %596, %595 : vector<2x32xf32>
    %598 = arith.divf %596, %597 : vector<2x32xf32>
    %599 = vector.extract_strided_slice %590 {offsets = [0, 32], sizes = [2, 32], strides = [1, 1]} : vector<2x128xf32> to vector<2x32xf32>
    %600 = arith.negf %599 : vector<2x32xf32>
    %601 = math.exp %600 : vector<2x32xf32>
    %cst_106 = arith.constant 1.000000e+00 : f32
    %602 = vector.broadcast %cst_106 : f32 to vector<2x32xf32>
    %603 = arith.addf %602, %601 : vector<2x32xf32>
    %604 = arith.divf %602, %603 : vector<2x32xf32>
    %605 = vector.extract_strided_slice %590 {offsets = [0, 64], sizes = [2, 32], strides = [1, 1]} : vector<2x128xf32> to vector<2x32xf32>
    %606 = math.tanh %605 : vector<2x32xf32>
    %607 = vector.extract_strided_slice %590 {offsets = [0, 96], sizes = [2, 32], strides = [1, 1]} : vector<2x128xf32> to vector<2x32xf32>
    %608 = arith.negf %607 : vector<2x32xf32>
    %609 = math.exp %608 : vector<2x32xf32>
    %cst_107 = arith.constant 1.000000e+00 : f32
    %610 = vector.broadcast %cst_107 : f32 to vector<2x32xf32>
    %611 = arith.addf %610, %609 : vector<2x32xf32>
    %612 = arith.divf %610, %611 : vector<2x32xf32>
    %613 = arith.mulf %604, %559 : vector<2x32xf32>
    %614 = arith.mulf %598, %606 : vector<2x32xf32>
    %615 = arith.addf %613, %614 : vector<2x32xf32>
    %616 = math.tanh %615 : vector<2x32xf32>
    %617 = arith.mulf %612, %616 : vector<2x32xf32>
    %618 = vector.extract_strided_slice %592 {offsets = [0, 0], sizes = [2, 32], strides = [1, 1]} : vector<2x128xf32> to vector<2x32xf32>
    %619 = arith.negf %618 : vector<2x32xf32>
    %620 = math.exp %619 : vector<2x32xf32>
    %cst_108 = arith.constant 1.000000e+00 : f32
    %621 = vector.broadcast %cst_108 : f32 to vector<2x32xf32>
    %622 = arith.addf %621, %620 : vector<2x32xf32>
    %623 = arith.divf %621, %622 : vector<2x32xf32>
    %624 = vector.extract_strided_slice %592 {offsets = [0, 32], sizes = [2, 32], strides = [1, 1]} : vector<2x128xf32> to vector<2x32xf32>
    %625 = arith.negf %624 : vector<2x32xf32>
    %626 = math.exp %625 : vector<2x32xf32>
    %cst_109 = arith.constant 1.000000e+00 : f32
    %627 = vector.broadcast %cst_109 : f32 to vector<2x32xf32>
    %628 = arith.addf %627, %626 : vector<2x32xf32>
    %629 = arith.divf %627, %628 : vector<2x32xf32>
    %630 = vector.extract_strided_slice %592 {offsets = [0, 64], sizes = [2, 32], strides = [1, 1]} : vector<2x128xf32> to vector<2x32xf32>
    %631 = math.tanh %630 : vector<2x32xf32>
    %632 = vector.extract_strided_slice %592 {offsets = [0, 96], sizes = [2, 32], strides = [1, 1]} : vector<2x128xf32> to vector<2x32xf32>
    %633 = arith.negf %632 : vector<2x32xf32>
    %634 = math.exp %633 : vector<2x32xf32>
    %cst_110 = arith.constant 1.000000e+00 : f32
    %635 = vector.broadcast %cst_110 : f32 to vector<2x32xf32>
    %636 = arith.addf %635, %634 : vector<2x32xf32>
    %637 = arith.divf %635, %636 : vector<2x32xf32>
    %638 = arith.mulf %629, %584 : vector<2x32xf32>
    %639 = arith.mulf %623, %631 : vector<2x32xf32>
    %640 = arith.addf %638, %639 : vector<2x32xf32>
    %641 = math.tanh %640 : vector<2x32xf32>
    %642 = arith.mulf %637, %641 : vector<2x32xf32>
    %643 = vector.extract_strided_slice %471 {offsets = [6, 0], sizes = [2, 128], strides = [1, 1]} : vector<16x256xf32> to vector<2x128xf32>
    %644 = vector.extract_strided_slice %471 {offsets = [8, 128], sizes = [2, 128], strides = [1, 1]} : vector<16x256xf32> to vector<2x128xf32>
    %cst_111 = arith.constant dense<0.000000e+00> : vector<2x128xf32>
    %645 = tpu.matmul %617, %472, %cst_111 {dimension_numbers = #tpu.dot_dimension_numbers<[1], [0], [0], [1], [0, 0, 1, 1], [], []>} : vector<2x32xf32>, vector<32x128xf32>, vector<2x128xf32> -> vector<2x128xf32>
    %646 = arith.addf %643, %645 : vector<2x128xf32>
    %cst_112 = arith.constant dense<0.000000e+00> : vector<2x128xf32>
    %647 = tpu.matmul %642, %473, %cst_112 {dimension_numbers = #tpu.dot_dimension_numbers<[1], [0], [0], [1], [0, 0, 1, 1], [], []>} : vector<2x32xf32>, vector<32x128xf32>, vector<2x128xf32> -> vector<2x128xf32>
    %648 = arith.addf %644, %647 : vector<2x128xf32>
    %649 = vector.extract_strided_slice %646 {offsets = [0, 0], sizes = [2, 32], strides = [1, 1]} : vector<2x128xf32> to vector<2x32xf32>
    %650 = arith.negf %649 : vector<2x32xf32>
    %651 = math.exp %650 : vector<2x32xf32>
    %cst_113 = arith.constant 1.000000e+00 : f32
    %652 = vector.broadcast %cst_113 : f32 to vector<2x32xf32>
    %653 = arith.addf %652, %651 : vector<2x32xf32>
    %654 = arith.divf %652, %653 : vector<2x32xf32>
    %655 = vector.extract_strided_slice %646 {offsets = [0, 32], sizes = [2, 32], strides = [1, 1]} : vector<2x128xf32> to vector<2x32xf32>
    %656 = arith.negf %655 : vector<2x32xf32>
    %657 = math.exp %656 : vector<2x32xf32>
    %cst_114 = arith.constant 1.000000e+00 : f32
    %658 = vector.broadcast %cst_114 : f32 to vector<2x32xf32>
    %659 = arith.addf %658, %657 : vector<2x32xf32>
    %660 = arith.divf %658, %659 : vector<2x32xf32>
    %661 = vector.extract_strided_slice %646 {offsets = [0, 64], sizes = [2, 32], strides = [1, 1]} : vector<2x128xf32> to vector<2x32xf32>
    %662 = math.tanh %661 : vector<2x32xf32>
    %663 = vector.extract_strided_slice %646 {offsets = [0, 96], sizes = [2, 32], strides = [1, 1]} : vector<2x128xf32> to vector<2x32xf32>
    %664 = arith.negf %663 : vector<2x32xf32>
    %665 = math.exp %664 : vector<2x32xf32>
    %cst_115 = arith.constant 1.000000e+00 : f32
    %666 = vector.broadcast %cst_115 : f32 to vector<2x32xf32>
    %667 = arith.addf %666, %665 : vector<2x32xf32>
    %668 = arith.divf %666, %667 : vector<2x32xf32>
    %669 = arith.mulf %660, %615 : vector<2x32xf32>
    %670 = arith.mulf %654, %662 : vector<2x32xf32>
    %671 = arith.addf %669, %670 : vector<2x32xf32>
    %672 = math.tanh %671 : vector<2x32xf32>
    %673 = arith.mulf %668, %672 : vector<2x32xf32>
    %674 = vector.extract_strided_slice %648 {offsets = [0, 0], sizes = [2, 32], strides = [1, 1]} : vector<2x128xf32> to vector<2x32xf32>
    %675 = arith.negf %674 : vector<2x32xf32>
    %676 = math.exp %675 : vector<2x32xf32>
    %cst_116 = arith.constant 1.000000e+00 : f32
    %677 = vector.broadcast %cst_116 : f32 to vector<2x32xf32>
    %678 = arith.addf %677, %676 : vector<2x32xf32>
    %679 = arith.divf %677, %678 : vector<2x32xf32>
    %680 = vector.extract_strided_slice %648 {offsets = [0, 32], sizes = [2, 32], strides = [1, 1]} : vector<2x128xf32> to vector<2x32xf32>
    %681 = arith.negf %680 : vector<2x32xf32>
    %682 = math.exp %681 : vector<2x32xf32>
    %cst_117 = arith.constant 1.000000e+00 : f32
    %683 = vector.broadcast %cst_117 : f32 to vector<2x32xf32>
    %684 = arith.addf %683, %682 : vector<2x32xf32>
    %685 = arith.divf %683, %684 : vector<2x32xf32>
    %686 = vector.extract_strided_slice %648 {offsets = [0, 64], sizes = [2, 32], strides = [1, 1]} : vector<2x128xf32> to vector<2x32xf32>
    %687 = math.tanh %686 : vector<2x32xf32>
    %688 = vector.extract_strided_slice %648 {offsets = [0, 96], sizes = [2, 32], strides = [1, 1]} : vector<2x128xf32> to vector<2x32xf32>
    %689 = arith.negf %688 : vector<2x32xf32>
    %690 = math.exp %689 : vector<2x32xf32>
    %cst_118 = arith.constant 1.000000e+00 : f32
    %691 = vector.broadcast %cst_118 : f32 to vector<2x32xf32>
    %692 = arith.addf %691, %690 : vector<2x32xf32>
    %693 = arith.divf %691, %692 : vector<2x32xf32>
    %694 = arith.mulf %685, %640 : vector<2x32xf32>
    %695 = arith.mulf %679, %687 : vector<2x32xf32>
    %696 = arith.addf %694, %695 : vector<2x32xf32>
    %697 = math.tanh %696 : vector<2x32xf32>
    %698 = arith.mulf %693, %697 : vector<2x32xf32>
    %699 = vector.extract_strided_slice %471 {offsets = [8, 0], sizes = [2, 128], strides = [1, 1]} : vector<16x256xf32> to vector<2x128xf32>
    %700 = vector.extract_strided_slice %471 {offsets = [6, 128], sizes = [2, 128], strides = [1, 1]} : vector<16x256xf32> to vector<2x128xf32>
    %cst_119 = arith.constant dense<0.000000e+00> : vector<2x128xf32>
    %701 = tpu.matmul %673, %472, %cst_119 {dimension_numbers = #tpu.dot_dimension_numbers<[1], [0], [0], [1], [0, 0, 1, 1], [], []>} : vector<2x32xf32>, vector<32x128xf32>, vector<2x128xf32> -> vector<2x128xf32>
    %702 = arith.addf %699, %701 : vector<2x128xf32>
    %cst_120 = arith.constant dense<0.000000e+00> : vector<2x128xf32>
    %703 = tpu.matmul %698, %473, %cst_120 {dimension_numbers = #tpu.dot_dimension_numbers<[1], [0], [0], [1], [0, 0, 1, 1], [], []>} : vector<2x32xf32>, vector<32x128xf32>, vector<2x128xf32> -> vector<2x128xf32>
    %704 = arith.addf %700, %703 : vector<2x128xf32>
    %705 = vector.extract_strided_slice %702 {offsets = [0, 0], sizes = [2, 32], strides = [1, 1]} : vector<2x128xf32> to vector<2x32xf32>
    %706 = arith.negf %705 : vector<2x32xf32>
    %707 = math.exp %706 : vector<2x32xf32>
    %cst_121 = arith.constant 1.000000e+00 : f32
    %708 = vector.broadcast %cst_121 : f32 to vector<2x32xf32>
    %709 = arith.addf %708, %707 : vector<2x32xf32>
    %710 = arith.divf %708, %709 : vector<2x32xf32>
    %711 = vector.extract_strided_slice %702 {offsets = [0, 32], sizes = [2, 32], strides = [1, 1]} : vector<2x128xf32> to vector<2x32xf32>
    %712 = arith.negf %711 : vector<2x32xf32>
    %713 = math.exp %712 : vector<2x32xf32>
    %cst_122 = arith.constant 1.000000e+00 : f32
    %714 = vector.broadcast %cst_122 : f32 to vector<2x32xf32>
    %715 = arith.addf %714, %713 : vector<2x32xf32>
    %716 = arith.divf %714, %715 : vector<2x32xf32>
    %717 = vector.extract_strided_slice %702 {offsets = [0, 64], sizes = [2, 32], strides = [1, 1]} : vector<2x128xf32> to vector<2x32xf32>
    %718 = math.tanh %717 : vector<2x32xf32>
    %719 = vector.extract_strided_slice %702 {offsets = [0, 96], sizes = [2, 32], strides = [1, 1]} : vector<2x128xf32> to vector<2x32xf32>
    %720 = arith.negf %719 : vector<2x32xf32>
    %721 = math.exp %720 : vector<2x32xf32>
    %cst_123 = arith.constant 1.000000e+00 : f32
    %722 = vector.broadcast %cst_123 : f32 to vector<2x32xf32>
    %723 = arith.addf %722, %721 : vector<2x32xf32>
    %724 = arith.divf %722, %723 : vector<2x32xf32>
    %725 = arith.mulf %716, %671 : vector<2x32xf32>
    %726 = arith.mulf %710, %718 : vector<2x32xf32>
    %727 = arith.addf %725, %726 : vector<2x32xf32>
    %728 = math.tanh %727 : vector<2x32xf32>
    %729 = arith.mulf %724, %728 : vector<2x32xf32>
    %730 = vector.extract_strided_slice %704 {offsets = [0, 0], sizes = [2, 32], strides = [1, 1]} : vector<2x128xf32> to vector<2x32xf32>
    %731 = arith.negf %730 : vector<2x32xf32>
    %732 = math.exp %731 : vector<2x32xf32>
    %cst_124 = arith.constant 1.000000e+00 : f32
    %733 = vector.broadcast %cst_124 : f32 to vector<2x32xf32>
    %734 = arith.addf %733, %732 : vector<2x32xf32>
    %735 = arith.divf %733, %734 : vector<2x32xf32>
    %736 = vector.extract_strided_slice %704 {offsets = [0, 32], sizes = [2, 32], strides = [1, 1]} : vector<2x128xf32> to vector<2x32xf32>
    %737 = arith.negf %736 : vector<2x32xf32>
    %738 = math.exp %737 : vector<2x32xf32>
    %cst_125 = arith.constant 1.000000e+00 : f32
    %739 = vector.broadcast %cst_125 : f32 to vector<2x32xf32>
    %740 = arith.addf %739, %738 : vector<2x32xf32>
    %741 = arith.divf %739, %740 : vector<2x32xf32>
    %742 = vector.extract_strided_slice %704 {offsets = [0, 64], sizes = [2, 32], strides = [1, 1]} : vector<2x128xf32> to vector<2x32xf32>
    %743 = math.tanh %742 : vector<2x32xf32>
    %744 = vector.extract_strided_slice %704 {offsets = [0, 96], sizes = [2, 32], strides = [1, 1]} : vector<2x128xf32> to vector<2x32xf32>
    %745 = arith.negf %744 : vector<2x32xf32>
    %746 = math.exp %745 : vector<2x32xf32>
    %cst_126 = arith.constant 1.000000e+00 : f32
    %747 = vector.broadcast %cst_126 : f32 to vector<2x32xf32>
    %748 = arith.addf %747, %746 : vector<2x32xf32>
    %749 = arith.divf %747, %748 : vector<2x32xf32>
    %750 = arith.mulf %741, %696 : vector<2x32xf32>
    %751 = arith.mulf %735, %743 : vector<2x32xf32>
    %752 = arith.addf %750, %751 : vector<2x32xf32>
    %753 = math.tanh %752 : vector<2x32xf32>
    %754 = arith.mulf %749, %753 : vector<2x32xf32>
    %755 = vector.extract_strided_slice %471 {offsets = [10, 0], sizes = [2, 128], strides = [1, 1]} : vector<16x256xf32> to vector<2x128xf32>
    %756 = vector.extract_strided_slice %471 {offsets = [4, 128], sizes = [2, 128], strides = [1, 1]} : vector<16x256xf32> to vector<2x128xf32>
    %cst_127 = arith.constant dense<0.000000e+00> : vector<2x128xf32>
    %757 = tpu.matmul %729, %472, %cst_127 {dimension_numbers = #tpu.dot_dimension_numbers<[1], [0], [0], [1], [0, 0, 1, 1], [], []>} : vector<2x32xf32>, vector<32x128xf32>, vector<2x128xf32> -> vector<2x128xf32>
    %758 = arith.addf %755, %757 : vector<2x128xf32>
    %cst_128 = arith.constant dense<0.000000e+00> : vector<2x128xf32>
    %759 = tpu.matmul %754, %473, %cst_128 {dimension_numbers = #tpu.dot_dimension_numbers<[1], [0], [0], [1], [0, 0, 1, 1], [], []>} : vector<2x32xf32>, vector<32x128xf32>, vector<2x128xf32> -> vector<2x128xf32>
    %760 = arith.addf %756, %759 : vector<2x128xf32>
    %761 = vector.extract_strided_slice %758 {offsets = [0, 0], sizes = [2, 32], strides = [1, 1]} : vector<2x128xf32> to vector<2x32xf32>
    %762 = arith.negf %761 : vector<2x32xf32>
    %763 = math.exp %762 : vector<2x32xf32>
    %cst_129 = arith.constant 1.000000e+00 : f32
    %764 = vector.broadcast %cst_129 : f32 to vector<2x32xf32>
    %765 = arith.addf %764, %763 : vector<2x32xf32>
    %766 = arith.divf %764, %765 : vector<2x32xf32>
    %767 = vector.extract_strided_slice %758 {offsets = [0, 32], sizes = [2, 32], strides = [1, 1]} : vector<2x128xf32> to vector<2x32xf32>
    %768 = arith.negf %767 : vector<2x32xf32>
    %769 = math.exp %768 : vector<2x32xf32>
    %cst_130 = arith.constant 1.000000e+00 : f32
    %770 = vector.broadcast %cst_130 : f32 to vector<2x32xf32>
    %771 = arith.addf %770, %769 : vector<2x32xf32>
    %772 = arith.divf %770, %771 : vector<2x32xf32>
    %773 = vector.extract_strided_slice %758 {offsets = [0, 64], sizes = [2, 32], strides = [1, 1]} : vector<2x128xf32> to vector<2x32xf32>
    %774 = math.tanh %773 : vector<2x32xf32>
    %775 = vector.extract_strided_slice %758 {offsets = [0, 96], sizes = [2, 32], strides = [1, 1]} : vector<2x128xf32> to vector<2x32xf32>
    %776 = arith.negf %775 : vector<2x32xf32>
    %777 = math.exp %776 : vector<2x32xf32>
    %cst_131 = arith.constant 1.000000e+00 : f32
    %778 = vector.broadcast %cst_131 : f32 to vector<2x32xf32>
    %779 = arith.addf %778, %777 : vector<2x32xf32>
    %780 = arith.divf %778, %779 : vector<2x32xf32>
    %781 = arith.mulf %772, %727 : vector<2x32xf32>
    %782 = arith.mulf %766, %774 : vector<2x32xf32>
    %783 = arith.addf %781, %782 : vector<2x32xf32>
    %784 = math.tanh %783 : vector<2x32xf32>
    %785 = arith.mulf %780, %784 : vector<2x32xf32>
    %786 = vector.extract_strided_slice %760 {offsets = [0, 0], sizes = [2, 32], strides = [1, 1]} : vector<2x128xf32> to vector<2x32xf32>
    %787 = arith.negf %786 : vector<2x32xf32>
    %788 = math.exp %787 : vector<2x32xf32>
    %cst_132 = arith.constant 1.000000e+00 : f32
    %789 = vector.broadcast %cst_132 : f32 to vector<2x32xf32>
    %790 = arith.addf %789, %788 : vector<2x32xf32>
    %791 = arith.divf %789, %790 : vector<2x32xf32>
    %792 = vector.extract_strided_slice %760 {offsets = [0, 32], sizes = [2, 32], strides = [1, 1]} : vector<2x128xf32> to vector<2x32xf32>
    %793 = arith.negf %792 : vector<2x32xf32>
    %794 = math.exp %793 : vector<2x32xf32>
    %cst_133 = arith.constant 1.000000e+00 : f32
    %795 = vector.broadcast %cst_133 : f32 to vector<2x32xf32>
    %796 = arith.addf %795, %794 : vector<2x32xf32>
    %797 = arith.divf %795, %796 : vector<2x32xf32>
    %798 = vector.extract_strided_slice %760 {offsets = [0, 64], sizes = [2, 32], strides = [1, 1]} : vector<2x128xf32> to vector<2x32xf32>
    %799 = math.tanh %798 : vector<2x32xf32>
    %800 = vector.extract_strided_slice %760 {offsets = [0, 96], sizes = [2, 32], strides = [1, 1]} : vector<2x128xf32> to vector<2x32xf32>
    %801 = arith.negf %800 : vector<2x32xf32>
    %802 = math.exp %801 : vector<2x32xf32>
    %cst_134 = arith.constant 1.000000e+00 : f32
    %803 = vector.broadcast %cst_134 : f32 to vector<2x32xf32>
    %804 = arith.addf %803, %802 : vector<2x32xf32>
    %805 = arith.divf %803, %804 : vector<2x32xf32>
    %806 = arith.mulf %797, %752 : vector<2x32xf32>
    %807 = arith.mulf %791, %799 : vector<2x32xf32>
    %808 = arith.addf %806, %807 : vector<2x32xf32>
    %809 = math.tanh %808 : vector<2x32xf32>
    %810 = arith.mulf %805, %809 : vector<2x32xf32>
    %811 = vector.extract_strided_slice %471 {offsets = [12, 0], sizes = [2, 128], strides = [1, 1]} : vector<16x256xf32> to vector<2x128xf32>
    %812 = vector.extract_strided_slice %471 {offsets = [2, 128], sizes = [2, 128], strides = [1, 1]} : vector<16x256xf32> to vector<2x128xf32>
    %cst_135 = arith.constant dense<0.000000e+00> : vector<2x128xf32>
    %813 = tpu.matmul %785, %472, %cst_135 {dimension_numbers = #tpu.dot_dimension_numbers<[1], [0], [0], [1], [0, 0, 1, 1], [], []>} : vector<2x32xf32>, vector<32x128xf32>, vector<2x128xf32> -> vector<2x128xf32>
    %814 = arith.addf %811, %813 : vector<2x128xf32>
    %cst_136 = arith.constant dense<0.000000e+00> : vector<2x128xf32>
    %815 = tpu.matmul %810, %473, %cst_136 {dimension_numbers = #tpu.dot_dimension_numbers<[1], [0], [0], [1], [0, 0, 1, 1], [], []>} : vector<2x32xf32>, vector<32x128xf32>, vector<2x128xf32> -> vector<2x128xf32>
    %816 = arith.addf %812, %815 : vector<2x128xf32>
    %817 = vector.extract_strided_slice %814 {offsets = [0, 0], sizes = [2, 32], strides = [1, 1]} : vector<2x128xf32> to vector<2x32xf32>
    %818 = arith.negf %817 : vector<2x32xf32>
    %819 = math.exp %818 : vector<2x32xf32>
    %cst_137 = arith.constant 1.000000e+00 : f32
    %820 = vector.broadcast %cst_137 : f32 to vector<2x32xf32>
    %821 = arith.addf %820, %819 : vector<2x32xf32>
    %822 = arith.divf %820, %821 : vector<2x32xf32>
    %823 = vector.extract_strided_slice %814 {offsets = [0, 32], sizes = [2, 32], strides = [1, 1]} : vector<2x128xf32> to vector<2x32xf32>
    %824 = arith.negf %823 : vector<2x32xf32>
    %825 = math.exp %824 : vector<2x32xf32>
    %cst_138 = arith.constant 1.000000e+00 : f32
    %826 = vector.broadcast %cst_138 : f32 to vector<2x32xf32>
    %827 = arith.addf %826, %825 : vector<2x32xf32>
    %828 = arith.divf %826, %827 : vector<2x32xf32>
    %829 = vector.extract_strided_slice %814 {offsets = [0, 64], sizes = [2, 32], strides = [1, 1]} : vector<2x128xf32> to vector<2x32xf32>
    %830 = math.tanh %829 : vector<2x32xf32>
    %831 = vector.extract_strided_slice %814 {offsets = [0, 96], sizes = [2, 32], strides = [1, 1]} : vector<2x128xf32> to vector<2x32xf32>
    %832 = arith.negf %831 : vector<2x32xf32>
    %833 = math.exp %832 : vector<2x32xf32>
    %cst_139 = arith.constant 1.000000e+00 : f32
    %834 = vector.broadcast %cst_139 : f32 to vector<2x32xf32>
    %835 = arith.addf %834, %833 : vector<2x32xf32>
    %836 = arith.divf %834, %835 : vector<2x32xf32>
    %837 = arith.mulf %828, %783 : vector<2x32xf32>
    %838 = arith.mulf %822, %830 : vector<2x32xf32>
    %839 = arith.addf %837, %838 : vector<2x32xf32>
    %840 = math.tanh %839 : vector<2x32xf32>
    %841 = arith.mulf %836, %840 : vector<2x32xf32>
    %842 = vector.extract_strided_slice %816 {offsets = [0, 0], sizes = [2, 32], strides = [1, 1]} : vector<2x128xf32> to vector<2x32xf32>
    %843 = arith.negf %842 : vector<2x32xf32>
    %844 = math.exp %843 : vector<2x32xf32>
    %cst_140 = arith.constant 1.000000e+00 : f32
    %845 = vector.broadcast %cst_140 : f32 to vector<2x32xf32>
    %846 = arith.addf %845, %844 : vector<2x32xf32>
    %847 = arith.divf %845, %846 : vector<2x32xf32>
    %848 = vector.extract_strided_slice %816 {offsets = [0, 32], sizes = [2, 32], strides = [1, 1]} : vector<2x128xf32> to vector<2x32xf32>
    %849 = arith.negf %848 : vector<2x32xf32>
    %850 = math.exp %849 : vector<2x32xf32>
    %cst_141 = arith.constant 1.000000e+00 : f32
    %851 = vector.broadcast %cst_141 : f32 to vector<2x32xf32>
    %852 = arith.addf %851, %850 : vector<2x32xf32>
    %853 = arith.divf %851, %852 : vector<2x32xf32>
    %854 = vector.extract_strided_slice %816 {offsets = [0, 64], sizes = [2, 32], strides = [1, 1]} : vector<2x128xf32> to vector<2x32xf32>
    %855 = math.tanh %854 : vector<2x32xf32>
    %856 = vector.extract_strided_slice %816 {offsets = [0, 96], sizes = [2, 32], strides = [1, 1]} : vector<2x128xf32> to vector<2x32xf32>
    %857 = arith.negf %856 : vector<2x32xf32>
    %858 = math.exp %857 : vector<2x32xf32>
    %cst_142 = arith.constant 1.000000e+00 : f32
    %859 = vector.broadcast %cst_142 : f32 to vector<2x32xf32>
    %860 = arith.addf %859, %858 : vector<2x32xf32>
    %861 = arith.divf %859, %860 : vector<2x32xf32>
    %862 = arith.mulf %853, %808 : vector<2x32xf32>
    %863 = arith.mulf %847, %855 : vector<2x32xf32>
    %864 = arith.addf %862, %863 : vector<2x32xf32>
    %865 = math.tanh %864 : vector<2x32xf32>
    %866 = arith.mulf %861, %865 : vector<2x32xf32>
    %867 = vector.extract_strided_slice %471 {offsets = [14, 0], sizes = [2, 128], strides = [1, 1]} : vector<16x256xf32> to vector<2x128xf32>
    %868 = vector.extract_strided_slice %471 {offsets = [0, 128], sizes = [2, 128], strides = [1, 1]} : vector<16x256xf32> to vector<2x128xf32>
    %cst_143 = arith.constant dense<0.000000e+00> : vector<2x128xf32>
    %869 = tpu.matmul %841, %472, %cst_143 {dimension_numbers = #tpu.dot_dimension_numbers<[1], [0], [0], [1], [0, 0, 1, 1], [], []>} : vector<2x32xf32>, vector<32x128xf32>, vector<2x128xf32> -> vector<2x128xf32>
    %870 = arith.addf %867, %869 : vector<2x128xf32>
    %cst_144 = arith.constant dense<0.000000e+00> : vector<2x128xf32>
    %871 = tpu.matmul %866, %473, %cst_144 {dimension_numbers = #tpu.dot_dimension_numbers<[1], [0], [0], [1], [0, 0, 1, 1], [], []>} : vector<2x32xf32>, vector<32x128xf32>, vector<2x128xf32> -> vector<2x128xf32>
    %872 = arith.addf %868, %871 : vector<2x128xf32>
    %873 = vector.extract_strided_slice %870 {offsets = [0, 0], sizes = [2, 32], strides = [1, 1]} : vector<2x128xf32> to vector<2x32xf32>
    %874 = arith.negf %873 : vector<2x32xf32>
    %875 = math.exp %874 : vector<2x32xf32>
    %cst_145 = arith.constant 1.000000e+00 : f32
    %876 = vector.broadcast %cst_145 : f32 to vector<2x32xf32>
    %877 = arith.addf %876, %875 : vector<2x32xf32>
    %878 = arith.divf %876, %877 : vector<2x32xf32>
    %879 = vector.extract_strided_slice %870 {offsets = [0, 32], sizes = [2, 32], strides = [1, 1]} : vector<2x128xf32> to vector<2x32xf32>
    %880 = arith.negf %879 : vector<2x32xf32>
    %881 = math.exp %880 : vector<2x32xf32>
    %cst_146 = arith.constant 1.000000e+00 : f32
    %882 = vector.broadcast %cst_146 : f32 to vector<2x32xf32>
    %883 = arith.addf %882, %881 : vector<2x32xf32>
    %884 = arith.divf %882, %883 : vector<2x32xf32>
    %885 = vector.extract_strided_slice %870 {offsets = [0, 64], sizes = [2, 32], strides = [1, 1]} : vector<2x128xf32> to vector<2x32xf32>
    %886 = math.tanh %885 : vector<2x32xf32>
    %887 = vector.extract_strided_slice %870 {offsets = [0, 96], sizes = [2, 32], strides = [1, 1]} : vector<2x128xf32> to vector<2x32xf32>
    %888 = arith.negf %887 : vector<2x32xf32>
    %889 = math.exp %888 : vector<2x32xf32>
    %cst_147 = arith.constant 1.000000e+00 : f32
    %890 = vector.broadcast %cst_147 : f32 to vector<2x32xf32>
    %891 = arith.addf %890, %889 : vector<2x32xf32>
    %892 = arith.divf %890, %891 : vector<2x32xf32>
    %893 = arith.mulf %884, %839 : vector<2x32xf32>
    %894 = arith.mulf %878, %886 : vector<2x32xf32>
    %895 = arith.addf %893, %894 : vector<2x32xf32>
    %896 = math.tanh %895 : vector<2x32xf32>
    %897 = arith.mulf %892, %896 : vector<2x32xf32>
    %898 = vector.extract_strided_slice %872 {offsets = [0, 0], sizes = [2, 32], strides = [1, 1]} : vector<2x128xf32> to vector<2x32xf32>
    %899 = arith.negf %898 : vector<2x32xf32>
    %900 = math.exp %899 : vector<2x32xf32>
    %cst_148 = arith.constant 1.000000e+00 : f32
    %901 = vector.broadcast %cst_148 : f32 to vector<2x32xf32>
    %902 = arith.addf %901, %900 : vector<2x32xf32>
    %903 = arith.divf %901, %902 : vector<2x32xf32>
    %904 = vector.extract_strided_slice %872 {offsets = [0, 32], sizes = [2, 32], strides = [1, 1]} : vector<2x128xf32> to vector<2x32xf32>
    %905 = arith.negf %904 : vector<2x32xf32>
    %906 = math.exp %905 : vector<2x32xf32>
    %cst_149 = arith.constant 1.000000e+00 : f32
    %907 = vector.broadcast %cst_149 : f32 to vector<2x32xf32>
    %908 = arith.addf %907, %906 : vector<2x32xf32>
    %909 = arith.divf %907, %908 : vector<2x32xf32>
    %910 = vector.extract_strided_slice %872 {offsets = [0, 64], sizes = [2, 32], strides = [1, 1]} : vector<2x128xf32> to vector<2x32xf32>
    %911 = math.tanh %910 : vector<2x32xf32>
    %912 = vector.extract_strided_slice %872 {offsets = [0, 96], sizes = [2, 32], strides = [1, 1]} : vector<2x128xf32> to vector<2x32xf32>
    %913 = arith.negf %912 : vector<2x32xf32>
    %914 = math.exp %913 : vector<2x32xf32>
    %cst_150 = arith.constant 1.000000e+00 : f32
    %915 = vector.broadcast %cst_150 : f32 to vector<2x32xf32>
    %916 = arith.addf %915, %914 : vector<2x32xf32>
    %917 = arith.divf %915, %916 : vector<2x32xf32>
    %918 = arith.mulf %909, %864 : vector<2x32xf32>
    %919 = arith.mulf %903, %911 : vector<2x32xf32>
    %920 = arith.addf %918, %919 : vector<2x32xf32>
    %921 = math.tanh %920 : vector<2x32xf32>
    %922 = arith.mulf %917, %921 : vector<2x32xf32>
    %923 = tpu.concatenate %505, %561, %617, %673, %729, %785, %841, %897 in 0 : vector<2x32xf32>, vector<2x32xf32>, vector<2x32xf32>, vector<2x32xf32>, vector<2x32xf32>, vector<2x32xf32>, vector<2x32xf32>, vector<2x32xf32> -> vector<16x32xf32>
    %924 = tpu.concatenate %922, %866, %810, %754, %698, %642, %586, %530 in 0 : vector<2x32xf32>, vector<2x32xf32>, vector<2x32xf32>, vector<2x32xf32>, vector<2x32xf32>, vector<2x32xf32>, vector<2x32xf32>, vector<2x32xf32> -> vector<16x32xf32>
    %925 = tpu.concatenate %923, %924 in 1 : vector<16x32xf32>, vector<16x32xf32> -> vector<16x64xf32>
    %c0_151 = arith.constant 0 : index
    %c0_152 = arith.constant 0 : index
    %926 = vector.load %arg11[%c0_151, %c0_152] : memref<16x64xf32, #tpu.memory_space<vmem>>, vector<16x64xf32>
    tpu.vector_store %arg11[%c0_151, %c0_152], %925 {strides = array<i32>} : memref<16x64xf32, #tpu.memory_space<vmem>>, vector<16x64xf32>,
    return
  }
  func.func @transform_0(%arg0: i32) -> (i32, i32) {
    %c0_i32 = arith.constant 0 : i32
    %c0_i32_0 = arith.constant 0 : i32
    %c0_i32_1 = arith.constant 0 : i32
    return %c0_i32, %c0_i32_0 : i32, i32
  }
  func.func @transform_1(%arg0: i32) -> (i32, i32) {
    %c0_i32 = arith.constant 0 : i32
    %c0_i32_0 = arith.constant 0 : i32
    %c0_i32_1 = arith.constant 0 : i32
    return %c0_i32, %c0_i32_0 : i32, i32
  }
  func.func @transform_2(%arg0: i32) -> (i32, i32) {
    %c0_i32 = arith.constant 0 : i32
    %c0_i32_0 = arith.constant 0 : i32
    %c0_i32_1 = arith.constant 0 : i32
    return %c0_i32, %c0_i32_0 : i32, i32
  }
  func.func @transform_3(%arg0: i32) -> (i32, i32) {
    %c0_i32 = arith.constant 0 : i32
    %c0_i32_0 = arith.constant 0 : i32
    %c0_i32_1 = arith.constant 0 : i32
    return %c0_i32, %c0_i32_0 : i32, i32
  }
  func.func @transform_4(%arg0: i32) -> (i32, i32) {
    %c0_i32 = arith.constant 0 : i32
    %c0_i32_0 = arith.constant 0 : i32
    %c0_i32_1 = arith.constant 0 : i32
    return %c0_i32, %c0_i32_0 : i32, i32
  }
  func.func @transform_5(%arg0: i32) -> (i32, i32) {
    %c0_i32 = arith.constant 0 : i32
    %c0_i32_0 = arith.constant 0 : i32
    %c0_i32_1 = arith.constant 0 : i32
    return %c0_i32, %c0_i32_0 : i32, i32
  }
  func.func @transform_6(%arg0: i32) -> (i32, i32) {
    %c0_i32 = arith.constant 0 : i32
    %c0_i32_0 = arith.constant 0 : i32
    %c0_i32_1 = arith.constant 0 : i32
    return %c0_i32, %c0_i32_0 : i32, i32
  }
  func.func @transform_7(%arg0: i32) -> (i32, i32) {
    %c0_i32 = arith.constant 0 : i32
    %c0_i32_0 = arith.constant 0 : i32
    %c0_i32_1 = arith.constant 0 : i32
    return %c0_i32, %c0_i32_0 : i32, i32
  }
  func.func @transform_8(%arg0: i32) -> (i32, i32) {
    %c0_i32 = arith.constant 0 : i32
    %c0_i32_0 = arith.constant 0 : i32
    %c0_i32_1 = arith.constant 0 : i32
    return %c0_i32, %c0_i32_0 : i32, i32
  }
  func.func @transform_9(%arg0: i32) -> (i32, i32) {
    %c0_i32 = arith.constant 0 : i32
    %c0_i32_0 = arith.constant 0 : i32
    %c0_i32_1 = arith.constant 0 : i32
    return %c0_i32, %c0_i32_0 : i32, i32
  }
  func.func @transform_10(%arg0: i32) -> (i32, i32) {
    %c0_i32 = arith.constant 0 : i32
    %c0_i32_0 = arith.constant 0 : i32
    %c0_i32_1 = arith.constant 0 : i32
    return %c0_i32, %c0_i32_0 : i32, i32
  }
}

</mosaic_0001>

<llo_original>
// kernel: tpu_custom_call.1
$region0: #{tpu_custom_call.1}
  #allocation0 [shape = 'u32[]', space=smem, size = 0x4, offset = 0x4, fixed_abs, tag = 'smem constant byte address 0x4 - core index']
  #allocation1 [shape = 'u32[144,128]{1,0:T(1,128)}', space=vmem, size = 0x12000, scoped, tag = 'internal scratch']
  %s0 = inlined_call_operand.vmem [shape: s32[16,1], index: 0, kind: input, shape index: {}]
  %s1 = inlined_call_operand.hbm [shape: f32[40,256], index: 1, kind: input, shape index: {}]
  %s2 = inlined_call_operand.hbm [shape: f32[1,256], index: 2, kind: input, shape index: {}]
  %s3 = inlined_call_operand.hbm [shape: f32[32,128], index: 3, kind: input, shape index: {}]
  %s4 = inlined_call_operand.vmem [shape: f32[32,128], index: 4, kind: input, shape index: {}]
  %s5 = inlined_call_operand.hbm [shape: f32[32,256], index: 5, kind: input, shape index: {}]
  %s6 = inlined_call_operand.hbm [shape: f32[32,256], index: 6, kind: input, shape index: {}]
  %s7 = inlined_call_operand.vmem [shape: f32[1,256], index: 7, kind: input, shape index: {}]
  %s8 = inlined_call_operand.hbm [shape: f32[32,128], index: 8, kind: input, shape index: {}]
  %s9 = inlined_call_operand.hbm [shape: f32[32,128], index: 9, kind: input, shape index: {}]
  %s10 = inlined_call_operand.hbm [shape: f32[16,64], index: 10, kind: output, shape index: {}]
  %s11 = sld [smem:[#allocation0]]
  $region78: #{tpu_custom_call.1} parent=0
    _
  %s13 = ssub.s32 1, %s11
  %s14 = scalar_select 0, %s13, %s11
  $region1: #{tpu_custom_call.1} parent=0
    #allocation2 [shape = 'u8[40960]{0}', space=vmem, size = 0xa000, scoped, tag = 'input window, operand 1, single buffered']
    #allocation3 [shape = 's32[1]{0}', space=sflag, size = 0x4, scoped, tag = 'scoped memory for tpu_custom_call.1']
    #allocation4 [shape = 's32[1]{0}', space=sflag, size = 0x4, scoped, tag = 'scoped memory for tpu_custom_call.1']
    #allocation5 [shape = 'u8[1024]{0}', space=vmem, size = 0x400, scoped, tag = 'input window, operand 2, single buffered']
    #allocation6 [shape = 's32[1]{0}', space=sflag, size = 0x4, scoped, tag = 'scoped memory for tpu_custom_call.1']
    #allocation7 [shape = 'u8[16384]{0}', space=vmem, size = 0x4000, scoped, tag = 'input window, operand 3, single buffered']
    #allocation8 [shape = 'u8[32768]{0}', space=vmem, size = 0x8000, scoped, tag = 'input window, operand 5, single buffered']
    #allocation9 [shape = 's32[1]{0}', space=sflag, size = 0x4, scoped, tag = 'scoped memory for tpu_custom_call.1']
    #allocation10 [shape = 'u8[32768]{0}', space=vmem, size = 0x8000, scoped, tag = 'input window, operand 6, single buffered']
    #allocation11 [shape = 'u8[16384]{0}', space=vmem, size = 0x4000, scoped, tag = 'input window, operand 8, single buffered']
    #allocation12 [shape = 's32[1]{0}', space=sflag, size = 0x4, scoped, tag = 'scoped memory for tpu_custom_call.1']
    #allocation13 [shape = 'u8[16384]{0}', space=vmem, size = 0x4000, scoped, tag = 'input window, operand 9, single buffered']
    #allocation14 [shape = 'u8[8192]{0}', space=vmem, size = 0x2000, scoped, tag = 'output window, operand 0, single buffered']
    %15 = vsyncpa [#allocation3], 0
    %16 = vsyncpa [#allocation6], 0
    %17 = vsyncpa [#allocation9], 0
    %18 = vsyncpa [#allocation12], 0
    %19 = vsyncpa [#allocation4], 0
    // Predicated region
    $region2: #{tpu_custom_call.1} parent=1 // pred_check
      _
    $region3: #{tpu_custom_call.1} parent=1 // pred_check_branch
      %21 = sbr.rel (0) target = $region5
    $region4: #{tpu_custom_call.1} parent=1 // pred_region
      _
    $region5: #{tpu_custom_call.1} parent=1 // pred_fallthru
      _
    // Predicated region
    $region6: #{tpu_custom_call.1} parent=1 // pred_check
      _
    $region7: #{tpu_custom_call.1} parent=1 // pred_check_branch
      %23 = sbr.rel (0) target = $region9
    $region8: #{tpu_custom_call.1} parent=1 // pred_region
      %s25 = ssub.s32 1280, 1280
      %26 = vsyncadd [#allocation3], %s25
      %s27 = sshll.u32 [#allocation2], 4
      %s28 = int_to_ptr.vmem [resolvable:$true] %s27
      %33 = dma.hbm_to_vmem [thread:$0]  %s1, 1280, %s28, [#allocation3], 256, 256, 16
    $region9: #{tpu_custom_call.1} parent=1 // pred_fallthru
      _
    // Predicated region
    $region10: #{tpu_custom_call.1} parent=1 // pred_check
      _
    $region11: #{tpu_custom_call.1} parent=1 // pred_check_branch
      %35 = sbr.rel (0) target = $region13
    $region12: #{tpu_custom_call.1} parent=1 // pred_region
      %s37 = ssub.s32 32, 32
      %38 = vsyncadd [#allocation6], %s37
      %s40 = sshll.u32 [#allocation5], 4
      %s41 = int_to_ptr.vmem [resolvable:$true] %s40
      %43 = dma.hbm_to_vmem [thread:$0]  %s2, 32, %s41, [#allocation6]
    $region13: #{tpu_custom_call.1} parent=1 // pred_fallthru
      _
    // Predicated region
    $region14: #{tpu_custom_call.1} parent=1 // pred_check
      _
    $region15: #{tpu_custom_call.1} parent=1 // pred_check_branch
      %45 = sbr.rel (0) target = $region17
    $region16: #{tpu_custom_call.1} parent=1 // pred_region
      %s47 = ssub.s32 512, 512
      %48 = vsyncadd [#allocation6], %s47
      %s49 = sshll.u32 [#allocation7], 4
      %s50 = int_to_ptr.vmem [resolvable:$true] %s49
      %55 = dma.hbm_to_vmem [thread:$0]  %s3, 512, %s50, [#allocation6], 128, 128, 8
    $region17: #{tpu_custom_call.1} parent=1 // pred_fallthru
      _
    // Predicated region
    $region18: #{tpu_custom_call.1} parent=1 // pred_check
      _
    $region19: #{tpu_custom_call.1} parent=1 // pred_check_branch
      %57 = sbr.rel (0) target = $region21
    $region20: #{tpu_custom_call.1} parent=1 // pred_region
      _
    $region21: #{tpu_custom_call.1} parent=1 // pred_fallthru
      _
    // Predicated region
    $region22: #{tpu_custom_call.1} parent=1 // pred_check
      _
    $region23: #{tpu_custom_call.1} parent=1 // pred_check_branch
      %59 = sbr.rel (0) target = $region25
    $region24: #{tpu_custom_call.1} parent=1 // pred_region
      %s61 = ssub.s32 1024, 1024
      %62 = vsyncadd [#allocation9], %s61
      %s63 = sshll.u32 [#allocation8], 4
      %s64 = int_to_ptr.vmem [resolvable:$true] %s63
      %69 = dma.hbm_to_vmem [thread:$0]  %s5, 1024, %s64, [#allocation9], 256, 256, 16
    $region25: #{tpu_custom_call.1} parent=1 // pred_fallthru
      _
    // Predicated region
    $region26: #{tpu_custom_call.1} parent=1 // pred_check
      _
    $region27: #{tpu_custom_call.1} parent=1 // pred_check_branch
      %71 = sbr.rel (0) target = $region29
    $region28: #{tpu_custom_call.1} parent=1 // pred_region
      %s73 = ssub.s32 1024, 1024
      %74 = vsyncadd [#allocation9], %s73
      %s75 = sshll.u32 [#allocation10], 4
      %s76 = int_to_ptr.vmem [resolvable:$true] %s75
      %81 = dma.hbm_to_vmem [thread:$0]  %s6, 1024, %s76, [#allocation9], 256, 256, 16
    $region29: #{tpu_custom_call.1} parent=1 // pred_fallthru
      _
    // Predicated region
    $region30: #{tpu_custom_call.1} parent=1 // pred_check
      _
    $region31: #{tpu_custom_call.1} parent=1 // pred_check_branch
      %83 = sbr.rel (0) target = $region33
    $region32: #{tpu_custom_call.1} parent=1 // pred_region
      _
    $region33: #{tpu_custom_call.1} parent=1 // pred_fallthru
      _
    // Predicated region
    $region34: #{tpu_custom_call.1} parent=1 // pred_check
      _
    $region35: #{tpu_custom_call.1} parent=1 // pred_check_branch
      %85 = sbr.rel (0) target = $region37
    $region36: #{tpu_custom_call.1} parent=1 // pred_region
      %s87 = ssub.s32 512, 512
      %88 = vsyncadd [#allocation12], %s87
      %s89 = sshll.u32 [#allocation11], 4
      %s90 = int_to_ptr.vmem [resolvable:$true] %s89
      %95 = dma.hbm_to_vmem [thread:$0]  %s8, 512, %s90, [#allocation12], 128, 128, 8
    $region37: #{tpu_custom_call.1} parent=1 // pred_fallthru
      _
    // Predicated region
    $region38: #{tpu_custom_call.1} parent=1 // pred_check
      _
    $region39: #{tpu_custom_call.1} parent=1 // pred_check_branch
      %97 = sbr.rel (0) target = $region41
    $region40: #{tpu_custom_call.1} parent=1 // pred_region
      %s99 = ssub.s32 512, 512
      %100 = vsyncadd [#allocation12], %s99
      %s101 = sshll.u32 [#allocation13], 4
      %s102 = int_to_ptr.vmem [resolvable:$true] %s101
      %107 = dma.hbm_to_vmem [thread:$0]  %s9, 512, %s102, [#allocation12], 128, 128, 8
    $region41: #{tpu_custom_call.1} parent=1 // pred_fallthru
      _
    // Predicated region
    $region42: #{tpu_custom_call.1} parent=1 // pred_check
      _
    $region43: #{tpu_custom_call.1} parent=1 // pred_check_branch
      %109 = sbr.rel (0) target = $region45
    $region44: #{tpu_custom_call.1} parent=1 // pred_region
      %110 = dma.done [#allocation3], 1280
    $region45: #{tpu_custom_call.1} parent=1 // pred_fallthru
      _
    // Predicated region
    $region46: #{tpu_custom_call.1} parent=1 // pred_check
      _
    $region47: #{tpu_custom_call.1} parent=1 // pred_check_branch
      %112 = sbr.rel (0) target = $region49
    $region48: #{tpu_custom_call.1} parent=1 // pred_region
      %113 = dma.done [#allocation6], 32
    $region49: #{tpu_custom_call.1} parent=1 // pred_fallthru
      _
    // Predicated region
    $region50: #{tpu_custom_call.1} parent=1 // pred_check
      _
    $region51: #{tpu_custom_call.1} parent=1 // pred_check_branch
      %115 = sbr.rel (0) target = $region53
    $region52: #{tpu_custom_call.1} parent=1 // pred_region
      %116 = dma.done [#allocation6], 512
    $region53: #{tpu_custom_call.1} parent=1 // pred_fallthru
      _
    // Predicated region
    $region54: #{tpu_custom_call.1} parent=1 // pred_check
      _
    $region55: #{tpu_custom_call.1} parent=1 // pred_check_branch
      %118 = sbr.rel (0) target = $region57
    $region56: #{tpu_custom_call.1} parent=1 // pred_region
      %119 = dma.done [#allocation9], 1024
    $region57: #{tpu_custom_call.1} parent=1 // pred_fallthru
      _
    // Predicated region
    $region58: #{tpu_custom_call.1} parent=1 // pred_check
      _
    $region59: #{tpu_custom_call.1} parent=1 // pred_check_branch
      %121 = sbr.rel (0) target = $region61
    $region60: #{tpu_custom_call.1} parent=1 // pred_region
      %122 = dma.done [#allocation9], 1024
    $region61: #{tpu_custom_call.1} parent=1 // pred_fallthru
      _
    // Predicated region
    $region62: #{tpu_custom_call.1} parent=1 // pred_check
      _
    $region63: #{tpu_custom_call.1} parent=1 // pred_check_branch
      %124 = sbr.rel (0) target = $region65
    $region64: #{tpu_custom_call.1} parent=1 // pred_region
      %125 = dma.done [#allocation12], 512
    $region65: #{tpu_custom_call.1} parent=1 // pred_fallthru
      _
    // Predicated region
    $region66: #{tpu_custom_call.1} parent=1 // pred_check
      _
    $region67: #{tpu_custom_call.1} parent=1 // pred_check_branch
      %127 = sbr.rel (0) target = $region69
    $region68: #{tpu_custom_call.1} parent=1 // pred_region
      %128 = dma.done [#allocation12], 512
    $region69: #{tpu_custom_call.1} parent=1 // pred_fallthru
      _
    %v129 = vld [vmem:[%s0] sm:$0xff]
    %v130 = vld [vmem:[%s0 + $0x8] sm:$0xff]
    %v131 = vlaneseq
    %v132 = vand.u32 %v131, 127
    %133 = vset.pattern.permute.xlu0 0
    %134 = vperm.xlu0 %133, %v129
    %v135 = vpop.permute.xlu0 %134
    %136 = vset.pattern.permute.xlu0 0
    %137 = vperm.xlu0 %136, %v130
    %v138 = vpop.permute.xlu0 %137
    %vm139 = vcmp.eq.s32.totalorder %v132, %v135
    %vm140 = vcmp.eq.s32.totalorder %v132, %v138
    %v141 = vsel %vm139, 1, 0
    %v142 = vsel %vm140, 1, 0
    %v143 = vcvt.s32.f32 %v141
    %v144 = vcvt.s32.f32 %v142
    %v145 = vld [vmem:[#allocation2] sm:$0xff]
    %v146 = vld [vmem:[#allocation2 + $0x8] sm:$0xff]
    %v147 = vld [vmem:[#allocation2 + $0x10] sm:$0xff]
    %v148 = vld [vmem:[#allocation2 + $0x18] sm:$0xff]
    %v149 = vld [vmem:[#allocation2 + $0x20] sm:$0xff]
    %v150 = vld [vmem:[#allocation2 + $0x28] sm:$0xff]
    %v151 = vld [vmem:[#allocation2 + $0x30] sm:$0xff]
    %v152 = vld [vmem:[#allocation2 + $0x38] sm:$0xff]
    %v153 = vld [vmem:[#allocation2 + $0x40] sm:$0xff]
    %v154 = vld [vmem:[#allocation2 + $0x48] sm:$0xff]
    %v155 = vld [vmem:[#allocation5] sm:$0x3]
    %v157 = vlaneseq
    %v158 = vshrl.u32 %v157, 7
    %v159 = vsub.s32 0, %v158
    %v160 = vrot.slane %v155, %v159
    %v161 = vlaneseq
    %v162 = vshrl.u32 %v161, 7
    %v163 = vsub.s32 1, %v162
    %v164 = vrot.slane %v155, %v163
    %vm167 = vcmask 326656
    %v169 = vsel %vm167, %v143, 0
    %v172 = vsel %vm167, %v144, 0
    %174 = vmatprep.subr.mxu0 %v146
    %175 = vmatpush1.msra.mxu0 %v145
    %176 = vmatprep.subr.mxu0 %v148
    %177 = vmatpush1.msra.mxu0 %v147
    %178 = vmatprep.subr.mxu0 %v150
    %179 = vmatpush1.msra.mxu0 %v149
    %180 = vmatprep.subr.mxu0 %v152
    %181 = vmatpush1.msra.mxu0 %v151
    %182 = vmatprep.subr.mxu0 %v154
    %183 = vmatpush1.msra.mxu0 %v153
    %184 = vmatprep.subr.mxu0 0.0
    %185 = vmatpush1.msra.mxu0 0.0
    %186 = vmatprep.subr.mxu0 0.0
    %187 = vmatpush1.msra.mxu0 0.0
    %188 = vmatprep.subr.mxu0 0.0
    %189 = vmatpush1.msra.mxu0 0.0
    %190 = vmatprep.subr.mxu0 0.0
    %191 = vmatpush1.msra.mxu0 0.0
    %192 = vmatprep.subr.mxu0 0.0
    %193 = vmatpush1.msra.mxu0 0.0
    %194 = vmatprep.subr.mxu0 0.0
    %195 = vmatpush1.msra.mxu0 0.0
    %196 = vmatprep.subr.mxu0 0.0
    %197 = vmatpush1.msra.mxu0 0.0
    %198 = vmatprep.subr.mxu0 0.0
    %199 = vmatpush1.msra.mxu0 0.0
    %200 = vmatprep.subr.mxu0 0.0
    %201 = vmatpush1.msra.mxu0 0.0
    %202 = vmatprep.subr.mxu0 0.0
    %203 = vmatpush1.msra.mxu0 0.0
    %204 = vmatprep.subr.mxu0 0.0
    %205 = vmatpush1.msra.mxu0 0.0
    %206 = vmatprep.subr.mxu0 0.0
    %207 = vmatpush1.msra.mxu0 0.0
    %208 = vmatprep.subr.mxu0 0.0
    %209 = vmatpush1.msra.mxu0 0.0
    %210 = vmatprep.subr.mxu0 0.0
    %211 = vmatpush1.msra.mxu0 0.0
    %212 = vmatprep.subr.mxu0 0.0
    %213 = vmatpush1.msra.mxu0 0.0
    %214 = vmatprep.subr.mxu0 0.0
    %215 = vmatpush1.msra.mxu0 0.0
    %216 = vmatprep.subr.mxu0 0.0
    %217 = vmatpush1.msra.mxu0 0.0
    %218 = vmatprep.subr.mxu0 0.0
    %219 = vmatpush1.msra.mxu0 0.0
    %220 = vmatprep.subr.mxu0 0.0
    %221 = vmatpush1.msra.mxu0 0.0
    %222 = vmatprep.subr.mxu0 0.0
    %223 = vmatpush1.msra.mxu0 0.0
    %224 = vmatprep.subr.mxu0 0.0
    %225 = vmatpush1.msra.mxu0 0.0
    %226 = vmatprep.subr.mxu0 0.0
    %227 = vmatpush1.msra.mxu0 0.0
    %228 = vmatprep.subr.mxu0 0.0
    %229 = vmatpush1.msra.mxu0 0.0
    %230 = vmatprep.subr.mxu0 0.0
    %231 = vmatpush1.msra.mxu0 0.0
    %232 = vmatprep.subr.mxu0 0.0
    %233 = vmatpush1.msra.mxu0 0.0
    %234 = vmatprep.subr.mxu0 0.0
    %235 = vmatpush1.msra.mxu0 0.0
    %236 = vmatprep.subr.mxu0 0.0
    %237 = vmatpush1.msra.mxu0 0.0
    %238 = vmatprep.mubr.f32.mxu0 0.0
    %239 = vmatmul.mubr.f32.gmra.mrb[0].mxu0 %v169
    %v240 = vpop.f32.mrb[0].mxu0
    %v241 = vadd.f32 %v160, %v240
    %v242 = vpop.f32.mrb[0].mxu0
    %v243 = vadd.f32 %v164, %v242
    %244 = vmatprep.mubr.f32.mxu0 0.0
    %245 = vmatmul.mubr.f32.gmra.mrb[0].mxu0 %v172
    %v246 = vpop.f32.mrb[0].mxu0
    %v247 = vadd.f32 %v160, %v246
    %v248 = vpop.f32.mrb[0].mxu0
    %v249 = vadd.f32 %v164, %v248
    %250 = vdwg.mxu0
    %v251 = vld [vmem:[#allocation7] sm:$0xff]
    %v252 = vld [vmem:[#allocation7 + $0x8] sm:$0xff]
    %v253 = vld [vmem:[#allocation7 + $0x10] sm:$0xff]
    %v254 = vld [vmem:[#allocation7 + $0x18] sm:$0xff]
    %v255 = vld [vmem:[%s4] sm:$0xff]
    %v256 = vld [vmem:[%s4 + $0x8] sm:$0xff]
    %v257 = vld [vmem:[%s4 + $0x10] sm:$0xff]
    %v258 = vld [vmem:[%s4 + $0x18] sm:$0xff]
    %vm259 = vcmask 261120
    %v261 = vsel %vm259, 0.0, 0
    %263 = vmatprep.subr.mxu0 0.0
    %264 = vmatpush1.msra.mxu0 %v251
    %265 = vmatprep.subr.mxu0 0.0
    %266 = vmatpush1.msra.mxu0 %v252
    %267 = vmatprep.subr.mxu0 0.0
    %268 = vmatpush1.msra.mxu0 %v253
    %269 = vmatprep.subr.mxu0 0.0
    %270 = vmatpush1.msra.mxu0 %v254
    %271 = vmatprep.subr.mxu0 0.0
    %272 = vmatpush1.msra.mxu0 0.0
    %273 = vmatprep.subr.mxu0 0.0
    %274 = vmatpush1.msra.mxu0 0.0
    %275 = vmatprep.subr.mxu0 0.0
    %276 = vmatpush1.msra.mxu0 0.0
    %277 = vmatprep.subr.mxu0 0.0
    %278 = vmatpush1.msra.mxu0 0.0
    %279 = vmatprep.subr.mxu0 0.0
    %280 = vmatpush1.msra.mxu0 0.0
    %281 = vmatprep.subr.mxu0 0.0
    %282 = vmatpush1.msra.mxu0 0.0
    %283 = vmatprep.subr.mxu0 0.0
    %284 = vmatpush1.msra.mxu0 0.0
    %285 = vmatprep.subr.mxu0 0.0
    %286 = vmatpush1.msra.mxu0 0.0
    %287 = vmatprep.subr.mxu0 0.0
    %288 = vmatpush1.msra.mxu0 0.0
    %289 = vmatprep.subr.mxu0 0.0
    %290 = vmatpush1.msra.mxu0 0.0
    %291 = vmatprep.subr.mxu0 0.0
    %292 = vmatpush1.msra.mxu0 0.0
    %293 = vmatprep.subr.mxu0 0.0
    %294 = vmatpush1.msra.mxu0 0.0
    %295 = vmatprep.subr.mxu0 0.0
    %296 = vmatpush1.msra.mxu0 0.0
    %297 = vmatprep.subr.mxu0 0.0
    %298 = vmatpush1.msra.mxu0 0.0
    %299 = vmatprep.subr.mxu0 0.0
    %300 = vmatpush1.msra.mxu0 0.0
    %301 = vmatprep.subr.mxu0 0.0
    %302 = vmatpush1.msra.mxu0 0.0
    %303 = vmatprep.subr.mxu0 0.0
    %304 = vmatpush1.msra.mxu0 0.0
    %305 = vmatprep.subr.mxu0 0.0
    %306 = vmatpush1.msra.mxu0 0.0
    %307 = vmatprep.subr.mxu0 0.0
    %308 = vmatpush1.msra.mxu0 0.0
    %309 = vmatprep.subr.mxu0 0.0
    %310 = vmatpush1.msra.mxu0 0.0
    %311 = vmatprep.subr.mxu0 0.0
    %312 = vmatpush1.msra.mxu0 0.0
    %313 = vmatprep.subr.mxu0 0.0
    %314 = vmatpush1.msra.mxu0 0.0
    %315 = vmatprep.subr.mxu0 0.0
    %316 = vmatpush1.msra.mxu0 0.0
    %317 = vmatprep.subr.mxu0 0.0
    %318 = vmatpush1.msra.mxu0 0.0
    %319 = vmatprep.subr.mxu0 0.0
    %320 = vmatpush1.msra.mxu0 0.0
    %321 = vmatprep.subr.mxu0 0.0
    %322 = vmatpush1.msra.mxu0 0.0
    %323 = vmatprep.subr.mxu0 0.0
    %324 = vmatpush1.msra.mxu0 0.0
    %325 = vmatprep.subr.mxu0 0.0
    %326 = vmatpush1.msra.mxu0 0.0
    %327 = vmatprep.mubr.f32.mxu0 0.0
    %328 = vmatmul.mubr.f32.gmra.mrb[0].mxu0 %v261
    %v329 = vpop.f32.mrb[0].mxu0
    %v330 = vadd.f32 0.0, %v329
    %v331 = vpop.f32.mrb[0].mxu0
    %332 = vdwg.mxu0
    %v333 = vadd.f32 %v241, %v330
    %334 = vmatprep.subr.mxu0 0.0
    %335 = vmatpush1.msra.mxu0 %v255
    %336 = vmatprep.subr.mxu0 0.0
    %337 = vmatpush1.msra.mxu0 %v256
    %338 = vmatprep.subr.mxu0 0.0
    %339 = vmatpush1.msra.mxu0 %v257
    %340 = vmatprep.subr.mxu0 0.0
    %341 = vmatpush1.msra.mxu0 %v258
    %342 = vmatprep.subr.mxu0 0.0
    %343 = vmatpush1.msra.mxu0 0.0
    %344 = vmatprep.subr.mxu0 0.0
    %345 = vmatpush1.msra.mxu0 0.0
    %346 = vmatprep.subr.mxu0 0.0
    %347 = vmatpush1.msra.mxu0 0.0
    %348 = vmatprep.subr.mxu0 0.0
    %349 = vmatpush1.msra.mxu0 0.0
    %350 = vmatprep.subr.mxu0 0.0
    %351 = vmatpush1.msra.mxu0 0.0
    %352 = vmatprep.subr.mxu0 0.0
    %353 = vmatpush1.msra.mxu0 0.0
    %354 = vmatprep.subr.mxu0 0.0
    %355 = vmatpush1.msra.mxu0 0.0
    %356 = vmatprep.subr.mxu0 0.0
    %357 = vmatpush1.msra.mxu0 0.0
    %358 = vmatprep.subr.mxu0 0.0
    %359 = vmatpush1.msra.mxu0 0.0
    %360 = vmatprep.subr.mxu0 0.0
    %361 = vmatpush1.msra.mxu0 0.0
    %362 = vmatprep.subr.mxu0 0.0
    %363 = vmatpush1.msra.mxu0 0.0
    %364 = vmatprep.subr.mxu0 0.0
    %365 = vmatpush1.msra.mxu0 0.0
    %366 = vmatprep.subr.mxu0 0.0
    %367 = vmatpush1.msra.mxu0 0.0
    %368 = vmatprep.subr.mxu0 0.0
    %369 = vmatpush1.msra.mxu0 0.0
    %370 = vmatprep.subr.mxu0 0.0
    %371 = vmatpush1.msra.mxu0 0.0
    %372 = vmatprep.subr.mxu0 0.0
    %373 = vmatpush1.msra.mxu0 0.0
    %374 = vmatprep.subr.mxu0 0.0
    %375 = vmatpush1.msra.mxu0 0.0
    %376 = vmatprep.subr.mxu0 0.0
    %377 = vmatpush1.msra.mxu0 0.0
    %378 = vmatprep.subr.mxu0 0.0
    %379 = vmatpush1.msra.mxu0 0.0
    %380 = vmatprep.subr.mxu0 0.0
    %381 = vmatpush1.msra.mxu0 0.0
    %382 = vmatprep.subr.mxu0 0.0
    %383 = vmatpush1.msra.mxu0 0.0
    %384 = vmatprep.subr.mxu0 0.0
    %385 = vmatpush1.msra.mxu0 0.0
    %386 = vmatprep.subr.mxu0 0.0
    %387 = vmatpush1.msra.mxu0 0.0
    %388 = vmatprep.subr.mxu0 0.0
    %389 = vmatpush1.msra.mxu0 0.0
    %390 = vmatprep.subr.mxu0 0.0
    %391 = vmatpush1.msra.mxu0 0.0
    %392 = vmatprep.subr.mxu0 0.0
    %393 = vmatpush1.msra.mxu0 0.0
    %394 = vmatprep.subr.mxu0 0.0
    %395 = vmatpush1.msra.mxu0 0.0
    %396 = vmatprep.subr.mxu0 0.0
    %397 = vmatpush1.msra.mxu0 0.0
    %398 = vmatprep.mubr.f32.mxu0 0.0
    %399 = vmatmul.mubr.f32.gmra.mrb[0].mxu0 %v261
    %v400 = vpop.f32.mrb[0].mxu0
    %v401 = vadd.f32 0.0, %v400
    %v402 = vpop.f32.mrb[0].mxu0
    %403 = vdwg.mxu0
    %v405 = vrot.slane %v401, 2
    %v407 = vadd.f32 %v249, %v405
    %v408 = vxor.u32 %v333, 2147483648
    %v409 = vmul.f32 %v408, 1.442695
    %v410 = vpow.pop %v409
    %v411 = vadd.f32 %v410, 1.0
    %v412 = vrcp.pop %v411
    %v413 = vmul.f32 1.0, %v412
    %v414 = vtanh.pop %v333
    %v415 = vmul.f32 %v413, 0.0
    %417 = vrot.lane.b32.xlu0 %v414, 64
    %v418 = vpop.permute.xlu0 %417
    %v420 = vmul.f32 %v413, %v418
    %422 = vrot.lane.b32.xlu0 %v420, 32
    %v423 = vpop.permute.xlu0 %422
    %v425 = vadd.f32 %v415, %v423
    %v426 = vtanh.pop %v425
    %428 = vrot.lane.b32.xlu0 %v426, 64
    %v429 = vpop.permute.xlu0 %428
    %v431 = vmul.f32 %v413, %v429
    %v432 = vxor.u32 %v407, 2147483648
    %v433 = vmul.f32 %v432, 1.442695
    %v434 = vpow.pop %v433
    %v435 = vadd.f32 %v434, 1.0
    %v436 = vrcp.pop %v435
    %v437 = vmul.f32 1.0, %v436
    %v438 = vtanh.pop %v407
    %v439 = vmul.f32 %v437, 0.0
    %441 = vrot.lane.b32.xlu0 %v438, 64
    %v442 = vpop.permute.xlu0 %441
    %v444 = vmul.f32 %v437, %v442
    %446 = vrot.lane.b32.xlu0 %v444, 32
    %v447 = vpop.permute.xlu0 %446
    %v449 = vadd.f32 %v439, %v447
    %v450 = vtanh.pop %v449
    %452 = vrot.lane.b32.xlu0 %v450, 64
    %v453 = vpop.permute.xlu0 %452
    %v455 = vmul.f32 %v437, %v453
    %457 = vrot.lane.b32.xlu0 %v431, 32
    %v458 = vpop.permute.xlu0 %457
    %v459 = vsel %vm259, %v458, 0
    %461 = vmatprep.subr.mxu0 0.0
    %462 = vmatpush1.msra.mxu0 %v251
    %463 = vmatprep.subr.mxu0 0.0
    %464 = vmatpush1.msra.mxu0 %v252
    %465 = vmatprep.subr.mxu0 0.0
    %466 = vmatpush1.msra.mxu0 %v253
    %467 = vmatprep.subr.mxu0 0.0
    %468 = vmatpush1.msra.mxu0 %v254
    %469 = vmatprep.subr.mxu0 0.0
    %470 = vmatpush1.msra.mxu0 0.0
    %471 = vmatprep.subr.mxu0 0.0
    %472 = vmatpush1.msra.mxu0 0.0
    %473 = vmatprep.subr.mxu0 0.0
    %474 = vmatpush1.msra.mxu0 0.0
    %475 = vmatprep.subr.mxu0 0.0
    %476 = vmatpush1.msra.mxu0 0.0
    %477 = vmatprep.subr.mxu0 0.0
    %478 = vmatpush1.msra.mxu0 0.0
    %479 = vmatprep.subr.mxu0 0.0
    %480 = vmatpush1.msra.mxu0 0.0
    %481 = vmatprep.subr.mxu0 0.0
    %482 = vmatpush1.msra.mxu0 0.0
    %483 = vmatprep.subr.mxu0 0.0
    %484 = vmatpush1.msra.mxu0 0.0
    %485 = vmatprep.subr.mxu0 0.0
    %486 = vmatpush1.msra.mxu0 0.0
    %487 = vmatprep.subr.mxu0 0.0
    %488 = vmatpush1.msra.mxu0 0.0
    %489 = vmatprep.subr.mxu0 0.0
    %490 = vmatpush1.msra.mxu0 0.0
    %491 = vmatprep.subr.mxu0 0.0
    %492 = vmatpush1.msra.mxu0 0.0
    %493 = vmatprep.subr.mxu0 0.0
    %494 = vmatpush1.msra.mxu0 0.0
    %495 = vmatprep.subr.mxu0 0.0
    %496 = vmatpush1.msra.mxu0 0.0
    %497 = vmatprep.subr.mxu0 0.0
    %498 = vmatpush1.msra.mxu0 0.0
    %499 = vmatprep.subr.mxu0 0.0
    %500 = vmatpush1.msra.mxu0 0.0
    %501 = vmatprep.subr.mxu0 0.0
    %502 = vmatpush1.msra.mxu0 0.0
    %503 = vmatprep.subr.mxu0 0.0
    %504 = vmatpush1.msra.mxu0 0.0
    %505 = vmatprep.subr.mxu0 0.0
    %506 = vmatpush1.msra.mxu0 0.0
    %507 = vmatprep.subr.mxu0 0.0
    %508 = vmatpush1.msra.mxu0 0.0
    %509 = vmatprep.subr.mxu0 0.0
    %510 = vmatpush1.msra.mxu0 0.0
    %511 = vmatprep.subr.mxu0 0.0
    %512 = vmatpush1.msra.mxu0 0.0
    %513 = vmatprep.subr.mxu0 0.0
    %514 = vmatpush1.msra.mxu0 0.0
    %515 = vmatprep.subr.mxu0 0.0
    %516 = vmatpush1.msra.mxu0 0.0
    %517 = vmatprep.subr.mxu0 0.0
    %518 = vmatpush1.msra.mxu0 0.0
    %519 = vmatprep.subr.mxu0 0.0
    %520 = vmatpush1.msra.mxu0 0.0
    %521 = vmatprep.subr.mxu0 0.0
    %522 = vmatpush1.msra.mxu0 0.0
    %523 = vmatprep.subr.mxu0 0.0
    %524 = vmatpush1.msra.mxu0 0.0
    %525 = vmatprep.mubr.f32.mxu0 0.0
    %526 = vmatmul.mubr.f32.gmra.mrb[0].mxu0 %v459
    %v527 = vpop.f32.mrb[0].mxu0
    %v528 = vadd.f32 0.0, %v527
    %v529 = vpop.f32.mrb[0].mxu0
    %530 = vdwg.mxu0
    %v532 = vrot.slane %v528, 6
    %v534 = vadd.f32 %v241, %v532
    %v536 = vrot.slane %v455, 6
    %537 = vrot.lane.b32.xlu0 %v536, 32
    %v538 = vpop.permute.xlu0 %537
    %v539 = vsel %vm259, %v538, 0
    %541 = vmatprep.subr.mxu0 0.0
    %542 = vmatpush1.msra.mxu0 %v255
    %543 = vmatprep.subr.mxu0 0.0
    %544 = vmatpush1.msra.mxu0 %v256
    %545 = vmatprep.subr.mxu0 0.0
    %546 = vmatpush1.msra.mxu0 %v257
    %547 = vmatprep.subr.mxu0 0.0
    %548 = vmatpush1.msra.mxu0 %v258
    %549 = vmatprep.subr.mxu0 0.0
    %550 = vmatpush1.msra.mxu0 0.0
    %551 = vmatprep.subr.mxu0 0.0
    %552 = vmatpush1.msra.mxu0 0.0
    %553 = vmatprep.subr.mxu0 0.0
    %554 = vmatpush1.msra.mxu0 0.0
    %555 = vmatprep.subr.mxu0 0.0
    %556 = vmatpush1.msra.mxu0 0.0
    %557 = vmatprep.subr.mxu0 0.0
    %558 = vmatpush1.msra.mxu0 0.0
    %559 = vmatprep.subr.mxu0 0.0
    %560 = vmatpush1.msra.mxu0 0.0
    %561 = vmatprep.subr.mxu0 0.0
    %562 = vmatpush1.msra.mxu0 0.0
    %563 = vmatprep.subr.mxu0 0.0
    %564 = vmatpush1.msra.mxu0 0.0
    %565 = vmatprep.subr.mxu0 0.0
    %566 = vmatpush1.msra.mxu0 0.0
    %567 = vmatprep.subr.mxu0 0.0
    %568 = vmatpush1.msra.mxu0 0.0
    %569 = vmatprep.subr.mxu0 0.0
    %570 = vmatpush1.msra.mxu0 0.0
    %571 = vmatprep.subr.mxu0 0.0
    %572 = vmatpush1.msra.mxu0 0.0
    %573 = vmatprep.subr.mxu0 0.0
    %574 = vmatpush1.msra.mxu0 0.0
    %575 = vmatprep.subr.mxu0 0.0
    %576 = vmatpush1.msra.mxu0 0.0
    %577 = vmatprep.subr.mxu0 0.0
    %578 = vmatpush1.msra.mxu0 0.0
    %579 = vmatprep.subr.mxu0 0.0
    %580 = vmatpush1.msra.mxu0 0.0
    %581 = vmatprep.subr.mxu0 0.0
    %582 = vmatpush1.msra.mxu0 0.0
    %583 = vmatprep.subr.mxu0 0.0
    %584 = vmatpush1.msra.mxu0 0.0
    %585 = vmatprep.subr.mxu0 0.0
    %586 = vmatpush1.msra.mxu0 0.0
    %587 = vmatprep.subr.mxu0 0.0
    %588 = vmatpush1.msra.mxu0 0.0
    %589 = vmatprep.subr.mxu0 0.0
    %590 = vmatpush1.msra.mxu0 0.0
    %591 = vmatprep.subr.mxu0 0.0
    %592 = vmatpush1.msra.mxu0 0.0
    %593 = vmatprep.subr.mxu0 0.0
    %594 = vmatpush1.msra.mxu0 0.0
    %595 = vmatprep.subr.mxu0 0.0
    %596 = vmatpush1.msra.mxu0 0.0
    %597 = vmatprep.subr.mxu0 0.0
    %598 = vmatpush1.msra.mxu0 0.0
    %599 = vmatprep.subr.mxu0 0.0
    %600 = vmatpush1.msra.mxu0 0.0
    %601 = vmatprep.subr.mxu0 0.0
    %602 = vmatpush1.msra.mxu0 0.0
    %603 = vmatprep.subr.mxu0 0.0
    %604 = vmatpush1.msra.mxu0 0.0
    %605 = vmatprep.mubr.f32.mxu0 0.0
    %606 = vmatmul.mubr.f32.gmra.mrb[0].mxu0 %v539
    %v607 = vpop.f32.mrb[0].mxu0
    %v608 = vadd.f32 0.0, %v607
    %v609 = vpop.f32.mrb[0].mxu0
    %610 = vdwg.mxu0
    %v612 = vrot.slane %v608, 4
    %v614 = vadd.f32 %v249, %v612
    %v615 = vxor.u32 %v534, 2147483648
    %v616 = vmul.f32 %v615, 1.442695
    %v617 = vpow.pop %v616
    %v618 = vadd.f32 %v617, 1.0
    %v619 = vrcp.pop %v618
    %v620 = vmul.f32 1.0, %v619
    %v621 = vtanh.pop %v534
    %v623 = vrot.slane %v425, 6
    %v625 = vmul.f32 %v620, %v623
    %627 = vrot.lane.b32.xlu0 %v621, 64
    %v628 = vpop.permute.xlu0 %627
    %v630 = vmul.f32 %v620, %v628
    %632 = vrot.lane.b32.xlu0 %v630, 32
    %v633 = vpop.permute.xlu0 %632
    %v635 = vadd.f32 %v625, %v633
    %v636 = vtanh.pop %v635
    %638 = vrot.lane.b32.xlu0 %v636, 64
    %v639 = vpop.permute.xlu0 %638
    %v641 = vmul.f32 %v620, %v639
    %v642 = vxor.u32 %v614, 2147483648
    %v643 = vmul.f32 %v642, 1.442695
    %v644 = vpow.pop %v643
    %v645 = vadd.f32 %v644, 1.0
    %v646 = vrcp.pop %v645
    %v647 = vmul.f32 1.0, %v646
    %v648 = vtanh.pop %v614
    %v650 = vrot.slane %v449, 2
    %v652 = vmul.f32 %v647, %v650
    %654 = vrot.lane.b32.xlu0 %v648, 64
    %v655 = vpop.permute.xlu0 %654
    %v657 = vmul.f32 %v647, %v655
    %659 = vrot.lane.b32.xlu0 %v657, 32
    %v660 = vpop.permute.xlu0 %659
    %v662 = vadd.f32 %v652, %v660
    %v663 = vtanh.pop %v662
    %665 = vrot.lane.b32.xlu0 %v663, 64
    %v666 = vpop.permute.xlu0 %665
    %v668 = vmul.f32 %v647, %v666
    %v670 = vrot.slane %v641, 2
    %671 = vrot.lane.b32.xlu0 %v670, 32
    %v672 = vpop.permute.xlu0 %671
    %v673 = vsel %vm259, %v672, 0
    %675 = vmatprep.subr.mxu0 0.0
    %676 = vmatpush1.msra.mxu0 %v251
    %677 = vmatprep.subr.mxu0 0.0
    %678 = vmatpush1.msra.mxu0 %v252
    %679 = vmatprep.subr.mxu0 0.0
    %680 = vmatpush1.msra.mxu0 %v253
    %681 = vmatprep.subr.mxu0 0.0
    %682 = vmatpush1.msra.mxu0 %v254
    %683 = vmatprep.subr.mxu0 0.0
    %684 = vmatpush1.msra.mxu0 0.0
    %685 = vmatprep.subr.mxu0 0.0
    %686 = vmatpush1.msra.mxu0 0.0
    %687 = vmatprep.subr.mxu0 0.0
    %688 = vmatpush1.msra.mxu0 0.0
    %689 = vmatprep.subr.mxu0 0.0
    %690 = vmatpush1.msra.mxu0 0.0
    %691 = vmatprep.subr.mxu0 0.0
    %692 = vmatpush1.msra.mxu0 0.0
    %693 = vmatprep.subr.mxu0 0.0
    %694 = vmatpush1.msra.mxu0 0.0
    %695 = vmatprep.subr.mxu0 0.0
    %696 = vmatpush1.msra.mxu0 0.0
    %697 = vmatprep.subr.mxu0 0.0
    %698 = vmatpush1.msra.mxu0 0.0
    %699 = vmatprep.subr.mxu0 0.0
    %700 = vmatpush1.msra.mxu0 0.0
    %701 = vmatprep.subr.mxu0 0.0
    %702 = vmatpush1.msra.mxu0 0.0
    %703 = vmatprep.subr.mxu0 0.0
    %704 = vmatpush1.msra.mxu0 0.0
    %705 = vmatprep.subr.mxu0 0.0
    %706 = vmatpush1.msra.mxu0 0.0
    %707 = vmatprep.subr.mxu0 0.0
    %708 = vmatpush1.msra.mxu0 0.0
    %709 = vmatprep.subr.mxu0 0.0
    %710 = vmatpush1.msra.mxu0 0.0
    %711 = vmatprep.subr.mxu0 0.0
    %712 = vmatpush1.msra.mxu0 0.0
    %713 = vmatprep.subr.mxu0 0.0
    %714 = vmatpush1.msra.mxu0 0.0
    %715 = vmatprep.subr.mxu0 0.0
    %716 = vmatpush1.msra.mxu0 0.0
    %717 = vmatprep.subr.mxu0 0.0
    %718 = vmatpush1.msra.mxu0 0.0
    %719 = vmatprep.subr.mxu0 0.0
    %720 = vmatpush1.msra.mxu0 0.0
    %721 = vmatprep.subr.mxu0 0.0
    %722 = vmatpush1.msra.mxu0 0.0
    %723 = vmatprep.subr.mxu0 0.0
    %724 = vmatpush1.msra.mxu0 0.0
    %725 = vmatprep.subr.mxu0 0.0
    %726 = vmatpush1.msra.mxu0 0.0
    %727 = vmatprep.subr.mxu0 0.0
    %728 = vmatpush1.msra.mxu0 0.0
    %729 = vmatprep.subr.mxu0 0.0
    %730 = vmatpush1.msra.mxu0 0.0
    %731 = vmatprep.subr.mxu0 0.0
    %732 = vmatpush1.msra.mxu0 0.0
    %733 = vmatprep.subr.mxu0 0.0
    %734 = vmatpush1.msra.mxu0 0.0
    %735 = vmatprep.subr.mxu0 0.0
    %736 = vmatpush1.msra.mxu0 0.0
    %737 = vmatprep.subr.mxu0 0.0
    %738 = vmatpush1.msra.mxu0 0.0
    %739 = vmatprep.mubr.f32.mxu0 0.0
    %740 = vmatmul.mubr.f32.gmra.mrb[0].mxu0 %v673
    %v741 = vpop.f32.mrb[0].mxu0
    %v742 = vadd.f32 0.0, %v741
    %v743 = vpop.f32.mrb[0].mxu0
    %744 = vdwg.mxu0
    %v746 = vrot.slane %v742, 4
    %v748 = vadd.f32 %v241, %v746
    %v750 = vrot.slane %v668, 4
    %751 = vrot.lane.b32.xlu0 %v750, 32
    %v752 = vpop.permute.xlu0 %751
    %v753 = vsel %vm259, %v752, 0
    %755 = vmatprep.subr.mxu0 0.0
    %756 = vmatpush1.msra.mxu0 %v255
    %757 = vmatprep.subr.mxu0 0.0
    %758 = vmatpush1.msra.mxu0 %v256
    %759 = vmatprep.subr.mxu0 0.0
    %760 = vmatpush1.msra.mxu0 %v257
    %761 = vmatprep.subr.mxu0 0.0
    %762 = vmatpush1.msra.mxu0 %v258
    %763 = vmatprep.subr.mxu0 0.0
    %764 = vmatpush1.msra.mxu0 0.0
    %765 = vmatprep.subr.mxu0 0.0
    %766 = vmatpush1.msra.mxu0 0.0
    %767 = vmatprep.subr.mxu0 0.0
    %768 = vmatpush1.msra.mxu0 0.0
    %769 = vmatprep.subr.mxu0 0.0
    %770 = vmatpush1.msra.mxu0 0.0
    %771 = vmatprep.subr.mxu0 0.0
    %772 = vmatpush1.msra.mxu0 0.0
    %773 = vmatprep.subr.mxu0 0.0
    %774 = vmatpush1.msra.mxu0 0.0
    %775 = vmatprep.subr.mxu0 0.0
    %776 = vmatpush1.msra.mxu0 0.0
    %777 = vmatprep.subr.mxu0 0.0
    %778 = vmatpush1.msra.mxu0 0.0
    %779 = vmatprep.subr.mxu0 0.0
    %780 = vmatpush1.msra.mxu0 0.0
    %781 = vmatprep.subr.mxu0 0.0
    %782 = vmatpush1.msra.mxu0 0.0
    %783 = vmatprep.subr.mxu0 0.0
    %784 = vmatpush1.msra.mxu0 0.0
    %785 = vmatprep.subr.mxu0 0.0
    %786 = vmatpush1.msra.mxu0 0.0
    %787 = vmatprep.subr.mxu0 0.0
    %788 = vmatpush1.msra.mxu0 0.0
    %789 = vmatprep.subr.mxu0 0.0
    %790 = vmatpush1.msra.mxu0 0.0
    %791 = vmatprep.subr.mxu0 0.0
    %792 = vmatpush1.msra.mxu0 0.0
    %793 = vmatprep.subr.mxu0 0.0
    %794 = vmatpush1.msra.mxu0 0.0
    %795 = vmatprep.subr.mxu0 0.0
    %796 = vmatpush1.msra.mxu0 0.0
    %797 = vmatprep.subr.mxu0 0.0
    %798 = vmatpush1.msra.mxu0 0.0
    %799 = vmatprep.subr.mxu0 0.0
    %800 = vmatpush1.msra.mxu0 0.0
    %801 = vmatprep.subr.mxu0 0.0
    %802 = vmatpush1.msra.mxu0 0.0
    %803 = vmatprep.subr.mxu0 0.0
    %804 = vmatpush1.msra.mxu0 0.0
    %805 = vmatprep.subr.mxu0 0.0
    %806 = vmatpush1.msra.mxu0 0.0
    %807 = vmatprep.subr.mxu0 0.0
    %808 = vmatpush1.msra.mxu0 0.0
    %809 = vmatprep.subr.mxu0 0.0
    %810 = vmatpush1.msra.mxu0 0.0
    %811 = vmatprep.subr.mxu0 0.0
    %812 = vmatpush1.msra.mxu0 0.0
    %813 = vmatprep.subr.mxu0 0.0
    %814 = vmatpush1.msra.mxu0 0.0
    %815 = vmatprep.subr.mxu0 0.0
    %816 = vmatpush1.msra.mxu0 0.0
    %817 = vmatprep.subr.mxu0 0.0
    %818 = vmatpush1.msra.mxu0 0.0
    %819 = vmatprep.mubr.f32.mxu0 0.0
    %820 = vmatmul.mubr.f32.gmra.mrb[0].mxu0 %v753
    %v821 = vpop.f32.mrb[0].mxu0
    %v822 = vadd.f32 0.0, %v821
    %v823 = vpop.f32.mrb[0].mxu0
    %824 = vdwg.mxu0
    %v826 = vrot.slane %v822, 6
    %v828 = vadd.f32 %v249, %v826
    %v829 = vxor.u32 %v748, 2147483648
    %v830 = vmul.f32 %v829, 1.442695
    %v831 = vpow.pop %v830
    %v832 = vadd.f32 %v831, 1.0
    %v833 = vrcp.pop %v832
    %v834 = vmul.f32 1.0, %v833
    %v835 = vtanh.pop %v748
    %v837 = vrot.slane %v635, 6
    %v839 = vmul.f32 %v834, %v837
    %841 = vrot.lane.b32.xlu0 %v835, 64
    %v842 = vpop.permute.xlu0 %841
    %v844 = vmul.f32 %v834, %v842
    %846 = vrot.lane.b32.xlu0 %v844, 32
    %v847 = vpop.permute.xlu0 %846
    %v849 = vadd.f32 %v839, %v847
    %v850 = vtanh.pop %v849
    %852 = vrot.lane.b32.xlu0 %v850, 64
    %v853 = vpop.permute.xlu0 %852
    %v855 = vmul.f32 %v834, %v853
    %v856 = vxor.u32 %v828, 2147483648
    %v857 = vmul.f32 %v856, 1.442695
    %v858 = vpow.pop %v857
    %v859 = vadd.f32 %v858, 1.0
    %v860 = vrcp.pop %v859
    %v861 = vmul.f32 1.0, %v860
    %v862 = vtanh.pop %v828
    %v864 = vrot.slane %v662, 2
    %v866 = vmul.f32 %v861, %v864
    %868 = vrot.lane.b32.xlu0 %v862, 64
    %v869 = vpop.permute.xlu0 %868
    %v871 = vmul.f32 %v861, %v869
    %873 = vrot.lane.b32.xlu0 %v871, 32
    %v874 = vpop.permute.xlu0 %873
    %v876 = vadd.f32 %v866, %v874
    %v877 = vtanh.pop %v876
    %879 = vrot.lane.b32.xlu0 %v877, 64
    %v880 = vpop.permute.xlu0 %879
    %v882 = vmul.f32 %v861, %v880
    %v884 = vrot.slane %v855, 4
    %885 = vrot.lane.b32.xlu0 %v884, 32
    %v886 = vpop.permute.xlu0 %885
    %v887 = vsel %vm259, %v886, 0
    %889 = vmatprep.subr.mxu0 0.0
    %890 = vmatpush1.msra.mxu0 %v251
    %891 = vmatprep.subr.mxu0 0.0
    %892 = vmatpush1.msra.mxu0 %v252
    %893 = vmatprep.subr.mxu0 0.0
    %894 = vmatpush1.msra.mxu0 %v253
    %895 = vmatprep.subr.mxu0 0.0
    %896 = vmatpush1.msra.mxu0 %v254
    %897 = vmatprep.subr.mxu0 0.0
    %898 = vmatpush1.msra.mxu0 0.0
    %899 = vmatprep.subr.mxu0 0.0
    %900 = vmatpush1.msra.mxu0 0.0
    %901 = vmatprep.subr.mxu0 0.0
    %902 = vmatpush1.msra.mxu0 0.0
    %903 = vmatprep.subr.mxu0 0.0
    %904 = vmatpush1.msra.mxu0 0.0
    %905 = vmatprep.subr.mxu0 0.0
    %906 = vmatpush1.msra.mxu0 0.0
    %907 = vmatprep.subr.mxu0 0.0
    %908 = vmatpush1.msra.mxu0 0.0
    %909 = vmatprep.subr.mxu0 0.0
    %910 = vmatpush1.msra.mxu0 0.0
    %911 = vmatprep.subr.mxu0 0.0
    %912 = vmatpush1.msra.mxu0 0.0
    %913 = vmatprep.subr.mxu0 0.0
    %914 = vmatpush1.msra.mxu0 0.0
    %915 = vmatprep.subr.mxu0 0.0
    %916 = vmatpush1.msra.mxu0 0.0
    %917 = vmatprep.subr.mxu0 0.0
    %918 = vmatpush1.msra.mxu0 0.0
    %919 = vmatprep.subr.mxu0 0.0
    %920 = vmatpush1.msra.mxu0 0.0
    %921 = vmatprep.subr.mxu0 0.0
    %922 = vmatpush1.msra.mxu0 0.0
    %923 = vmatprep.subr.mxu0 0.0
    %924 = vmatpush1.msra.mxu0 0.0
    %925 = vmatprep.subr.mxu0 0.0
    %926 = vmatpush1.msra.mxu0 0.0
    %927 = vmatprep.subr.mxu0 0.0
    %928 = vmatpush1.msra.mxu0 0.0
    %929 = vmatprep.subr.mxu0 0.0
    %930 = vmatpush1.msra.mxu0 0.0
    %931 = vmatprep.subr.mxu0 0.0
    %932 = vmatpush1.msra.mxu0 0.0
    %933 = vmatprep.subr.mxu0 0.0
    %934 = vmatpush1.msra.mxu0 0.0
    %935 = vmatprep.subr.mxu0 0.0
    %936 = vmatpush1.msra.mxu0 0.0
    %937 = vmatprep.subr.mxu0 0.0
    %938 = vmatpush1.msra.mxu0 0.0
    %939 = vmatprep.subr.mxu0 0.0
    %940 = vmatpush1.msra.mxu0 0.0
    %941 = vmatprep.subr.mxu0 0.0
    %942 = vmatpush1.msra.mxu0 0.0
    %943 = vmatprep.subr.mxu0 0.0
    %944 = vmatpush1.msra.mxu0 0.0
    %945 = vmatprep.subr.mxu0 0.0
    %946 = vmatpush1.msra.mxu0 0.0
    %947 = vmatprep.subr.mxu0 0.0
    %948 = vmatpush1.msra.mxu0 0.0
    %949 = vmatprep.subr.mxu0 0.0
    %950 = vmatpush1.msra.mxu0 0.0
    %951 = vmatprep.subr.mxu0 0.0
    %952 = vmatpush1.msra.mxu0 0.0
    %953 = vmatprep.mubr.f32.mxu0 0.0
    %954 = vmatmul.mubr.f32.gmra.mrb[0].mxu0 %v887
    %v955 = vpop.f32.mrb[0].mxu0
    %v956 = vadd.f32 0.0, %v955
    %v957 = vpop.f32.mrb[0].mxu0
    %958 = vdwg.mxu0
    %v960 = vrot.slane %v956, 2
    %v962 = vadd.f32 %v241, %v960
    %v964 = vrot.slane %v882, 2
    %965 = vrot.lane.b32.xlu0 %v964, 32
    %v966 = vpop.permute.xlu0 %965
    %v967 = vsel %vm259, %v966, 0
    %969 = vmatprep.subr.mxu0 0.0
    %970 = vmatpush1.msra.mxu0 %v255
    %971 = vmatprep.subr.mxu0 0.0
    %972 = vmatpush1.msra.mxu0 %v256
    %973 = vmatprep.subr.mxu0 0.0
    %974 = vmatpush1.msra.mxu0 %v257
    %975 = vmatprep.subr.mxu0 0.0
    %976 = vmatpush1.msra.mxu0 %v258
    %977 = vmatprep.subr.mxu0 0.0
    %978 = vmatpush1.msra.mxu0 0.0
    %979 = vmatprep.subr.mxu0 0.0
    %980 = vmatpush1.msra.mxu0 0.0
    %981 = vmatprep.subr.mxu0 0.0
    %982 = vmatpush1.msra.mxu0 0.0
    %983 = vmatprep.subr.mxu0 0.0
    %984 = vmatpush1.msra.mxu0 0.0
    %985 = vmatprep.subr.mxu0 0.0
    %986 = vmatpush1.msra.mxu0 0.0
    %987 = vmatprep.subr.mxu0 0.0
    %988 = vmatpush1.msra.mxu0 0.0
    %989 = vmatprep.subr.mxu0 0.0
    %990 = vmatpush1.msra.mxu0 0.0
    %991 = vmatprep.subr.mxu0 0.0
    %992 = vmatpush1.msra.mxu0 0.0
    %993 = vmatprep.subr.mxu0 0.0
    %994 = vmatpush1.msra.mxu0 0.0
    %995 = vmatprep.subr.mxu0 0.0
    %996 = vmatpush1.msra.mxu0 0.0
    %997 = vmatprep.subr.mxu0 0.0
    %998 = vmatpush1.msra.mxu0 0.0
    %999 = vmatprep.subr.mxu0 0.0
    %1000 = vmatpush1.msra.mxu0 0.0
    %1001 = vmatprep.subr.mxu0 0.0
    %1002 = vmatpush1.msra.mxu0 0.0
    %1003 = vmatprep.subr.mxu0 0.0
    %1004 = vmatpush1.msra.mxu0 0.0
    %1005 = vmatprep.subr.mxu0 0.0
    %1006 = vmatpush1.msra.mxu0 0.0
    %1007 = vmatprep.subr.mxu0 0.0
    %1008 = vmatpush1.msra.mxu0 0.0
    %1009 = vmatprep.subr.mxu0 0.0
    %1010 = vmatpush1.msra.mxu0 0.0
    %1011 = vmatprep.subr.mxu0 0.0
    %1012 = vmatpush1.msra.mxu0 0.0
    %1013 = vmatprep.subr.mxu0 0.0
    %1014 = vmatpush1.msra.mxu0 0.0
    %1015 = vmatprep.subr.mxu0 0.0
    %1016 = vmatpush1.msra.mxu0 0.0
    %1017 = vmatprep.subr.mxu0 0.0
    %1018 = vmatpush1.msra.mxu0 0.0
    %1019 = vmatprep.subr.mxu0 0.0
    %1020 = vmatpush1.msra.mxu0 0.0
    %1021 = vmatprep.subr.mxu0 0.0
    %1022 = vmatpush1.msra.mxu0 0.0
    %1023 = vmatprep.subr.mxu0 0.0
    %1024 = vmatpush1.msra.mxu0 0.0
    %1025 = vmatprep.subr.mxu0 0.0
    %1026 = vmatpush1.msra.mxu0 0.0
    %1027 = vmatprep.subr.mxu0 0.0
    %1028 = vmatpush1.msra.mxu0 0.0
    %1029 = vmatprep.subr.mxu0 0.0
    %1030 = vmatpush1.msra.mxu0 0.0
    %1031 = vmatprep.subr.mxu0 0.0
    %1032 = vmatpush1.msra.mxu0 0.0
    %1033 = vmatprep.mubr.f32.mxu0 0.0
    %1034 = vmatmul.mubr.f32.gmra.mrb[0].mxu0 %v967
    %v1035 = vpop.f32.mrb[0].mxu0
    %v1036 = vadd.f32 0.0, %v1035
    %v1037 = vpop.f32.mrb[0].mxu0
    %1038 = vdwg.mxu0
    %v1039 = vadd.f32 %v249, %v1036
    %v1040 = vxor.u32 %v962, 2147483648
    %v1041 = vmul.f32 %v1040, 1.442695
    %v1042 = vpow.pop %v1041
    %v1043 = vadd.f32 %v1042, 1.0
    %v1044 = vrcp.pop %v1043
    %v1045 = vmul.f32 1.0, %v1044
    %v1046 = vtanh.pop %v962
    %v1048 = vrot.slane %v849, 6
    %v1050 = vmul.f32 %v1045, %v1048
    %1052 = vrot.lane.b32.xlu0 %v1046, 64
    %v1053 = vpop.permute.xlu0 %1052
    %v1055 = vmul.f32 %v1045, %v1053
    %1057 = vrot.lane.b32.xlu0 %v1055, 32
    %v1058 = vpop.permute.xlu0 %1057
    %v1060 = vadd.f32 %v1050, %v1058
    %v1061 = vtanh.pop %v1060
    %1063 = vrot.lane.b32.xlu0 %v1061, 64
    %v1064 = vpop.permute.xlu0 %1063
    %v1066 = vmul.f32 %v1045, %v1064
    %v1067 = vxor.u32 %v1039, 2147483648
    %v1068 = vmul.f32 %v1067, 1.442695
    %v1069 = vpow.pop %v1068
    %v1070 = vadd.f32 %v1069, 1.0
    %v1071 = vrcp.pop %v1070
    %v1072 = vmul.f32 1.0, %v1071
    %v1073 = vtanh.pop %v1039
    %v1075 = vrot.slane %v876, 2
    %v1077 = vmul.f32 %v1072, %v1075
    %1079 = vrot.lane.b32.xlu0 %v1073, 64
    %v1080 = vpop.permute.xlu0 %1079
    %v1082 = vmul.f32 %v1072, %v1080
    %1084 = vrot.lane.b32.xlu0 %v1082, 32
    %v1085 = vpop.permute.xlu0 %1084
    %v1087 = vadd.f32 %v1077, %v1085
    %v1088 = vtanh.pop %v1087
    %1090 = vrot.lane.b32.xlu0 %v1088, 64
    %v1091 = vpop.permute.xlu0 %1090
    %v1093 = vmul.f32 %v1072, %v1091
    %v1095 = vrot.slane %v1066, 6
    %1096 = vrot.lane.b32.xlu0 %v1095, 32
    %v1097 = vpop.permute.xlu0 %1096
    %v1098 = vsel %vm259, %v1097, 0
    %1100 = vmatprep.subr.mxu0 0.0
    %1101 = vmatpush1.msra.mxu0 %v251
    %1102 = vmatprep.subr.mxu0 0.0
    %1103 = vmatpush1.msra.mxu0 %v252
    %1104 = vmatprep.subr.mxu0 0.0
    %1105 = vmatpush1.msra.mxu0 %v253
    %1106 = vmatprep.subr.mxu0 0.0
    %1107 = vmatpush1.msra.mxu0 %v254
    %1108 = vmatprep.subr.mxu0 0.0
    %1109 = vmatpush1.msra.mxu0 0.0
    %1110 = vmatprep.subr.mxu0 0.0
    %1111 = vmatpush1.msra.mxu0 0.0
    %1112 = vmatprep.subr.mxu0 0.0
    %1113 = vmatpush1.msra.mxu0 0.0
    %1114 = vmatprep.subr.mxu0 0.0
    %1115 = vmatpush1.msra.mxu0 0.0
    %1116 = vmatprep.subr.mxu0 0.0
    %1117 = vmatpush1.msra.mxu0 0.0
    %1118 = vmatprep.subr.mxu0 0.0
    %1119 = vmatpush1.msra.mxu0 0.0
    %1120 = vmatprep.subr.mxu0 0.0
    %1121 = vmatpush1.msra.mxu0 0.0
    %1122 = vmatprep.subr.mxu0 0.0
    %1123 = vmatpush1.msra.mxu0 0.0
    %1124 = vmatprep.subr.mxu0 0.0
    %1125 = vmatpush1.msra.mxu0 0.0
    %1126 = vmatprep.subr.mxu0 0.0
    %1127 = vmatpush1.msra.mxu0 0.0
    %1128 = vmatprep.subr.mxu0 0.0
    %1129 = vmatpush1.msra.mxu0 0.0
    %1130 = vmatprep.subr.mxu0 0.0
    %1131 = vmatpush1.msra.mxu0 0.0
    %1132 = vmatprep.subr.mxu0 0.0
    %1133 = vmatpush1.msra.mxu0 0.0
    %1134 = vmatprep.subr.mxu0 0.0
    %1135 = vmatpush1.msra.mxu0 0.0
    %1136 = vmatprep.subr.mxu0 0.0
    %1137 = vmatpush1.msra.mxu0 0.0
    %1138 = vmatprep.subr.mxu0 0.0
    %1139 = vmatpush1.msra.mxu0 0.0
    %1140 = vmatprep.subr.mxu0 0.0
    %1141 = vmatpush1.msra.mxu0 0.0
    %1142 = vmatprep.subr.mxu0 0.0
    %1143 = vmatpush1.msra.mxu0 0.0
    %1144 = vmatprep.subr.mxu0 0.0
    %1145 = vmatpush1.msra.mxu0 0.0
    %1146 = vmatprep.subr.mxu0 0.0
    %1147 = vmatpush1.msra.mxu0 0.0
    %1148 = vmatprep.subr.mxu0 0.0
    %1149 = vmatpush1.msra.mxu0 0.0
    %1150 = vmatprep.subr.mxu0 0.0
    %1151 = vmatpush1.msra.mxu0 0.0
    %1152 = vmatprep.subr.mxu0 0.0
    %1153 = vmatpush1.msra.mxu0 0.0
    %1154 = vmatprep.subr.mxu0 0.0
    %1155 = vmatpush1.msra.mxu0 0.0
    %1156 = vmatprep.subr.mxu0 0.0
    %1157 = vmatpush1.msra.mxu0 0.0
    %1158 = vmatprep.subr.mxu0 0.0
    %1159 = vmatpush1.msra.mxu0 0.0
    %1160 = vmatprep.subr.mxu0 0.0
    %1161 = vmatpush1.msra.mxu0 0.0
    %1162 = vmatprep.subr.mxu0 0.0
    %1163 = vmatpush1.msra.mxu0 0.0
    %1164 = vmatprep.mubr.f32.mxu0 0.0
    %1165 = vmatmul.mubr.f32.gmra.mrb[0].mxu0 %v1098
    %v1166 = vpop.f32.mrb[0].mxu0
    %v1167 = vadd.f32 0.0, %v1166
    %v1168 = vpop.f32.mrb[0].mxu0
    %1169 = vdwg.mxu0
    %v1170 = vadd.f32 %v247, %v1167
    %1172 = vrot.lane.b32.xlu0 %v1093, 32
    %v1173 = vpop.permute.xlu0 %1172
    %v1174 = vsel %vm259, %v1173, 0
    %1176 = vmatprep.subr.mxu0 0.0
    %1177 = vmatpush1.msra.mxu0 %v255
    %1178 = vmatprep.subr.mxu0 0.0
    %1179 = vmatpush1.msra.mxu0 %v256
    %1180 = vmatprep.subr.mxu0 0.0
    %1181 = vmatpush1.msra.mxu0 %v257
    %1182 = vmatprep.subr.mxu0 0.0
    %1183 = vmatpush1.msra.mxu0 %v258
    %1184 = vmatprep.subr.mxu0 0.0
    %1185 = vmatpush1.msra.mxu0 0.0
    %1186 = vmatprep.subr.mxu0 0.0
    %1187 = vmatpush1.msra.mxu0 0.0
    %1188 = vmatprep.subr.mxu0 0.0
    %1189 = vmatpush1.msra.mxu0 0.0
    %1190 = vmatprep.subr.mxu0 0.0
    %1191 = vmatpush1.msra.mxu0 0.0
    %1192 = vmatprep.subr.mxu0 0.0
    %1193 = vmatpush1.msra.mxu0 0.0
    %1194 = vmatprep.subr.mxu0 0.0
    %1195 = vmatpush1.msra.mxu0 0.0
    %1196 = vmatprep.subr.mxu0 0.0
    %1197 = vmatpush1.msra.mxu0 0.0
    %1198 = vmatprep.subr.mxu0 0.0
    %1199 = vmatpush1.msra.mxu0 0.0
    %1200 = vmatprep.subr.mxu0 0.0
    %1201 = vmatpush1.msra.mxu0 0.0
    %1202 = vmatprep.subr.mxu0 0.0
    %1203 = vmatpush1.msra.mxu0 0.0
    %1204 = vmatprep.subr.mxu0 0.0
    %1205 = vmatpush1.msra.mxu0 0.0
    %1206 = vmatprep.subr.mxu0 0.0
    %1207 = vmatpush1.msra.mxu0 0.0
    %1208 = vmatprep.subr.mxu0 0.0
    %1209 = vmatpush1.msra.mxu0 0.0
    %1210 = vmatprep.subr.mxu0 0.0
    %1211 = vmatpush1.msra.mxu0 0.0
    %1212 = vmatprep.subr.mxu0 0.0
    %1213 = vmatpush1.msra.mxu0 0.0
    %1214 = vmatprep.subr.mxu0 0.0
    %1215 = vmatpush1.msra.mxu0 0.0
    %1216 = vmatprep.subr.mxu0 0.0
    %1217 = vmatpush1.msra.mxu0 0.0
    %1218 = vmatprep.subr.mxu0 0.0
    %1219 = vmatpush1.msra.mxu0 0.0
    %1220 = vmatprep.subr.mxu0 0.0
    %1221 = vmatpush1.msra.mxu0 0.0
    %1222 = vmatprep.subr.mxu0 0.0
    %1223 = vmatpush1.msra.mxu0 0.0
    %1224 = vmatprep.subr.mxu0 0.0
    %1225 = vmatpush1.msra.mxu0 0.0
    %1226 = vmatprep.subr.mxu0 0.0
    %1227 = vmatpush1.msra.mxu0 0.0
    %1228 = vmatprep.subr.mxu0 0.0
    %1229 = vmatpush1.msra.mxu0 0.0
    %1230 = vmatprep.subr.mxu0 0.0
    %1231 = vmatpush1.msra.mxu0 0.0
    %1232 = vmatprep.subr.mxu0 0.0
    %1233 = vmatpush1.msra.mxu0 0.0
    %1234 = vmatprep.subr.mxu0 0.0
    %1235 = vmatpush1.msra.mxu0 0.0
    %1236 = vmatprep.subr.mxu0 0.0
    %1237 = vmatpush1.msra.mxu0 0.0
    %1238 = vmatprep.subr.mxu0 0.0
    %1239 = vmatpush1.msra.mxu0 0.0
    %1240 = vmatprep.mubr.f32.mxu0 0.0
    %1241 = vmatmul.mubr.f32.gmra.mrb[0].mxu0 %v1174
    %v1242 = vpop.f32.mrb[0].mxu0
    %v1243 = vadd.f32 0.0, %v1242
    %v1244 = vpop.f32.mrb[0].mxu0
    %1245 = vdwg.mxu0
    %v1247 = vrot.slane %v1243, 2
    %v1249 = vadd.f32 %v243, %v1247
    %v1250 = vxor.u32 %v1170, 2147483648
    %v1251 = vmul.f32 %v1250, 1.442695
    %v1252 = vpow.pop %v1251
    %v1253 = vadd.f32 %v1252, 1.0
    %v1254 = vrcp.pop %v1253
    %v1255 = vmul.f32 1.0, %v1254
    %v1256 = vtanh.pop %v1170
    %v1258 = vrot.slane %v1060, 6
    %v1260 = vmul.f32 %v1255, %v1258
    %1262 = vrot.lane.b32.xlu0 %v1256, 64
    %v1263 = vpop.permute.xlu0 %1262
    %v1265 = vmul.f32 %v1255, %v1263
    %1267 = vrot.lane.b32.xlu0 %v1265, 32
    %v1268 = vpop.permute.xlu0 %1267
    %v1270 = vadd.f32 %v1260, %v1268
    %v1271 = vtanh.pop %v1270
    %1273 = vrot.lane.b32.xlu0 %v1271, 64
    %v1274 = vpop.permute.xlu0 %1273
    %v1276 = vmul.f32 %v1255, %v1274
    %v1277 = vxor.u32 %v1249, 2147483648
    %v1278 = vmul.f32 %v1277, 1.442695
    %v1279 = vpow.pop %v1278
    %v1280 = vadd.f32 %v1279, 1.0
    %v1281 = vrcp.pop %v1280
    %v1282 = vmul.f32 1.0, %v1281
    %v1283 = vtanh.pop %v1249
    %v1285 = vrot.slane %v1087, 2
    %v1287 = vmul.f32 %v1282, %v1285
    %1289 = vrot.lane.b32.xlu0 %v1283, 64
    %v1290 = vpop.permute.xlu0 %1289
    %v1292 = vmul.f32 %v1282, %v1290
    %1294 = vrot.lane.b32.xlu0 %v1292, 32
    %v1295 = vpop.permute.xlu0 %1294
    %v1297 = vadd.f32 %v1287, %v1295
    %v1298 = vtanh.pop %v1297
    %1300 = vrot.lane.b32.xlu0 %v1298, 64
    %v1301 = vpop.permute.xlu0 %1300
    %v1303 = vmul.f32 %v1282, %v1301
    %1305 = vrot.lane.b32.xlu0 %v1276, 32
    %v1306 = vpop.permute.xlu0 %1305
    %v1307 = vsel %vm259, %v1306, 0
    %1309 = vmatprep.subr.mxu0 0.0
    %1310 = vmatpush1.msra.mxu0 %v251
    %1311 = vmatprep.subr.mxu0 0.0
    %1312 = vmatpush1.msra.mxu0 %v252
    %1313 = vmatprep.subr.mxu0 0.0
    %1314 = vmatpush1.msra.mxu0 %v253
    %1315 = vmatprep.subr.mxu0 0.0
    %1316 = vmatpush1.msra.mxu0 %v254
    %1317 = vmatprep.subr.mxu0 0.0
    %1318 = vmatpush1.msra.mxu0 0.0
    %1319 = vmatprep.subr.mxu0 0.0
    %1320 = vmatpush1.msra.mxu0 0.0
    %1321 = vmatprep.subr.mxu0 0.0
    %1322 = vmatpush1.msra.mxu0 0.0
    %1323 = vmatprep.subr.mxu0 0.0
    %1324 = vmatpush1.msra.mxu0 0.0
    %1325 = vmatprep.subr.mxu0 0.0
    %1326 = vmatpush1.msra.mxu0 0.0
    %1327 = vmatprep.subr.mxu0 0.0
    %1328 = vmatpush1.msra.mxu0 0.0
    %1329 = vmatprep.subr.mxu0 0.0
    %1330 = vmatpush1.msra.mxu0 0.0
    %1331 = vmatprep.subr.mxu0 0.0
    %1332 = vmatpush1.msra.mxu0 0.0
    %1333 = vmatprep.subr.mxu0 0.0
    %1334 = vmatpush1.msra.mxu0 0.0
    %1335 = vmatprep.subr.mxu0 0.0
    %1336 = vmatpush1.msra.mxu0 0.0
    %1337 = vmatprep.subr.mxu0 0.0
    %1338 = vmatpush1.msra.mxu0 0.0
    %1339 = vmatprep.subr.mxu0 0.0
    %1340 = vmatpush1.msra.mxu0 0.0
    %1341 = vmatprep.subr.mxu0 0.0
    %1342 = vmatpush1.msra.mxu0 0.0
    %1343 = vmatprep.subr.mxu0 0.0
    %1344 = vmatpush1.msra.mxu0 0.0
    %1345 = vmatprep.subr.mxu0 0.0
    %1346 = vmatpush1.msra.mxu0 0.0
    %1347 = vmatprep.subr.mxu0 0.0
    %1348 = vmatpush1.msra.mxu0 0.0
    %1349 = vmatprep.subr.mxu0 0.0
    %1350 = vmatpush1.msra.mxu0 0.0
    %1351 = vmatprep.subr.mxu0 0.0
    %1352 = vmatpush1.msra.mxu0 0.0
    %1353 = vmatprep.subr.mxu0 0.0
    %1354 = vmatpush1.msra.mxu0 0.0
    %1355 = vmatprep.subr.mxu0 0.0
    %1356 = vmatpush1.msra.mxu0 0.0
    %1357 = vmatprep.subr.mxu0 0.0
    %1358 = vmatpush1.msra.mxu0 0.0
    %1359 = vmatprep.subr.mxu0 0.0
    %1360 = vmatpush1.msra.mxu0 0.0
    %1361 = vmatprep.subr.mxu0 0.0
    %1362 = vmatpush1.msra.mxu0 0.0
    %1363 = vmatprep.subr.mxu0 0.0
    %1364 = vmatpush1.msra.mxu0 0.0
    %1365 = vmatprep.subr.mxu0 0.0
    %1366 = vmatpush1.msra.mxu0 0.0
    %1367 = vmatprep.subr.mxu0 0.0
    %1368 = vmatpush1.msra.mxu0 0.0
    %1369 = vmatprep.subr.mxu0 0.0
    %1370 = vmatpush1.msra.mxu0 0.0
    %1371 = vmatprep.subr.mxu0 0.0
    %1372 = vmatpush1.msra.mxu0 0.0
    %1373 = vmatprep.mubr.f32.mxu0 0.0
    %1374 = vmatmul.mubr.f32.gmra.mrb[0].mxu0 %v1307
    %v1375 = vpop.f32.mrb[0].mxu0
    %v1376 = vadd.f32 0.0, %v1375
    %v1377 = vpop.f32.mrb[0].mxu0
    %1378 = vdwg.mxu0
    %v1380 = vrot.slane %v1376, 6
    %v1382 = vadd.f32 %v247, %v1380
    %v1384 = vrot.slane %v1303, 6
    %1385 = vrot.lane.b32.xlu0 %v1384, 32
    %v1386 = vpop.permute.xlu0 %1385
    %v1387 = vsel %vm259, %v1386, 0
    %1389 = vmatprep.subr.mxu0 0.0
    %1390 = vmatpush1.msra.mxu0 %v255
    %1391 = vmatprep.subr.mxu0 0.0
    %1392 = vmatpush1.msra.mxu0 %v256
    %1393 = vmatprep.subr.mxu0 0.0
    %1394 = vmatpush1.msra.mxu0 %v257
    %1395 = vmatprep.subr.mxu0 0.0
    %1396 = vmatpush1.msra.mxu0 %v258
    %1397 = vmatprep.subr.mxu0 0.0
    %1398 = vmatpush1.msra.mxu0 0.0
    %1399 = vmatprep.subr.mxu0 0.0
    %1400 = vmatpush1.msra.mxu0 0.0
    %1401 = vmatprep.subr.mxu0 0.0
    %1402 = vmatpush1.msra.mxu0 0.0
    %1403 = vmatprep.subr.mxu0 0.0
    %1404 = vmatpush1.msra.mxu0 0.0
    %1405 = vmatprep.subr.mxu0 0.0
    %1406 = vmatpush1.msra.mxu0 0.0
    %1407 = vmatprep.subr.mxu0 0.0
    %1408 = vmatpush1.msra.mxu0 0.0
    %1409 = vmatprep.subr.mxu0 0.0
    %1410 = vmatpush1.msra.mxu0 0.0
    %1411 = vmatprep.subr.mxu0 0.0
    %1412 = vmatpush1.msra.mxu0 0.0
    %1413 = vmatprep.subr.mxu0 0.0
    %1414 = vmatpush1.msra.mxu0 0.0
    %1415 = vmatprep.subr.mxu0 0.0
    %1416 = vmatpush1.msra.mxu0 0.0
    %1417 = vmatprep.subr.mxu0 0.0
    %1418 = vmatpush1.msra.mxu0 0.0
    %1419 = vmatprep.subr.mxu0 0.0
    %1420 = vmatpush1.msra.mxu0 0.0
    %1421 = vmatprep.subr.mxu0 0.0
    %1422 = vmatpush1.msra.mxu0 0.0
    %1423 = vmatprep.subr.mxu0 0.0
    %1424 = vmatpush1.msra.mxu0 0.0
    %1425 = vmatprep.subr.mxu0 0.0
    %1426 = vmatpush1.msra.mxu0 0.0
    %1427 = vmatprep.subr.mxu0 0.0
    %1428 = vmatpush1.msra.mxu0 0.0
    %1429 = vmatprep.subr.mxu0 0.0
    %1430 = vmatpush1.msra.mxu0 0.0
    %1431 = vmatprep.subr.mxu0 0.0
    %1432 = vmatpush1.msra.mxu0 0.0
    %1433 = vmatprep.subr.mxu0 0.0
    %1434 = vmatpush1.msra.mxu0 0.0
    %1435 = vmatprep.subr.mxu0 0.0
    %1436 = vmatpush1.msra.mxu0 0.0
    %1437 = vmatprep.subr.mxu0 0.0
    %1438 = vmatpush1.msra.mxu0 0.0
    %1439 = vmatprep.subr.mxu0 0.0
    %1440 = vmatpush1.msra.mxu0 0.0
    %1441 = vmatprep.subr.mxu0 0.0
    %1442 = vmatpush1.msra.mxu0 0.0
    %1443 = vmatprep.subr.mxu0 0.0
    %1444 = vmatpush1.msra.mxu0 0.0
    %1445 = vmatprep.subr.mxu0 0.0
    %1446 = vmatpush1.msra.mxu0 0.0
    %1447 = vmatprep.subr.mxu0 0.0
    %1448 = vmatpush1.msra.mxu0 0.0
    %1449 = vmatprep.subr.mxu0 0.0
    %1450 = vmatpush1.msra.mxu0 0.0
    %1451 = vmatprep.subr.mxu0 0.0
    %1452 = vmatpush1.msra.mxu0 0.0
    %1453 = vmatprep.mubr.f32.mxu0 0.0
    %1454 = vmatmul.mubr.f32.gmra.mrb[0].mxu0 %v1387
    %v1455 = vpop.f32.mrb[0].mxu0
    %v1456 = vadd.f32 0.0, %v1455
    %v1457 = vpop.f32.mrb[0].mxu0
    %1458 = vdwg.mxu0
    %v1460 = vrot.slane %v1456, 4
    %v1462 = vadd.f32 %v243, %v1460
    %v1463 = vxor.u32 %v1382, 2147483648
    %v1464 = vmul.f32 %v1463, 1.442695
    %v1465 = vpow.pop %v1464
    %v1466 = vadd.f32 %v1465, 1.0
    %v1467 = vrcp.pop %v1466
    %v1468 = vmul.f32 1.0, %v1467
    %v1469 = vtanh.pop %v1382
    %v1471 = vrot.slane %v1270, 6
    %v1473 = vmul.f32 %v1468, %v1471
    %1475 = vrot.lane.b32.xlu0 %v1469, 64
    %v1476 = vpop.permute.xlu0 %1475
    %v1478 = vmul.f32 %v1468, %v1476
    %1480 = vrot.lane.b32.xlu0 %v1478, 32
    %v1481 = vpop.permute.xlu0 %1480
    %v1483 = vadd.f32 %v1473, %v1481
    %v1484 = vtanh.pop %v1483
    %1486 = vrot.lane.b32.xlu0 %v1484, 64
    %v1487 = vpop.permute.xlu0 %1486
    %v1489 = vmul.f32 %v1468, %v1487
    %v1490 = vxor.u32 %v1462, 2147483648
    %v1491 = vmul.f32 %v1490, 1.442695
    %v1492 = vpow.pop %v1491
    %v1493 = vadd.f32 %v1492, 1.0
    %v1494 = vrcp.pop %v1493
    %v1495 = vmul.f32 1.0, %v1494
    %v1496 = vtanh.pop %v1462
    %v1498 = vrot.slane %v1297, 2
    %v1500 = vmul.f32 %v1495, %v1498
    %1502 = vrot.lane.b32.xlu0 %v1496, 64
    %v1503 = vpop.permute.xlu0 %1502
    %v1505 = vmul.f32 %v1495, %v1503
    %1507 = vrot.lane.b32.xlu0 %v1505, 32
    %v1508 = vpop.permute.xlu0 %1507
    %v1510 = vadd.f32 %v1500, %v1508
    %v1511 = vtanh.pop %v1510
    %1513 = vrot.lane.b32.xlu0 %v1511, 64
    %v1514 = vpop.permute.xlu0 %1513
    %v1516 = vmul.f32 %v1495, %v1514
    %v1518 = vrot.slane %v1489, 2
    %1519 = vrot.lane.b32.xlu0 %v1518, 32
    %v1520 = vpop.permute.xlu0 %1519
    %v1521 = vsel %vm259, %v1520, 0
    %1523 = vmatprep.subr.mxu0 0.0
    %1524 = vmatpush1.msra.mxu0 %v251
    %1525 = vmatprep.subr.mxu0 0.0
    %1526 = vmatpush1.msra.mxu0 %v252
    %1527 = vmatprep.subr.mxu0 0.0
    %1528 = vmatpush1.msra.mxu0 %v253
    %1529 = vmatprep.subr.mxu0 0.0
    %1530 = vmatpush1.msra.mxu0 %v254
    %1531 = vmatprep.subr.mxu0 0.0
    %1532 = vmatpush1.msra.mxu0 0.0
    %1533 = vmatprep.subr.mxu0 0.0
    %1534 = vmatpush1.msra.mxu0 0.0
    %1535 = vmatprep.subr.mxu0 0.0
    %1536 = vmatpush1.msra.mxu0 0.0
    %1537 = vmatprep.subr.mxu0 0.0
    %1538 = vmatpush1.msra.mxu0 0.0
    %1539 = vmatprep.subr.mxu0 0.0
    %1540 = vmatpush1.msra.mxu0 0.0
    %1541 = vmatprep.subr.mxu0 0.0
    %1542 = vmatpush1.msra.mxu0 0.0
    %1543 = vmatprep.subr.mxu0 0.0
    %1544 = vmatpush1.msra.mxu0 0.0
    %1545 = vmatprep.subr.mxu0 0.0
    %1546 = vmatpush1.msra.mxu0 0.0
    %1547 = vmatprep.subr.mxu0 0.0
    %1548 = vmatpush1.msra.mxu0 0.0
    %1549 = vmatprep.subr.mxu0 0.0
    %1550 = vmatpush1.msra.mxu0 0.0
    %1551 = vmatprep.subr.mxu0 0.0
    %1552 = vmatpush1.msra.mxu0 0.0
    %1553 = vmatprep.subr.mxu0 0.0
    %1554 = vmatpush1.msra.mxu0 0.0
    %1555 = vmatprep.subr.mxu0 0.0
    %1556 = vmatpush1.msra.mxu0 0.0
    %1557 = vmatprep.subr.mxu0 0.0
    %1558 = vmatpush1.msra.mxu0 0.0
    %1559 = vmatprep.subr.mxu0 0.0
    %1560 = vmatpush1.msra.mxu0 0.0
    %1561 = vmatprep.subr.mxu0 0.0
    %1562 = vmatpush1.msra.mxu0 0.0
    %1563 = vmatprep.subr.mxu0 0.0
    %1564 = vmatpush1.msra.mxu0 0.0
    %1565 = vmatprep.subr.mxu0 0.0
    %1566 = vmatpush1.msra.mxu0 0.0
    %1567 = vmatprep.subr.mxu0 0.0
    %1568 = vmatpush1.msra.mxu0 0.0
    %1569 = vmatprep.subr.mxu0 0.0
    %1570 = vmatpush1.msra.mxu0 0.0
    %1571 = vmatprep.subr.mxu0 0.0
    %1572 = vmatpush1.msra.mxu0 0.0
    %1573 = vmatprep.subr.mxu0 0.0
    %1574 = vmatpush1.msra.mxu0 0.0
    %1575 = vmatprep.subr.mxu0 0.0
    %1576 = vmatpush1.msra.mxu0 0.0
    %1577 = vmatprep.subr.mxu0 0.0
    %1578 = vmatpush1.msra.mxu0 0.0
    %1579 = vmatprep.subr.mxu0 0.0
    %1580 = vmatpush1.msra.mxu0 0.0
    %1581 = vmatprep.subr.mxu0 0.0
    %1582 = vmatpush1.msra.mxu0 0.0
    %1583 = vmatprep.subr.mxu0 0.0
    %1584 = vmatpush1.msra.mxu0 0.0
    %1585 = vmatprep.subr.mxu0 0.0
    %1586 = vmatpush1.msra.mxu0 0.0
    %1587 = vmatprep.mubr.f32.mxu0 0.0
    %1588 = vmatmul.mubr.f32.gmra.mrb[0].mxu0 %v1521
    %v1589 = vpop.f32.mrb[0].mxu0
    %v1590 = vadd.f32 0.0, %v1589
    %v1591 = vpop.f32.mrb[0].mxu0
    %1592 = vdwg.mxu0
    %v1594 = vrot.slane %v1590, 4
    %v1596 = vadd.f32 %v247, %v1594
    %v1598 = vrot.slane %v1516, 4
    %1599 = vrot.lane.b32.xlu0 %v1598, 32
    %v1600 = vpop.permute.xlu0 %1599
    %v1601 = vsel %vm259, %v1600, 0
    %1603 = vmatprep.subr.mxu0 0.0
    %1604 = vmatpush1.msra.mxu0 %v255
    %1605 = vmatprep.subr.mxu0 0.0
    %1606 = vmatpush1.msra.mxu0 %v256
    %1607 = vmatprep.subr.mxu0 0.0
    %1608 = vmatpush1.msra.mxu0 %v257
    %1609 = vmatprep.subr.mxu0 0.0
    %1610 = vmatpush1.msra.mxu0 %v258
    %1611 = vmatprep.subr.mxu0 0.0
    %1612 = vmatpush1.msra.mxu0 0.0
    %1613 = vmatprep.subr.mxu0 0.0
    %1614 = vmatpush1.msra.mxu0 0.0
    %1615 = vmatprep.subr.mxu0 0.0
    %1616 = vmatpush1.msra.mxu0 0.0
    %1617 = vmatprep.subr.mxu0 0.0
    %1618 = vmatpush1.msra.mxu0 0.0
    %1619 = vmatprep.subr.mxu0 0.0
    %1620 = vmatpush1.msra.mxu0 0.0
    %1621 = vmatprep.subr.mxu0 0.0
    %1622 = vmatpush1.msra.mxu0 0.0
    %1623 = vmatprep.subr.mxu0 0.0
    %1624 = vmatpush1.msra.mxu0 0.0
    %1625 = vmatprep.subr.mxu0 0.0
    %1626 = vmatpush1.msra.mxu0 0.0
    %1627 = vmatprep.subr.mxu0 0.0
    %1628 = vmatpush1.msra.mxu0 0.0
    %1629 = vmatprep.subr.mxu0 0.0
    %1630 = vmatpush1.msra.mxu0 0.0
    %1631 = vmatprep.subr.mxu0 0.0
    %1632 = vmatpush1.msra.mxu0 0.0
    %1633 = vmatprep.subr.mxu0 0.0
    %1634 = vmatpush1.msra.mxu0 0.0
    %1635 = vmatprep.subr.mxu0 0.0
    %1636 = vmatpush1.msra.mxu0 0.0
    %1637 = vmatprep.subr.mxu0 0.0
    %1638 = vmatpush1.msra.mxu0 0.0
    %1639 = vmatprep.subr.mxu0 0.0
    %1640 = vmatpush1.msra.mxu0 0.0
    %1641 = vmatprep.subr.mxu0 0.0
    %1642 = vmatpush1.msra.mxu0 0.0
    %1643 = vmatprep.subr.mxu0 0.0
    %1644 = vmatpush1.msra.mxu0 0.0
    %1645 = vmatprep.subr.mxu0 0.0
    %1646 = vmatpush1.msra.mxu0 0.0
    %1647 = vmatprep.subr.mxu0 0.0
    %1648 = vmatpush1.msra.mxu0 0.0
    %1649 = vmatprep.subr.mxu0 0.0
    %1650 = vmatpush1.msra.mxu0 0.0
    %1651 = vmatprep.subr.mxu0 0.0
    %1652 = vmatpush1.msra.mxu0 0.0
    %1653 = vmatprep.subr.mxu0 0.0
    %1654 = vmatpush1.msra.mxu0 0.0
    %1655 = vmatprep.subr.mxu0 0.0
    %1656 = vmatpush1.msra.mxu0 0.0
    %1657 = vmatprep.subr.mxu0 0.0
    %1658 = vmatpush1.msra.mxu0 0.0
    %1659 = vmatprep.subr.mxu0 0.0
    %1660 = vmatpush1.msra.mxu0 0.0
    %1661 = vmatprep.subr.mxu0 0.0
    %1662 = vmatpush1.msra.mxu0 0.0
    %1663 = vmatprep.subr.mxu0 0.0
    %1664 = vmatpush1.msra.mxu0 0.0
    %1665 = vmatprep.subr.mxu0 0.0
    %1666 = vmatpush1.msra.mxu0 0.0
    %1667 = vmatprep.mubr.f32.mxu0 0.0
    %1668 = vmatmul.mubr.f32.gmra.mrb[0].mxu0 %v1601
    %v1669 = vpop.f32.mrb[0].mxu0
    %v1670 = vadd.f32 0.0, %v1669
    %v1671 = vpop.f32.mrb[0].mxu0
    %1672 = vdwg.mxu0
    %v1674 = vrot.slane %v1670, 6
    %v1676 = vadd.f32 %v243, %v1674
    %v1677 = vxor.u32 %v1596, 2147483648
    %v1678 = vmul.f32 %v1677, 1.442695
    %v1679 = vpow.pop %v1678
    %v1680 = vadd.f32 %v1679, 1.0
    %v1681 = vrcp.pop %v1680
    %v1682 = vmul.f32 1.0, %v1681
    %v1683 = vtanh.pop %v1596
    %v1685 = vrot.slane %v1483, 6
    %v1687 = vmul.f32 %v1682, %v1685
    %1689 = vrot.lane.b32.xlu0 %v1683, 64
    %v1690 = vpop.permute.xlu0 %1689
    %v1692 = vmul.f32 %v1682, %v1690
    %1694 = vrot.lane.b32.xlu0 %v1692, 32
    %v1695 = vpop.permute.xlu0 %1694
    %v1697 = vadd.f32 %v1687, %v1695
    %v1698 = vtanh.pop %v1697
    %1700 = vrot.lane.b32.xlu0 %v1698, 64
    %v1701 = vpop.permute.xlu0 %1700
    %v1703 = vmul.f32 %v1682, %v1701
    %v1704 = vxor.u32 %v1676, 2147483648
    %v1705 = vmul.f32 %v1704, 1.442695
    %v1706 = vpow.pop %v1705
    %v1707 = vadd.f32 %v1706, 1.0
    %v1708 = vrcp.pop %v1707
    %v1709 = vmul.f32 1.0, %v1708
    %v1710 = vtanh.pop %v1676
    %v1712 = vrot.slane %v1510, 2
    %v1714 = vmul.f32 %v1709, %v1712
    %1716 = vrot.lane.b32.xlu0 %v1710, 64
    %v1717 = vpop.permute.xlu0 %1716
    %v1719 = vmul.f32 %v1709, %v1717
    %1721 = vrot.lane.b32.xlu0 %v1719, 32
    %v1722 = vpop.permute.xlu0 %1721
    %v1724 = vadd.f32 %v1714, %v1722
    %v1725 = vtanh.pop %v1724
    %1727 = vrot.lane.b32.xlu0 %v1725, 64
    %v1728 = vpop.permute.xlu0 %1727
    %v1730 = vmul.f32 %v1709, %v1728
    %v1732 = vrot.slane %v1703, 4
    %1733 = vrot.lane.b32.xlu0 %v1732, 32
    %v1734 = vpop.permute.xlu0 %1733
    %v1735 = vsel %vm259, %v1734, 0
    %1737 = vmatprep.subr.mxu0 0.0
    %1738 = vmatpush1.msra.mxu0 %v251
    %1739 = vmatprep.subr.mxu0 0.0
    %1740 = vmatpush1.msra.mxu0 %v252
    %1741 = vmatprep.subr.mxu0 0.0
    %1742 = vmatpush1.msra.mxu0 %v253
    %1743 = vmatprep.subr.mxu0 0.0
    %1744 = vmatpush1.msra.mxu0 %v254
    %1745 = vmatprep.subr.mxu0 0.0
    %1746 = vmatpush1.msra.mxu0 0.0
    %1747 = vmatprep.subr.mxu0 0.0
    %1748 = vmatpush1.msra.mxu0 0.0
    %1749 = vmatprep.subr.mxu0 0.0
    %1750 = vmatpush1.msra.mxu0 0.0
    %1751 = vmatprep.subr.mxu0 0.0
    %1752 = vmatpush1.msra.mxu0 0.0
    %1753 = vmatprep.subr.mxu0 0.0
    %1754 = vmatpush1.msra.mxu0 0.0
    %1755 = vmatprep.subr.mxu0 0.0
    %1756 = vmatpush1.msra.mxu0 0.0
    %1757 = vmatprep.subr.mxu0 0.0
    %1758 = vmatpush1.msra.mxu0 0.0
    %1759 = vmatprep.subr.mxu0 0.0
    %1760 = vmatpush1.msra.mxu0 0.0
    %1761 = vmatprep.subr.mxu0 0.0
    %1762 = vmatpush1.msra.mxu0 0.0
    %1763 = vmatprep.subr.mxu0 0.0
    %1764 = vmatpush1.msra.mxu0 0.0
    %1765 = vmatprep.subr.mxu0 0.0
    %1766 = vmatpush1.msra.mxu0 0.0
    %1767 = vmatprep.subr.mxu0 0.0
    %1768 = vmatpush1.msra.mxu0 0.0
    %1769 = vmatprep.subr.mxu0 0.0
    %1770 = vmatpush1.msra.mxu0 0.0
    %1771 = vmatprep.subr.mxu0 0.0
    %1772 = vmatpush1.msra.mxu0 0.0
    %1773 = vmatprep.subr.mxu0 0.0
    %1774 = vmatpush1.msra.mxu0 0.0
    %1775 = vmatprep.subr.mxu0 0.0
    %1776 = vmatpush1.msra.mxu0 0.0
    %1777 = vmatprep.subr.mxu0 0.0
    %1778 = vmatpush1.msra.mxu0 0.0
    %1779 = vmatprep.subr.mxu0 0.0
    %1780 = vmatpush1.msra.mxu0 0.0
    %1781 = vmatprep.subr.mxu0 0.0
    %1782 = vmatpush1.msra.mxu0 0.0
    %1783 = vmatprep.subr.mxu0 0.0
    %1784 = vmatpush1.msra.mxu0 0.0
    %1785 = vmatprep.subr.mxu0 0.0
    %1786 = vmatpush1.msra.mxu0 0.0
    %1787 = vmatprep.subr.mxu0 0.0
    %1788 = vmatpush1.msra.mxu0 0.0
    %1789 = vmatprep.subr.mxu0 0.0
    %1790 = vmatpush1.msra.mxu0 0.0
    %1791 = vmatprep.subr.mxu0 0.0
    %1792 = vmatpush1.msra.mxu0 0.0
    %1793 = vmatprep.subr.mxu0 0.0
    %1794 = vmatpush1.msra.mxu0 0.0
    %1795 = vmatprep.subr.mxu0 0.0
    %1796 = vmatpush1.msra.mxu0 0.0
    %1797 = vmatprep.subr.mxu0 0.0
    %1798 = vmatpush1.msra.mxu0 0.0
    %1799 = vmatprep.subr.mxu0 0.0
    %1800 = vmatpush1.msra.mxu0 0.0
    %1801 = vmatprep.mubr.f32.mxu0 0.0
    %1802 = vmatmul.mubr.f32.gmra.mrb[0].mxu0 %v1735
    %v1803 = vpop.f32.mrb[0].mxu0
    %v1804 = vadd.f32 0.0, %v1803
    %v1805 = vpop.f32.mrb[0].mxu0
    %1806 = vdwg.mxu0
    %v1808 = vrot.slane %v1804, 2
    %v1810 = vadd.f32 %v247, %v1808
    %v1812 = vrot.slane %v1730, 2
    %1813 = vrot.lane.b32.xlu0 %v1812, 32
    %v1814 = vpop.permute.xlu0 %1813
    %v1815 = vsel %vm259, %v1814, 0
    %1817 = vmatprep.subr.mxu0 0.0
    %1818 = vmatpush1.msra.mxu0 %v255
    %1819 = vmatprep.subr.mxu0 0.0
    %1820 = vmatpush1.msra.mxu0 %v256
    %1821 = vmatprep.subr.mxu0 0.0
    %1822 = vmatpush1.msra.mxu0 %v257
    %1823 = vmatprep.subr.mxu0 0.0
    %1824 = vmatpush1.msra.mxu0 %v258
    %1825 = vmatprep.subr.mxu0 0.0
    %1826 = vmatpush1.msra.mxu0 0.0
    %1827 = vmatprep.subr.mxu0 0.0
    %1828 = vmatpush1.msra.mxu0 0.0
    %1829 = vmatprep.subr.mxu0 0.0
    %1830 = vmatpush1.msra.mxu0 0.0
    %1831 = vmatprep.subr.mxu0 0.0
    %1832 = vmatpush1.msra.mxu0 0.0
    %1833 = vmatprep.subr.mxu0 0.0
    %1834 = vmatpush1.msra.mxu0 0.0
    %1835 = vmatprep.subr.mxu0 0.0
    %1836 = vmatpush1.msra.mxu0 0.0
    %1837 = vmatprep.subr.mxu0 0.0
    %1838 = vmatpush1.msra.mxu0 0.0
    %1839 = vmatprep.subr.mxu0 0.0
    %1840 = vmatpush1.msra.mxu0 0.0
    %1841 = vmatprep.subr.mxu0 0.0
    %1842 = vmatpush1.msra.mxu0 0.0
    %1843 = vmatprep.subr.mxu0 0.0
    %1844 = vmatpush1.msra.mxu0 0.0
    %1845 = vmatprep.subr.mxu0 0.0
    %1846 = vmatpush1.msra.mxu0 0.0
    %1847 = vmatprep.subr.mxu0 0.0
    %1848 = vmatpush1.msra.mxu0 0.0
    %1849 = vmatprep.subr.mxu0 0.0
    %1850 = vmatpush1.msra.mxu0 0.0
    %1851 = vmatprep.subr.mxu0 0.0
    %1852 = vmatpush1.msra.mxu0 0.0
    %1853 = vmatprep.subr.mxu0 0.0
    %1854 = vmatpush1.msra.mxu0 0.0
    %1855 = vmatprep.subr.mxu0 0.0
    %1856 = vmatpush1.msra.mxu0 0.0
    %1857 = vmatprep.subr.mxu0 0.0
    %1858 = vmatpush1.msra.mxu0 0.0
    %1859 = vmatprep.subr.mxu0 0.0
    %1860 = vmatpush1.msra.mxu0 0.0
    %1861 = vmatprep.subr.mxu0 0.0
    %1862 = vmatpush1.msra.mxu0 0.0
    %1863 = vmatprep.subr.mxu0 0.0
    %1864 = vmatpush1.msra.mxu0 0.0
    %1865 = vmatprep.subr.mxu0 0.0
    %1866 = vmatpush1.msra.mxu0 0.0
    %1867 = vmatprep.subr.mxu0 0.0
    %1868 = vmatpush1.msra.mxu0 0.0
    %1869 = vmatprep.subr.mxu0 0.0
    %1870 = vmatpush1.msra.mxu0 0.0
    %1871 = vmatprep.subr.mxu0 0.0
    %1872 = vmatpush1.msra.mxu0 0.0
    %1873 = vmatprep.subr.mxu0 0.0
    %1874 = vmatpush1.msra.mxu0 0.0
    %1875 = vmatprep.subr.mxu0 0.0
    %1876 = vmatpush1.msra.mxu0 0.0
    %1877 = vmatprep.subr.mxu0 0.0
    %1878 = vmatpush1.msra.mxu0 0.0
    %1879 = vmatprep.subr.mxu0 0.0
    %1880 = vmatpush1.msra.mxu0 0.0
    %1881 = vmatprep.mubr.f32.mxu0 0.0
    %1882 = vmatmul.mubr.f32.gmra.mrb[0].mxu0 %v1815
    %v1883 = vpop.f32.mrb[0].mxu0
    %v1884 = vadd.f32 0.0, %v1883
    %v1885 = vpop.f32.mrb[0].mxu0
    %1886 = vdwg.mxu0
    %v1887 = vadd.f32 %v243, %v1884
    %v1888 = vxor.u32 %v1810, 2147483648
    %v1889 = vmul.f32 %v1888, 1.442695
    %v1890 = vpow.pop %v1889
    %v1891 = vadd.f32 %v1890, 1.0
    %v1892 = vrcp.pop %v1891
    %v1893 = vmul.f32 1.0, %v1892
    %v1894 = vtanh.pop %v1810
    %v1896 = vrot.slane %v1697, 6
    %v1898 = vmul.f32 %v1893, %v1896
    %1900 = vrot.lane.b32.xlu0 %v1894, 64
    %v1901 = vpop.permute.xlu0 %1900
    %v1903 = vmul.f32 %v1893, %v1901
    %1905 = vrot.lane.b32.xlu0 %v1903, 32
    %v1906 = vpop.permute.xlu0 %1905
    %v1908 = vadd.f32 %v1898, %v1906
    %v1909 = vtanh.pop %v1908
    %1911 = vrot.lane.b32.xlu0 %v1909, 64
    %v1912 = vpop.permute.xlu0 %1911
    %v1914 = vmul.f32 %v1893, %v1912
    %v1915 = vxor.u32 %v1887, 2147483648
    %v1916 = vmul.f32 %v1915, 1.442695
    %v1917 = vpow.pop %v1916
    %v1918 = vadd.f32 %v1917, 1.0
    %v1919 = vrcp.pop %v1918
    %v1920 = vmul.f32 1.0, %v1919
    %v1921 = vtanh.pop %v1887
    %v1923 = vrot.slane %v1724, 2
    %v1925 = vmul.f32 %v1920, %v1923
    %1927 = vrot.lane.b32.xlu0 %v1921, 64
    %v1928 = vpop.permute.xlu0 %1927
    %v1930 = vmul.f32 %v1920, %v1928
    %1932 = vrot.lane.b32.xlu0 %v1930, 32
    %v1933 = vpop.permute.xlu0 %1932
    %v1935 = vadd.f32 %v1925, %v1933
    %v1936 = vtanh.pop %v1935
    %1938 = vrot.lane.b32.xlu0 %v1936, 64
    %v1939 = vpop.permute.xlu0 %1938
    %v1941 = vmul.f32 %v1920, %v1939
    %vm1942 = vcmask 1041408
    %v1943 = vsel %vm1942, %v431, %v641
    %vm1944 = vcmask 1043456
    %v1945 = vsel %vm1944, %v1943, %v855
    %vm1946 = vcmask 1045504
    %v1947 = vsel %vm1946, %v1945, %v1066
    %v1948 = vsel %vm1942, %v1276, %v1489
    %v1949 = vsel %vm1944, %v1948, %v1703
    %v1950 = vsel %vm1946, %v1949, %v1914
    %v1951 = vsel %vm1942, %v1941, %v1730
    %v1952 = vsel %vm1944, %v1951, %v1516
    %v1953 = vsel %vm1946, %v1952, %v1303
    %v1954 = vsel %vm1942, %v1093, %v882
    %v1955 = vsel %vm1944, %v1954, %v668
    %v1956 = vsel %vm1946, %v1955, %v455
    %v1957 = vld [vmem:[#allocation8] sm:$0xff]
    %v1958 = vld [vmem:[#allocation8 + $0x8] sm:$0xff]
    %v1959 = vld [vmem:[#allocation8 + $0x10] sm:$0xff]
    %v1960 = vld [vmem:[#allocation8 + $0x18] sm:$0xff]
    %v1961 = vld [vmem:[#allocation8 + $0x20] sm:$0xff]
    %v1962 = vld [vmem:[#allocation8 + $0x28] sm:$0xff]
    %v1963 = vld [vmem:[#allocation8 + $0x30] sm:$0xff]
    %v1964 = vld [vmem:[#allocation8 + $0x38] sm:$0xff]
    %v1965 = vld [vmem:[#allocation10] sm:$0xff]
    %v1966 = vld [vmem:[#allocation10 + $0x8] sm:$0xff]
    %v1967 = vld [vmem:[#allocation10 + $0x10] sm:$0xff]
    %v1968 = vld [vmem:[#allocation10 + $0x18] sm:$0xff]
    %v1969 = vld [vmem:[#allocation10 + $0x20] sm:$0xff]
    %v1970 = vld [vmem:[#allocation10 + $0x28] sm:$0xff]
    %v1971 = vld [vmem:[#allocation10 + $0x30] sm:$0xff]
    %v1972 = vld [vmem:[#allocation10 + $0x38] sm:$0xff]
    %1975 = vrot.lane.b32.xlu0 %v1953, 32
    %v1976 = vpop.permute.xlu0 %1975
    %1977 = vrot.lane.b32.xlu0 %v1956, 32
    %v1978 = vpop.permute.xlu0 %1977
    %v1979 = vsel %vm259, %v1976, 0
    %v1981 = vsel %vm259, %v1978, 0
    %1983 = vmatprep.subr.mxu0 %v1966
    %1984 = vmatpush1.msra.mxu0 %v1965
    %1985 = vmatprep.subr.mxu0 %v1968
    %1986 = vmatpush1.msra.mxu0 %v1967
    %1987 = vmatprep.subr.mxu0 %v1970
    %1988 = vmatpush1.msra.mxu0 %v1969
    %1989 = vmatprep.subr.mxu0 %v1972
    %1990 = vmatpush1.msra.mxu0 %v1971
    %1991 = vmatprep.subr.mxu0 0.0
    %1992 = vmatpush1.msra.mxu0 0.0
    %1993 = vmatprep.subr.mxu0 0.0
    %1994 = vmatpush1.msra.mxu0 0.0
    %1995 = vmatprep.subr.mxu0 0.0
    %1996 = vmatpush1.msra.mxu0 0.0
    %1997 = vmatprep.subr.mxu0 0.0
    %1998 = vmatpush1.msra.mxu0 0.0
    %1999 = vmatprep.subr.mxu0 0.0
    %2000 = vmatpush1.msra.mxu0 0.0
    %2001 = vmatprep.subr.mxu0 0.0
    %2002 = vmatpush1.msra.mxu0 0.0
    %2003 = vmatprep.subr.mxu0 0.0
    %2004 = vmatpush1.msra.mxu0 0.0
    %2005 = vmatprep.subr.mxu0 0.0
    %2006 = vmatpush1.msra.mxu0 0.0
    %2007 = vmatprep.subr.mxu0 0.0
    %2008 = vmatpush1.msra.mxu0 0.0
    %2009 = vmatprep.subr.mxu0 0.0
    %2010 = vmatpush1.msra.mxu0 0.0
    %2011 = vmatprep.subr.mxu0 0.0
    %2012 = vmatpush1.msra.mxu0 0.0
    %2013 = vmatprep.subr.mxu0 0.0
    %2014 = vmatpush1.msra.mxu0 0.0
    %2015 = vmatprep.subr.mxu0 0.0
    %2016 = vmatpush1.msra.mxu0 0.0
    %2017 = vmatprep.subr.mxu0 0.0
    %2018 = vmatpush1.msra.mxu0 0.0
    %2019 = vmatprep.subr.mxu0 0.0
    %2020 = vmatpush1.msra.mxu0 0.0
    %2021 = vmatprep.subr.mxu0 0.0
    %2022 = vmatpush1.msra.mxu0 0.0
    %2023 = vmatprep.subr.mxu0 0.0
    %2024 = vmatpush1.msra.mxu0 0.0
    %2025 = vmatprep.subr.mxu0 0.0
    %2026 = vmatpush1.msra.mxu0 0.0
    %2027 = vmatprep.subr.mxu0 0.0
    %2028 = vmatpush1.msra.mxu0 0.0
    %2029 = vmatprep.subr.mxu0 0.0
    %2030 = vmatpush1.msra.mxu0 0.0
    %2031 = vmatprep.subr.mxu0 0.0
    %2032 = vmatpush1.msra.mxu0 0.0
    %2033 = vmatprep.subr.mxu0 0.0
    %2034 = vmatpush1.msra.mxu0 0.0
    %2035 = vmatprep.subr.mxu0 0.0
    %2036 = vmatpush1.msra.mxu0 0.0
    %2037 = vmatprep.subr.mxu0 0.0
    %2038 = vmatpush1.msra.mxu0 0.0
    %2039 = vmatprep.subr.mxu0 0.0
    %2040 = vmatpush1.msra.mxu0 0.0
    %2041 = vmatprep.subr.mxu0 0.0
    %2042 = vmatpush1.msra.mxu0 0.0
    %2043 = vmatprep.subr.mxu0 0.0
    %2044 = vmatpush1.msra.mxu0 0.0
    %2045 = vmatprep.subr.mxu0 0.0
    %2046 = vmatpush1.msra.mxu0 0.0
    %2047 = vmatprep.mubr.f32.mxu0 0.0
    %2048 = vmatmul.mubr.f32.gmra.mrb[0].mxu0 %v1979
    %v2049 = vpop.f32.mrb[0].mxu0
    %v2050 = vadd.f32 0.0, %v2049
    %v2051 = vpop.f32.mrb[0].mxu0
    %v2052 = vadd.f32 0.0, %v2051
    %2053 = vmatprep.mubr.f32.mxu0 0.0
    %2054 = vmatmul.mubr.f32.gmra.mrb[0].mxu0 %v1981
    %v2055 = vpop.f32.mrb[0].mxu0
    %v2056 = vadd.f32 0.0, %v2055
    %v2057 = vpop.f32.mrb[0].mxu0
    %v2058 = vadd.f32 0.0, %v2057
    %2059 = vdwg.mxu0
    %2062 = vrot.lane.b32.xlu0 %v1947, 32
    %v2063 = vpop.permute.xlu0 %2062
    %2064 = vrot.lane.b32.xlu0 %v1950, 32
    %v2065 = vpop.permute.xlu0 %2064
    %v2066 = vsel %vm259, %v2063, 0
    %v2068 = vsel %vm259, %v2065, 0
    %2070 = vmatprep.subr.mxu0 %v1958
    %2071 = vmatpush1.msra.mxu0 %v1957
    %2072 = vmatprep.subr.mxu0 %v1960
    %2073 = vmatpush1.msra.mxu0 %v1959
    %2074 = vmatprep.subr.mxu0 %v1962
    %2075 = vmatpush1.msra.mxu0 %v1961
    %2076 = vmatprep.subr.mxu0 %v1964
    %2077 = vmatpush1.msra.mxu0 %v1963
    %2078 = vmatprep.subr.mxu0 0.0
    %2079 = vmatpush1.msra.mxu0 0.0
    %2080 = vmatprep.subr.mxu0 0.0
    %2081 = vmatpush1.msra.mxu0 0.0
    %2082 = vmatprep.subr.mxu0 0.0
    %2083 = vmatpush1.msra.mxu0 0.0
    %2084 = vmatprep.subr.mxu0 0.0
    %2085 = vmatpush1.msra.mxu0 0.0
    %2086 = vmatprep.subr.mxu0 0.0
    %2087 = vmatpush1.msra.mxu0 0.0
    %2088 = vmatprep.subr.mxu0 0.0
    %2089 = vmatpush1.msra.mxu0 0.0
    %2090 = vmatprep.subr.mxu0 0.0
    %2091 = vmatpush1.msra.mxu0 0.0
    %2092 = vmatprep.subr.mxu0 0.0
    %2093 = vmatpush1.msra.mxu0 0.0
    %2094 = vmatprep.subr.mxu0 0.0
    %2095 = vmatpush1.msra.mxu0 0.0
    %2096 = vmatprep.subr.mxu0 0.0
    %2097 = vmatpush1.msra.mxu0 0.0
    %2098 = vmatprep.subr.mxu0 0.0
    %2099 = vmatpush1.msra.mxu0 0.0
    %2100 = vmatprep.subr.mxu0 0.0
    %2101 = vmatpush1.msra.mxu0 0.0
    %2102 = vmatprep.subr.mxu0 0.0
    %2103 = vmatpush1.msra.mxu0 0.0
    %2104 = vmatprep.subr.mxu0 0.0
    %2105 = vmatpush1.msra.mxu0 0.0
    %2106 = vmatprep.subr.mxu0 0.0
    %2107 = vmatpush1.msra.mxu0 0.0
    %2108 = vmatprep.subr.mxu0 0.0
    %2109 = vmatpush1.msra.mxu0 0.0
    %2110 = vmatprep.subr.mxu0 0.0
    %2111 = vmatpush1.msra.mxu0 0.0
    %2112 = vmatprep.subr.mxu0 0.0
    %2113 = vmatpush1.msra.mxu0 0.0
    %2114 = vmatprep.subr.mxu0 0.0
    %2115 = vmatpush1.msra.mxu0 0.0
    %2116 = vmatprep.subr.mxu0 0.0
    %2117 = vmatpush1.msra.mxu0 0.0
    %2118 = vmatprep.subr.mxu0 0.0
    %2119 = vmatpush1.msra.mxu0 0.0
    %2120 = vmatprep.subr.mxu0 0.0
    %2121 = vmatpush1.msra.mxu0 0.0
    %2122 = vmatprep.subr.mxu0 0.0
    %2123 = vmatpush1.msra.mxu0 0.0
    %2124 = vmatprep.subr.mxu0 0.0
    %2125 = vmatpush1.msra.mxu0 0.0
    %2126 = vmatprep.subr.mxu0 0.0
    %2127 = vmatpush1.msra.mxu0 0.0
    %2128 = vmatprep.subr.mxu0 0.0
    %2129 = vmatpush1.msra.mxu0 0.0
    %2130 = vmatprep.subr.mxu0 0.0
    %2131 = vmatpush1.msra.mxu0 0.0
    %2132 = vmatprep.subr.mxu0 0.0
    %2133 = vmatpush1.msra.mxu0 0.0
    %2134 = vmatprep.mubr.f32.mxu0 0.0
    %2135 = vmatmul.mubr.f32.gmra.mrb[0].mxu0 %v2066
    %v2136 = vpop.f32.mrb[0].mxu0
    %v2137 = vadd.f32 %v2050, %v2136
    %v2138 = vpop.f32.mrb[0].mxu0
    %v2139 = vadd.f32 %v2052, %v2138
    %2140 = vmatprep.mubr.f32.mxu0 0.0
    %2141 = vmatmul.mubr.f32.gmra.mrb[0].mxu0 %v2068
    %v2142 = vpop.f32.mrb[0].mxu0
    %v2143 = vadd.f32 %v2056, %v2142
    %v2144 = vpop.f32.mrb[0].mxu0
    %v2145 = vadd.f32 %v2058, %v2144
    %2146 = vdwg.mxu0
    %v2147 = vld [vmem:[%s7] sm:$0x3]
    %v2149 = vlaneseq
    %v2150 = vshrl.u32 %v2149, 7
    %v2151 = vsub.s32 0, %v2150
    %v2152 = vrot.slane %v2147, %v2151
    %v2153 = vlaneseq
    %v2154 = vshrl.u32 %v2153, 7
    %v2155 = vsub.s32 1, %v2154
    %v2156 = vrot.slane %v2147, %v2155
    %v2159 = vadd.f32 %v2137, %v2152
    %v2160 = vadd.f32 %v2139, %v2156
    %v2161 = vadd.f32 %v2143, %v2152
    %v2162 = vadd.f32 %v2145, %v2156
    %v2163 = vld [vmem:[#allocation11] sm:$0xff]
    %v2164 = vld [vmem:[#allocation11 + $0x8] sm:$0xff]
    %v2165 = vld [vmem:[#allocation11 + $0x10] sm:$0xff]
    %v2166 = vld [vmem:[#allocation11 + $0x18] sm:$0xff]
    %v2167 = vld [vmem:[#allocation13] sm:$0xff]
    %v2168 = vld [vmem:[#allocation13 + $0x8] sm:$0xff]
    %v2169 = vld [vmem:[#allocation13 + $0x10] sm:$0xff]
    %v2170 = vld [vmem:[#allocation13 + $0x18] sm:$0xff]
    %2171 = vmatprep.subr.mxu0 0.0
    %2172 = vmatpush1.msra.mxu0 %v2163
    %2173 = vmatprep.subr.mxu0 0.0
    %2174 = vmatpush1.msra.mxu0 %v2164
    %2175 = vmatprep.subr.mxu0 0.0
    %2176 = vmatpush1.msra.mxu0 %v2165
    %2177 = vmatprep.subr.mxu0 0.0
    %2178 = vmatpush1.msra.mxu0 %v2166
    %2179 = vmatprep.subr.mxu0 0.0
    %2180 = vmatpush1.msra.mxu0 0.0
    %2181 = vmatprep.subr.mxu0 0.0
    %2182 = vmatpush1.msra.mxu0 0.0
    %2183 = vmatprep.subr.mxu0 0.0
    %2184 = vmatpush1.msra.mxu0 0.0
    %2185 = vmatprep.subr.mxu0 0.0
    %2186 = vmatpush1.msra.mxu0 0.0
    %2187 = vmatprep.subr.mxu0 0.0
    %2188 = vmatpush1.msra.mxu0 0.0
    %2189 = vmatprep.subr.mxu0 0.0
    %2190 = vmatpush1.msra.mxu0 0.0
    %2191 = vmatprep.subr.mxu0 0.0
    %2192 = vmatpush1.msra.mxu0 0.0
    %2193 = vmatprep.subr.mxu0 0.0
    %2194 = vmatpush1.msra.mxu0 0.0
    %2195 = vmatprep.subr.mxu0 0.0
    %2196 = vmatpush1.msra.mxu0 0.0
    %2197 = vmatprep.subr.mxu0 0.0
    %2198 = vmatpush1.msra.mxu0 0.0
    %2199 = vmatprep.subr.mxu0 0.0
    %2200 = vmatpush1.msra.mxu0 0.0
    %2201 = vmatprep.subr.mxu0 0.0
    %2202 = vmatpush1.msra.mxu0 0.0
    %2203 = vmatprep.subr.mxu0 0.0
    %2204 = vmatpush1.msra.mxu0 0.0
    %2205 = vmatprep.subr.mxu0 0.0
    %2206 = vmatpush1.msra.mxu0 0.0
    %2207 = vmatprep.subr.mxu0 0.0
    %2208 = vmatpush1.msra.mxu0 0.0
    %2209 = vmatprep.subr.mxu0 0.0
    %2210 = vmatpush1.msra.mxu0 0.0
    %2211 = vmatprep.subr.mxu0 0.0
    %2212 = vmatpush1.msra.mxu0 0.0
    %2213 = vmatprep.subr.mxu0 0.0
    %2214 = vmatpush1.msra.mxu0 0.0
    %2215 = vmatprep.subr.mxu0 0.0
    %2216 = vmatpush1.msra.mxu0 0.0
    %2217 = vmatprep.subr.mxu0 0.0
    %2218 = vmatpush1.msra.mxu0 0.0
    %2219 = vmatprep.subr.mxu0 0.0
    %2220 = vmatpush1.msra.mxu0 0.0
    %2221 = vmatprep.subr.mxu0 0.0
    %2222 = vmatpush1.msra.mxu0 0.0
    %2223 = vmatprep.subr.mxu0 0.0
    %2224 = vmatpush1.msra.mxu0 0.0
    %2225 = vmatprep.subr.mxu0 0.0
    %2226 = vmatpush1.msra.mxu0 0.0
    %2227 = vmatprep.subr.mxu0 0.0
    %2228 = vmatpush1.msra.mxu0 0.0
    %2229 = vmatprep.subr.mxu0 0.0
    %2230 = vmatpush1.msra.mxu0 0.0
    %2231 = vmatprep.subr.mxu0 0.0
    %2232 = vmatpush1.msra.mxu0 0.0
    %2233 = vmatprep.subr.mxu0 0.0
    %2234 = vmatpush1.msra.mxu0 0.0
    %2235 = vmatprep.mubr.f32.mxu0 0.0
    %2236 = vmatmul.mubr.f32.gmra.mrb[0].mxu0 %v261
    %v2237 = vpop.f32.mrb[0].mxu0
    %v2238 = vadd.f32 0.0, %v2237
    %v2239 = vpop.f32.mrb[0].mxu0
    %2240 = vdwg.mxu0
    %v2241 = vadd.f32 %v2159, %v2238
    %2242 = vmatprep.subr.mxu0 0.0
    %2243 = vmatpush1.msra.mxu0 %v2167
    %2244 = vmatprep.subr.mxu0 0.0
    %2245 = vmatpush1.msra.mxu0 %v2168
    %2246 = vmatprep.subr.mxu0 0.0
    %2247 = vmatpush1.msra.mxu0 %v2169
    %2248 = vmatprep.subr.mxu0 0.0
    %2249 = vmatpush1.msra.mxu0 %v2170
    %2250 = vmatprep.subr.mxu0 0.0
    %2251 = vmatpush1.msra.mxu0 0.0
    %2252 = vmatprep.subr.mxu0 0.0
    %2253 = vmatpush1.msra.mxu0 0.0
    %2254 = vmatprep.subr.mxu0 0.0
    %2255 = vmatpush1.msra.mxu0 0.0
    %2256 = vmatprep.subr.mxu0 0.0
    %2257 = vmatpush1.msra.mxu0 0.0
    %2258 = vmatprep.subr.mxu0 0.0
    %2259 = vmatpush1.msra.mxu0 0.0
    %2260 = vmatprep.subr.mxu0 0.0
    %2261 = vmatpush1.msra.mxu0 0.0
    %2262 = vmatprep.subr.mxu0 0.0
    %2263 = vmatpush1.msra.mxu0 0.0
    %2264 = vmatprep.subr.mxu0 0.0
    %2265 = vmatpush1.msra.mxu0 0.0
    %2266 = vmatprep.subr.mxu0 0.0
    %2267 = vmatpush1.msra.mxu0 0.0
    %2268 = vmatprep.subr.mxu0 0.0
    %2269 = vmatpush1.msra.mxu0 0.0
    %2270 = vmatprep.subr.mxu0 0.0
    %2271 = vmatpush1.msra.mxu0 0.0
    %2272 = vmatprep.subr.mxu0 0.0
    %2273 = vmatpush1.msra.mxu0 0.0
    %2274 = vmatprep.subr.mxu0 0.0
    %2275 = vmatpush1.msra.mxu0 0.0
    %2276 = vmatprep.subr.mxu0 0.0
    %2277 = vmatpush1.msra.mxu0 0.0
    %2278 = vmatprep.subr.mxu0 0.0
    %2279 = vmatpush1.msra.mxu0 0.0
    %2280 = vmatprep.subr.mxu0 0.0
    %2281 = vmatpush1.msra.mxu0 0.0
    %2282 = vmatprep.subr.mxu0 0.0
    %2283 = vmatpush1.msra.mxu0 0.0
    %2284 = vmatprep.subr.mxu0 0.0
    %2285 = vmatpush1.msra.mxu0 0.0
    %2286 = vmatprep.subr.mxu0 0.0
    %2287 = vmatpush1.msra.mxu0 0.0
    %2288 = vmatprep.subr.mxu0 0.0
    %2289 = vmatpush1.msra.mxu0 0.0
    %2290 = vmatprep.subr.mxu0 0.0
    %2291 = vmatpush1.msra.mxu0 0.0
    %2292 = vmatprep.subr.mxu0 0.0
    %2293 = vmatpush1.msra.mxu0 0.0
    %2294 = vmatprep.subr.mxu0 0.0
    %2295 = vmatpush1.msra.mxu0 0.0
    %2296 = vmatprep.subr.mxu0 0.0
    %2297 = vmatpush1.msra.mxu0 0.0
    %2298 = vmatprep.subr.mxu0 0.0
    %2299 = vmatpush1.msra.mxu0 0.0
    %2300 = vmatprep.subr.mxu0 0.0
    %2301 = vmatpush1.msra.mxu0 0.0
    %2302 = vmatprep.subr.mxu0 0.0
    %2303 = vmatpush1.msra.mxu0 0.0
    %2304 = vmatprep.subr.mxu0 0.0
    %2305 = vmatpush1.msra.mxu0 0.0
    %2306 = vmatprep.mubr.f32.mxu0 0.0
    %2307 = vmatmul.mubr.f32.gmra.mrb[0].mxu0 %v261
    %v2308 = vpop.f32.mrb[0].mxu0
    %v2309 = vadd.f32 0.0, %v2308
    %v2310 = vpop.f32.mrb[0].mxu0
    %2311 = vdwg.mxu0
    %v2313 = vrot.slane %v2309, 2
    %v2315 = vadd.f32 %v2162, %v2313
    %v2316 = vxor.u32 %v2241, 2147483648
    %v2317 = vmul.f32 %v2316, 1.442695
    %v2318 = vpow.pop %v2317
    %v2319 = vadd.f32 %v2318, 1.0
    %v2320 = vrcp.pop %v2319
    %v2321 = vmul.f32 1.0, %v2320
    %v2322 = vtanh.pop %v2241
    %v2323 = vmul.f32 %v2321, 0.0
    %2325 = vrot.lane.b32.xlu0 %v2322, 64
    %v2326 = vpop.permute.xlu0 %2325
    %v2328 = vmul.f32 %v2321, %v2326
    %2330 = vrot.lane.b32.xlu0 %v2328, 32
    %v2331 = vpop.permute.xlu0 %2330
    %v2333 = vadd.f32 %v2323, %v2331
    %v2334 = vtanh.pop %v2333
    %2336 = vrot.lane.b32.xlu0 %v2334, 64
    %v2337 = vpop.permute.xlu0 %2336
    %v2339 = vmul.f32 %v2321, %v2337
    %v2340 = vxor.u32 %v2315, 2147483648
    %v2341 = vmul.f32 %v2340, 1.442695
    %v2342 = vpow.pop %v2341
    %v2343 = vadd.f32 %v2342, 1.0
    %v2344 = vrcp.pop %v2343
    %v2345 = vmul.f32 1.0, %v2344
    %v2346 = vtanh.pop %v2315
    %v2347 = vmul.f32 %v2345, 0.0
    %2349 = vrot.lane.b32.xlu0 %v2346, 64
    %v2350 = vpop.permute.xlu0 %2349
    %v2352 = vmul.f32 %v2345, %v2350
    %2354 = vrot.lane.b32.xlu0 %v2352, 32
    %v2355 = vpop.permute.xlu0 %2354
    %v2357 = vadd.f32 %v2347, %v2355
    %v2358 = vtanh.pop %v2357
    %2360 = vrot.lane.b32.xlu0 %v2358, 64
    %v2361 = vpop.permute.xlu0 %2360
    %v2363 = vmul.f32 %v2345, %v2361
    %2365 = vrot.lane.b32.xlu0 %v2339, 32
    %v2366 = vpop.permute.xlu0 %2365
    %v2367 = vsel %vm259, %v2366, 0
    %2369 = vmatprep.subr.mxu0 0.0
    %2370 = vmatpush1.msra.mxu0 %v2163
    %2371 = vmatprep.subr.mxu0 0.0
    %2372 = vmatpush1.msra.mxu0 %v2164
    %2373 = vmatprep.subr.mxu0 0.0
    %2374 = vmatpush1.msra.mxu0 %v2165
    %2375 = vmatprep.subr.mxu0 0.0
    %2376 = vmatpush1.msra.mxu0 %v2166
    %2377 = vmatprep.subr.mxu0 0.0
    %2378 = vmatpush1.msra.mxu0 0.0
    %2379 = vmatprep.subr.mxu0 0.0
    %2380 = vmatpush1.msra.mxu0 0.0
    %2381 = vmatprep.subr.mxu0 0.0
    %2382 = vmatpush1.msra.mxu0 0.0
    %2383 = vmatprep.subr.mxu0 0.0
    %2384 = vmatpush1.msra.mxu0 0.0
    %2385 = vmatprep.subr.mxu0 0.0
    %2386 = vmatpush1.msra.mxu0 0.0
    %2387 = vmatprep.subr.mxu0 0.0
    %2388 = vmatpush1.msra.mxu0 0.0
    %2389 = vmatprep.subr.mxu0 0.0
    %2390 = vmatpush1.msra.mxu0 0.0
    %2391 = vmatprep.subr.mxu0 0.0
    %2392 = vmatpush1.msra.mxu0 0.0
    %2393 = vmatprep.subr.mxu0 0.0
    %2394 = vmatpush1.msra.mxu0 0.0
    %2395 = vmatprep.subr.mxu0 0.0
    %2396 = vmatpush1.msra.mxu0 0.0
    %2397 = vmatprep.subr.mxu0 0.0
    %2398 = vmatpush1.msra.mxu0 0.0
    %2399 = vmatprep.subr.mxu0 0.0
    %2400 = vmatpush1.msra.mxu0 0.0
    %2401 = vmatprep.subr.mxu0 0.0
    %2402 = vmatpush1.msra.mxu0 0.0
    %2403 = vmatprep.subr.mxu0 0.0
    %2404 = vmatpush1.msra.mxu0 0.0
    %2405 = vmatprep.subr.mxu0 0.0
    %2406 = vmatpush1.msra.mxu0 0.0
    %2407 = vmatprep.subr.mxu0 0.0
    %2408 = vmatpush1.msra.mxu0 0.0
    %2409 = vmatprep.subr.mxu0 0.0
    %2410 = vmatpush1.msra.mxu0 0.0
    %2411 = vmatprep.subr.mxu0 0.0
    %2412 = vmatpush1.msra.mxu0 0.0
    %2413 = vmatprep.subr.mxu0 0.0
    %2414 = vmatpush1.msra.mxu0 0.0
    %2415 = vmatprep.subr.mxu0 0.0
    %2416 = vmatpush1.msra.mxu0 0.0
    %2417 = vmatprep.subr.mxu0 0.0
    %2418 = vmatpush1.msra.mxu0 0.0
    %2419 = vmatprep.subr.mxu0 0.0
    %2420 = vmatpush1.msra.mxu0 0.0
    %2421 = vmatprep.subr.mxu0 0.0
    %2422 = vmatpush1.msra.mxu0 0.0
    %2423 = vmatprep.subr.mxu0 0.0
    %2424 = vmatpush1.msra.mxu0 0.0
    %2425 = vmatprep.subr.mxu0 0.0
    %2426 = vmatpush1.msra.mxu0 0.0
    %2427 = vmatprep.subr.mxu0 0.0
    %2428 = vmatpush1.msra.mxu0 0.0
    %2429 = vmatprep.subr.mxu0 0.0
    %2430 = vmatpush1.msra.mxu0 0.0
    %2431 = vmatprep.subr.mxu0 0.0
    %2432 = vmatpush1.msra.mxu0 0.0
    %2433 = vmatprep.mubr.f32.mxu0 0.0
    %2434 = vmatmul.mubr.f32.gmra.mrb[0].mxu0 %v2367
    %v2435 = vpop.f32.mrb[0].mxu0
    %v2436 = vadd.f32 0.0, %v2435
    %v2437 = vpop.f32.mrb[0].mxu0
    %2438 = vdwg.mxu0
    %v2440 = vrot.slane %v2436, 6
    %v2442 = vadd.f32 %v2159, %v2440
    %v2444 = vrot.slane %v2363, 6
    %2445 = vrot.lane.b32.xlu0 %v2444, 32
    %v2446 = vpop.permute.xlu0 %2445
    %v2447 = vsel %vm259, %v2446, 0
    %2449 = vmatprep.subr.mxu0 0.0
    %2450 = vmatpush1.msra.mxu0 %v2167
    %2451 = vmatprep.subr.mxu0 0.0
    %2452 = vmatpush1.msra.mxu0 %v2168
    %2453 = vmatprep.subr.mxu0 0.0
    %2454 = vmatpush1.msra.mxu0 %v2169
    %2455 = vmatprep.subr.mxu0 0.0
    %2456 = vmatpush1.msra.mxu0 %v2170
    %2457 = vmatprep.subr.mxu0 0.0
    %2458 = vmatpush1.msra.mxu0 0.0
    %2459 = vmatprep.subr.mxu0 0.0
    %2460 = vmatpush1.msra.mxu0 0.0
    %2461 = vmatprep.subr.mxu0 0.0
    %2462 = vmatpush1.msra.mxu0 0.0
    %2463 = vmatprep.subr.mxu0 0.0
    %2464 = vmatpush1.msra.mxu0 0.0
    %2465 = vmatprep.subr.mxu0 0.0
    %2466 = vmatpush1.msra.mxu0 0.0
    %2467 = vmatprep.subr.mxu0 0.0
    %2468 = vmatpush1.msra.mxu0 0.0
    %2469 = vmatprep.subr.mxu0 0.0
    %2470 = vmatpush1.msra.mxu0 0.0
    %2471 = vmatprep.subr.mxu0 0.0
    %2472 = vmatpush1.msra.mxu0 0.0
    %2473 = vmatprep.subr.mxu0 0.0
    %2474 = vmatpush1.msra.mxu0 0.0
    %2475 = vmatprep.subr.mxu0 0.0
    %2476 = vmatpush1.msra.mxu0 0.0
    %2477 = vmatprep.subr.mxu0 0.0
    %2478 = vmatpush1.msra.mxu0 0.0
    %2479 = vmatprep.subr.mxu0 0.0
    %2480 = vmatpush1.msra.mxu0 0.0
    %2481 = vmatprep.subr.mxu0 0.0
    %2482 = vmatpush1.msra.mxu0 0.0
    %2483 = vmatprep.subr.mxu0 0.0
    %2484 = vmatpush1.msra.mxu0 0.0
    %2485 = vmatprep.subr.mxu0 0.0
    %2486 = vmatpush1.msra.mxu0 0.0
    %2487 = vmatprep.subr.mxu0 0.0
    %2488 = vmatpush1.msra.mxu0 0.0
    %2489 = vmatprep.subr.mxu0 0.0
    %2490 = vmatpush1.msra.mxu0 0.0
    %2491 = vmatprep.subr.mxu0 0.0
    %2492 = vmatpush1.msra.mxu0 0.0
    %2493 = vmatprep.subr.mxu0 0.0
    %2494 = vmatpush1.msra.mxu0 0.0
    %2495 = vmatprep.subr.mxu0 0.0
    %2496 = vmatpush1.msra.mxu0 0.0
    %2497 = vmatprep.subr.mxu0 0.0
    %2498 = vmatpush1.msra.mxu0 0.0
    %2499 = vmatprep.subr.mxu0 0.0
    %2500 = vmatpush1.msra.mxu0 0.0
    %2501 = vmatprep.subr.mxu0 0.0
    %2502 = vmatpush1.msra.mxu0 0.0
    %2503 = vmatprep.subr.mxu0 0.0
    %2504 = vmatpush1.msra.mxu0 0.0
    %2505 = vmatprep.subr.mxu0 0.0
    %2506 = vmatpush1.msra.mxu0 0.0
    %2507 = vmatprep.subr.mxu0 0.0
    %2508 = vmatpush1.msra.mxu0 0.0
    %2509 = vmatprep.subr.mxu0 0.0
    %2510 = vmatpush1.msra.mxu0 0.0
    %2511 = vmatprep.subr.mxu0 0.0
    %2512 = vmatpush1.msra.mxu0 0.0
    %2513 = vmatprep.mubr.f32.mxu0 0.0
    %2514 = vmatmul.mubr.f32.gmra.mrb[0].mxu0 %v2447
    %v2515 = vpop.f32.mrb[0].mxu0
    %v2516 = vadd.f32 0.0, %v2515
    %v2517 = vpop.f32.mrb[0].mxu0
    %2518 = vdwg.mxu0
    %v2520 = vrot.slane %v2516, 4
    %v2522 = vadd.f32 %v2162, %v2520
    %v2523 = vxor.u32 %v2442, 2147483648
    %v2524 = vmul.f32 %v2523, 1.442695
    %v2525 = vpow.pop %v2524
    %v2526 = vadd.f32 %v2525, 1.0
    %v2527 = vrcp.pop %v2526
    %v2528 = vmul.f32 1.0, %v2527
    %v2529 = vtanh.pop %v2442
    %v2531 = vrot.slane %v2333, 6
    %v2533 = vmul.f32 %v2528, %v2531
    %2535 = vrot.lane.b32.xlu0 %v2529, 64
    %v2536 = vpop.permute.xlu0 %2535
    %v2538 = vmul.f32 %v2528, %v2536
    %2540 = vrot.lane.b32.xlu0 %v2538, 32
    %v2541 = vpop.permute.xlu0 %2540
    %v2543 = vadd.f32 %v2533, %v2541
    %v2544 = vtanh.pop %v2543
    %2546 = vrot.lane.b32.xlu0 %v2544, 64
    %v2547 = vpop.permute.xlu0 %2546
    %v2549 = vmul.f32 %v2528, %v2547
    %v2550 = vxor.u32 %v2522, 2147483648
    %v2551 = vmul.f32 %v2550, 1.442695
    %v2552 = vpow.pop %v2551
    %v2553 = vadd.f32 %v2552, 1.0
    %v2554 = vrcp.pop %v2553
    %v2555 = vmul.f32 1.0, %v2554
    %v2556 = vtanh.pop %v2522
    %v2558 = vrot.slane %v2357, 2
    %v2560 = vmul.f32 %v2555, %v2558
    %2562 = vrot.lane.b32.xlu0 %v2556, 64
    %v2563 = vpop.permute.xlu0 %2562
    %v2565 = vmul.f32 %v2555, %v2563
    %2567 = vrot.lane.b32.xlu0 %v2565, 32
    %v2568 = vpop.permute.xlu0 %2567
    %v2570 = vadd.f32 %v2560, %v2568
    %v2571 = vtanh.pop %v2570
    %2573 = vrot.lane.b32.xlu0 %v2571, 64
    %v2574 = vpop.permute.xlu0 %2573
    %v2576 = vmul.f32 %v2555, %v2574
    %v2578 = vrot.slane %v2549, 2
    %2579 = vrot.lane.b32.xlu0 %v2578, 32
    %v2580 = vpop.permute.xlu0 %2579
    %v2581 = vsel %vm259, %v2580, 0
    %2583 = vmatprep.subr.mxu0 0.0
    %2584 = vmatpush1.msra.mxu0 %v2163
    %2585 = vmatprep.subr.mxu0 0.0
    %2586 = vmatpush1.msra.mxu0 %v2164
    %2587 = vmatprep.subr.mxu0 0.0
    %2588 = vmatpush1.msra.mxu0 %v2165
    %2589 = vmatprep.subr.mxu0 0.0
    %2590 = vmatpush1.msra.mxu0 %v2166
    %2591 = vmatprep.subr.mxu0 0.0
    %2592 = vmatpush1.msra.mxu0 0.0
    %2593 = vmatprep.subr.mxu0 0.0
    %2594 = vmatpush1.msra.mxu0 0.0
    %2595 = vmatprep.subr.mxu0 0.0
    %2596 = vmatpush1.msra.mxu0 0.0
    %2597 = vmatprep.subr.mxu0 0.0
    %2598 = vmatpush1.msra.mxu0 0.0
    %2599 = vmatprep.subr.mxu0 0.0
    %2600 = vmatpush1.msra.mxu0 0.0
    %2601 = vmatprep.subr.mxu0 0.0
    %2602 = vmatpush1.msra.mxu0 0.0
    %2603 = vmatprep.subr.mxu0 0.0
    %2604 = vmatpush1.msra.mxu0 0.0
    %2605 = vmatprep.subr.mxu0 0.0
    %2606 = vmatpush1.msra.mxu0 0.0
    %2607 = vmatprep.subr.mxu0 0.0
    %2608 = vmatpush1.msra.mxu0 0.0
    %2609 = vmatprep.subr.mxu0 0.0
    %2610 = vmatpush1.msra.mxu0 0.0
    %2611 = vmatprep.subr.mxu0 0.0
    %2612 = vmatpush1.msra.mxu0 0.0
    %2613 = vmatprep.subr.mxu0 0.0
    %2614 = vmatpush1.msra.mxu0 0.0
    %2615 = vmatprep.subr.mxu0 0.0
    %2616 = vmatpush1.msra.mxu0 0.0
    %2617 = vmatprep.subr.mxu0 0.0
    %2618 = vmatpush1.msra.mxu0 0.0
    %2619 = vmatprep.subr.mxu0 0.0
    %2620 = vmatpush1.msra.mxu0 0.0
    %2621 = vmatprep.subr.mxu0 0.0
    %2622 = vmatpush1.msra.mxu0 0.0
    %2623 = vmatprep.subr.mxu0 0.0
    %2624 = vmatpush1.msra.mxu0 0.0
    %2625 = vmatprep.subr.mxu0 0.0
    %2626 = vmatpush1.msra.mxu0 0.0
    %2627 = vmatprep.subr.mxu0 0.0
    %2628 = vmatpush1.msra.mxu0 0.0
    %2629 = vmatprep.subr.mxu0 0.0
    %2630 = vmatpush1.msra.mxu0 0.0
    %2631 = vmatprep.subr.mxu0 0.0
    %2632 = vmatpush1.msra.mxu0 0.0
    %2633 = vmatprep.subr.mxu0 0.0
    %2634 = vmatpush1.msra.mxu0 0.0
    %2635 = vmatprep.subr.mxu0 0.0
    %2636 = vmatpush1.msra.mxu0 0.0
    %2637 = vmatprep.subr.mxu0 0.0
    %2638 = vmatpush1.msra.mxu0 0.0
    %2639 = vmatprep.subr.mxu0 0.0
    %2640 = vmatpush1.msra.mxu0 0.0
    %2641 = vmatprep.subr.mxu0 0.0
    %2642 = vmatpush1.msra.mxu0 0.0
    %2643 = vmatprep.subr.mxu0 0.0
    %2644 = vmatpush1.msra.mxu0 0.0
    %2645 = vmatprep.subr.mxu0 0.0
    %2646 = vmatpush1.msra.mxu0 0.0
    %2647 = vmatprep.mubr.f32.mxu0 0.0
    %2648 = vmatmul.mubr.f32.gmra.mrb[0].mxu0 %v2581
    %v2649 = vpop.f32.mrb[0].mxu0
    %v2650 = vadd.f32 0.0, %v2649
    %v2651 = vpop.f32.mrb[0].mxu0
    %2652 = vdwg.mxu0
    %v2654 = vrot.slane %v2650, 4
    %v2656 = vadd.f32 %v2159, %v2654
    %v2658 = vrot.slane %v2576, 4
    %2659 = vrot.lane.b32.xlu0 %v2658, 32
    %v2660 = vpop.permute.xlu0 %2659
    %v2661 = vsel %vm259, %v2660, 0
    %2663 = vmatprep.subr.mxu0 0.0
    %2664 = vmatpush1.msra.mxu0 %v2167
    %2665 = vmatprep.subr.mxu0 0.0
    %2666 = vmatpush1.msra.mxu0 %v2168
    %2667 = vmatprep.subr.mxu0 0.0
    %2668 = vmatpush1.msra.mxu0 %v2169
    %2669 = vmatprep.subr.mxu0 0.0
    %2670 = vmatpush1.msra.mxu0 %v2170
    %2671 = vmatprep.subr.mxu0 0.0
    %2672 = vmatpush1.msra.mxu0 0.0
    %2673 = vmatprep.subr.mxu0 0.0
    %2674 = vmatpush1.msra.mxu0 0.0
    %2675 = vmatprep.subr.mxu0 0.0
    %2676 = vmatpush1.msra.mxu0 0.0
    %2677 = vmatprep.subr.mxu0 0.0
    %2678 = vmatpush1.msra.mxu0 0.0
    %2679 = vmatprep.subr.mxu0 0.0
    %2680 = vmatpush1.msra.mxu0 0.0
    %2681 = vmatprep.subr.mxu0 0.0
    %2682 = vmatpush1.msra.mxu0 0.0
    %2683 = vmatprep.subr.mxu0 0.0
    %2684 = vmatpush1.msra.mxu0 0.0
    %2685 = vmatprep.subr.mxu0 0.0
    %2686 = vmatpush1.msra.mxu0 0.0
    %2687 = vmatprep.subr.mxu0 0.0
    %2688 = vmatpush1.msra.mxu0 0.0
    %2689 = vmatprep.subr.mxu0 0.0
    %2690 = vmatpush1.msra.mxu0 0.0
    %2691 = vmatprep.subr.mxu0 0.0
    %2692 = vmatpush1.msra.mxu0 0.0
    %2693 = vmatprep.subr.mxu0 0.0
    %2694 = vmatpush1.msra.mxu0 0.0
    %2695 = vmatprep.subr.mxu0 0.0
    %2696 = vmatpush1.msra.mxu0 0.0
    %2697 = vmatprep.subr.mxu0 0.0
    %2698 = vmatpush1.msra.mxu0 0.0
    %2699 = vmatprep.subr.mxu0 0.0
    %2700 = vmatpush1.msra.mxu0 0.0
    %2701 = vmatprep.subr.mxu0 0.0
    %2702 = vmatpush1.msra.mxu0 0.0
    %2703 = vmatprep.subr.mxu0 0.0
    %2704 = vmatpush1.msra.mxu0 0.0
    %2705 = vmatprep.subr.mxu0 0.0
    %2706 = vmatpush1.msra.mxu0 0.0
    %2707 = vmatprep.subr.mxu0 0.0
    %2708 = vmatpush1.msra.mxu0 0.0
    %2709 = vmatprep.subr.mxu0 0.0
    %2710 = vmatpush1.msra.mxu0 0.0
    %2711 = vmatprep.subr.mxu0 0.0
    %2712 = vmatpush1.msra.mxu0 0.0
    %2713 = vmatprep.subr.mxu0 0.0
    %2714 = vmatpush1.msra.mxu0 0.0
    %2715 = vmatprep.subr.mxu0 0.0
    %2716 = vmatpush1.msra.mxu0 0.0
    %2717 = vmatprep.subr.mxu0 0.0
    %2718 = vmatpush1.msra.mxu0 0.0
    %2719 = vmatprep.subr.mxu0 0.0
    %2720 = vmatpush1.msra.mxu0 0.0
    %2721 = vmatprep.subr.mxu0 0.0
    %2722 = vmatpush1.msra.mxu0 0.0
    %2723 = vmatprep.subr.mxu0 0.0
    %2724 = vmatpush1.msra.mxu0 0.0
    %2725 = vmatprep.subr.mxu0 0.0
    %2726 = vmatpush1.msra.mxu0 0.0
    %2727 = vmatprep.mubr.f32.mxu0 0.0
    %2728 = vmatmul.mubr.f32.gmra.mrb[0].mxu0 %v2661
    %v2729 = vpop.f32.mrb[0].mxu0
    %v2730 = vadd.f32 0.0, %v2729
    %v2731 = vpop.f32.mrb[0].mxu0
    %2732 = vdwg.mxu0
    %v2734 = vrot.slane %v2730, 6
    %v2736 = vadd.f32 %v2162, %v2734
    %v2737 = vxor.u32 %v2656, 2147483648
    %v2738 = vmul.f32 %v2737, 1.442695
    %v2739 = vpow.pop %v2738
    %v2740 = vadd.f32 %v2739, 1.0
    %v2741 = vrcp.pop %v2740
    %v2742 = vmul.f32 1.0, %v2741
    %v2743 = vtanh.pop %v2656
    %v2745 = vrot.slane %v2543, 6
    %v2747 = vmul.f32 %v2742, %v2745
    %2749 = vrot.lane.b32.xlu0 %v2743, 64
    %v2750 = vpop.permute.xlu0 %2749
    %v2752 = vmul.f32 %v2742, %v2750
    %2754 = vrot.lane.b32.xlu0 %v2752, 32
    %v2755 = vpop.permute.xlu0 %2754
    %v2757 = vadd.f32 %v2747, %v2755
    %v2758 = vtanh.pop %v2757
    %2760 = vrot.lane.b32.xlu0 %v2758, 64
    %v2761 = vpop.permute.xlu0 %2760
    %v2763 = vmul.f32 %v2742, %v2761
    %v2764 = vxor.u32 %v2736, 2147483648
    %v2765 = vmul.f32 %v2764, 1.442695
    %v2766 = vpow.pop %v2765
    %v2767 = vadd.f32 %v2766, 1.0
    %v2768 = vrcp.pop %v2767
    %v2769 = vmul.f32 1.0, %v2768
    %v2770 = vtanh.pop %v2736
    %v2772 = vrot.slane %v2570, 2
    %v2774 = vmul.f32 %v2769, %v2772
    %2776 = vrot.lane.b32.xlu0 %v2770, 64
    %v2777 = vpop.permute.xlu0 %2776
    %v2779 = vmul.f32 %v2769, %v2777
    %2781 = vrot.lane.b32.xlu0 %v2779, 32
    %v2782 = vpop.permute.xlu0 %2781
    %v2784 = vadd.f32 %v2774, %v2782
    %v2785 = vtanh.pop %v2784
    %2787 = vrot.lane.b32.xlu0 %v2785, 64
    %v2788 = vpop.permute.xlu0 %2787
    %v2790 = vmul.f32 %v2769, %v2788
    %v2792 = vrot.slane %v2763, 4
    %2793 = vrot.lane.b32.xlu0 %v2792, 32
    %v2794 = vpop.permute.xlu0 %2793
    %v2795 = vsel %vm259, %v2794, 0
    %2797 = vmatprep.subr.mxu0 0.0
    %2798 = vmatpush1.msra.mxu0 %v2163
    %2799 = vmatprep.subr.mxu0 0.0
    %2800 = vmatpush1.msra.mxu0 %v2164
    %2801 = vmatprep.subr.mxu0 0.0
    %2802 = vmatpush1.msra.mxu0 %v2165
    %2803 = vmatprep.subr.mxu0 0.0
    %2804 = vmatpush1.msra.mxu0 %v2166
    %2805 = vmatprep.subr.mxu0 0.0
    %2806 = vmatpush1.msra.mxu0 0.0
    %2807 = vmatprep.subr.mxu0 0.0
    %2808 = vmatpush1.msra.mxu0 0.0
    %2809 = vmatprep.subr.mxu0 0.0
    %2810 = vmatpush1.msra.mxu0 0.0
    %2811 = vmatprep.subr.mxu0 0.0
    %2812 = vmatpush1.msra.mxu0 0.0
    %2813 = vmatprep.subr.mxu0 0.0
    %2814 = vmatpush1.msra.mxu0 0.0
    %2815 = vmatprep.subr.mxu0 0.0
    %2816 = vmatpush1.msra.mxu0 0.0
    %2817 = vmatprep.subr.mxu0 0.0
    %2818 = vmatpush1.msra.mxu0 0.0
    %2819 = vmatprep.subr.mxu0 0.0
    %2820 = vmatpush1.msra.mxu0 0.0
    %2821 = vmatprep.subr.mxu0 0.0
    %2822 = vmatpush1.msra.mxu0 0.0
    %2823 = vmatprep.subr.mxu0 0.0
    %2824 = vmatpush1.msra.mxu0 0.0
    %2825 = vmatprep.subr.mxu0 0.0
    %2826 = vmatpush1.msra.mxu0 0.0
    %2827 = vmatprep.subr.mxu0 0.0
    %2828 = vmatpush1.msra.mxu0 0.0
    %2829 = vmatprep.subr.mxu0 0.0
    %2830 = vmatpush1.msra.mxu0 0.0
    %2831 = vmatprep.subr.mxu0 0.0
    %2832 = vmatpush1.msra.mxu0 0.0
    %2833 = vmatprep.subr.mxu0 0.0
    %2834 = vmatpush1.msra.mxu0 0.0
    %2835 = vmatprep.subr.mxu0 0.0
    %2836 = vmatpush1.msra.mxu0 0.0
    %2837 = vmatprep.subr.mxu0 0.0
    %2838 = vmatpush1.msra.mxu0 0.0
    %2839 = vmatprep.subr.mxu0 0.0
    %2840 = vmatpush1.msra.mxu0 0.0
    %2841 = vmatprep.subr.mxu0 0.0
    %2842 = vmatpush1.msra.mxu0 0.0
    %2843 = vmatprep.subr.mxu0 0.0
    %2844 = vmatpush1.msra.mxu0 0.0
    %2845 = vmatprep.subr.mxu0 0.0
    %2846 = vmatpush1.msra.mxu0 0.0
    %2847 = vmatprep.subr.mxu0 0.0
    %2848 = vmatpush1.msra.mxu0 0.0
    %2849 = vmatprep.subr.mxu0 0.0
    %2850 = vmatpush1.msra.mxu0 0.0
    %2851 = vmatprep.subr.mxu0 0.0
    %2852 = vmatpush1.msra.mxu0 0.0
    %2853 = vmatprep.subr.mxu0 0.0
    %2854 = vmatpush1.msra.mxu0 0.0
    %2855 = vmatprep.subr.mxu0 0.0
    %2856 = vmatpush1.msra.mxu0 0.0
    %2857 = vmatprep.subr.mxu0 0.0
    %2858 = vmatpush1.msra.mxu0 0.0
    %2859 = vmatprep.subr.mxu0 0.0
    %2860 = vmatpush1.msra.mxu0 0.0
    %2861 = vmatprep.mubr.f32.mxu0 0.0
    %2862 = vmatmul.mubr.f32.gmra.mrb[0].mxu0 %v2795
    %v2863 = vpop.f32.mrb[0].mxu0
    %v2864 = vadd.f32 0.0, %v2863
    %v2865 = vpop.f32.mrb[0].mxu0
    %2866 = vdwg.mxu0
    %v2868 = vrot.slane %v2864, 2
    %v2870 = vadd.f32 %v2159, %v2868
    %v2872 = vrot.slane %v2790, 2
    %2873 = vrot.lane.b32.xlu0 %v2872, 32
    %v2874 = vpop.permute.xlu0 %2873
    %v2875 = vsel %vm259, %v2874, 0
    %2877 = vmatprep.subr.mxu0 0.0
    %2878 = vmatpush1.msra.mxu0 %v2167
    %2879 = vmatprep.subr.mxu0 0.0
    %2880 = vmatpush1.msra.mxu0 %v2168
    %2881 = vmatprep.subr.mxu0 0.0
    %2882 = vmatpush1.msra.mxu0 %v2169
    %2883 = vmatprep.subr.mxu0 0.0
    %2884 = vmatpush1.msra.mxu0 %v2170
    %2885 = vmatprep.subr.mxu0 0.0
    %2886 = vmatpush1.msra.mxu0 0.0
    %2887 = vmatprep.subr.mxu0 0.0
    %2888 = vmatpush1.msra.mxu0 0.0
    %2889 = vmatprep.subr.mxu0 0.0
    %2890 = vmatpush1.msra.mxu0 0.0
    %2891 = vmatprep.subr.mxu0 0.0
    %2892 = vmatpush1.msra.mxu0 0.0
    %2893 = vmatprep.subr.mxu0 0.0
    %2894 = vmatpush1.msra.mxu0 0.0
    %2895 = vmatprep.subr.mxu0 0.0
    %2896 = vmatpush1.msra.mxu0 0.0
    %2897 = vmatprep.subr.mxu0 0.0
    %2898 = vmatpush1.msra.mxu0 0.0
    %2899 = vmatprep.subr.mxu0 0.0
    %2900 = vmatpush1.msra.mxu0 0.0
    %2901 = vmatprep.subr.mxu0 0.0
    %2902 = vmatpush1.msra.mxu0 0.0
    %2903 = vmatprep.subr.mxu0 0.0
    %2904 = vmatpush1.msra.mxu0 0.0
    %2905 = vmatprep.subr.mxu0 0.0
    %2906 = vmatpush1.msra.mxu0 0.0
    %2907 = vmatprep.subr.mxu0 0.0
    %2908 = vmatpush1.msra.mxu0 0.0
    %2909 = vmatprep.subr.mxu0 0.0
    %2910 = vmatpush1.msra.mxu0 0.0
    %2911 = vmatprep.subr.mxu0 0.0
    %2912 = vmatpush1.msra.mxu0 0.0
    %2913 = vmatprep.subr.mxu0 0.0
    %2914 = vmatpush1.msra.mxu0 0.0
    %2915 = vmatprep.subr.mxu0 0.0
    %2916 = vmatpush1.msra.mxu0 0.0
    %2917 = vmatprep.subr.mxu0 0.0
    %2918 = vmatpush1.msra.mxu0 0.0
    %2919 = vmatprep.subr.mxu0 0.0
    %2920 = vmatpush1.msra.mxu0 0.0
    %2921 = vmatprep.subr.mxu0 0.0
    %2922 = vmatpush1.msra.mxu0 0.0
    %2923 = vmatprep.subr.mxu0 0.0
    %2924 = vmatpush1.msra.mxu0 0.0
    %2925 = vmatprep.subr.mxu0 0.0
    %2926 = vmatpush1.msra.mxu0 0.0
    %2927 = vmatprep.subr.mxu0 0.0
    %2928 = vmatpush1.msra.mxu0 0.0
    %2929 = vmatprep.subr.mxu0 0.0
    %2930 = vmatpush1.msra.mxu0 0.0
    %2931 = vmatprep.subr.mxu0 0.0
    %2932 = vmatpush1.msra.mxu0 0.0
    %2933 = vmatprep.subr.mxu0 0.0
    %2934 = vmatpush1.msra.mxu0 0.0
    %2935 = vmatprep.subr.mxu0 0.0
    %2936 = vmatpush1.msra.mxu0 0.0
    %2937 = vmatprep.subr.mxu0 0.0
    %2938 = vmatpush1.msra.mxu0 0.0
    %2939 = vmatprep.subr.mxu0 0.0
    %2940 = vmatpush1.msra.mxu0 0.0
    %2941 = vmatprep.mubr.f32.mxu0 0.0
    %2942 = vmatmul.mubr.f32.gmra.mrb[0].mxu0 %v2875
    %v2943 = vpop.f32.mrb[0].mxu0
    %v2944 = vadd.f32 0.0, %v2943
    %v2945 = vpop.f32.mrb[0].mxu0
    %2946 = vdwg.mxu0
    %v2947 = vadd.f32 %v2162, %v2944
    %v2948 = vxor.u32 %v2870, 2147483648
    %v2949 = vmul.f32 %v2948, 1.442695
    %v2950 = vpow.pop %v2949
    %v2951 = vadd.f32 %v2950, 1.0
    %v2952 = vrcp.pop %v2951
    %v2953 = vmul.f32 1.0, %v2952
    %v2954 = vtanh.pop %v2870
    %v2956 = vrot.slane %v2757, 6
    %v2958 = vmul.f32 %v2953, %v2956
    %2960 = vrot.lane.b32.xlu0 %v2954, 64
    %v2961 = vpop.permute.xlu0 %2960
    %v2963 = vmul.f32 %v2953, %v2961
    %2965 = vrot.lane.b32.xlu0 %v2963, 32
    %v2966 = vpop.permute.xlu0 %2965
    %v2968 = vadd.f32 %v2958, %v2966
    %v2969 = vtanh.pop %v2968
    %2971 = vrot.lane.b32.xlu0 %v2969, 64
    %v2972 = vpop.permute.xlu0 %2971
    %v2974 = vmul.f32 %v2953, %v2972
    %v2975 = vxor.u32 %v2947, 2147483648
    %v2976 = vmul.f32 %v2975, 1.442695
    %v2977 = vpow.pop %v2976
    %v2978 = vadd.f32 %v2977, 1.0
    %v2979 = vrcp.pop %v2978
    %v2980 = vmul.f32 1.0, %v2979
    %v2981 = vtanh.pop %v2947
    %v2983 = vrot.slane %v2784, 2
    %v2985 = vmul.f32 %v2980, %v2983
    %2987 = vrot.lane.b32.xlu0 %v2981, 64
    %v2988 = vpop.permute.xlu0 %2987
    %v2990 = vmul.f32 %v2980, %v2988
    %2992 = vrot.lane.b32.xlu0 %v2990, 32
    %v2993 = vpop.permute.xlu0 %2992
    %v2995 = vadd.f32 %v2985, %v2993
    %v2996 = vtanh.pop %v2995
    %2998 = vrot.lane.b32.xlu0 %v2996, 64
    %v2999 = vpop.permute.xlu0 %2998
    %v3001 = vmul.f32 %v2980, %v2999
    %v3003 = vrot.slane %v2974, 6
    %3004 = vrot.lane.b32.xlu0 %v3003, 32
    %v3005 = vpop.permute.xlu0 %3004
    %v3006 = vsel %vm259, %v3005, 0
    %3008 = vmatprep.subr.mxu0 0.0
    %3009 = vmatpush1.msra.mxu0 %v2163
    %3010 = vmatprep.subr.mxu0 0.0
    %3011 = vmatpush1.msra.mxu0 %v2164
    %3012 = vmatprep.subr.mxu0 0.0
    %3013 = vmatpush1.msra.mxu0 %v2165
    %3014 = vmatprep.subr.mxu0 0.0
    %3015 = vmatpush1.msra.mxu0 %v2166
    %3016 = vmatprep.subr.mxu0 0.0
    %3017 = vmatpush1.msra.mxu0 0.0
    %3018 = vmatprep.subr.mxu0 0.0
    %3019 = vmatpush1.msra.mxu0 0.0
    %3020 = vmatprep.subr.mxu0 0.0
    %3021 = vmatpush1.msra.mxu0 0.0
    %3022 = vmatprep.subr.mxu0 0.0
    %3023 = vmatpush1.msra.mxu0 0.0
    %3024 = vmatprep.subr.mxu0 0.0
    %3025 = vmatpush1.msra.mxu0 0.0
    %3026 = vmatprep.subr.mxu0 0.0
    %3027 = vmatpush1.msra.mxu0 0.0
    %3028 = vmatprep.subr.mxu0 0.0
    %3029 = vmatpush1.msra.mxu0 0.0
    %3030 = vmatprep.subr.mxu0 0.0
    %3031 = vmatpush1.msra.mxu0 0.0
    %3032 = vmatprep.subr.mxu0 0.0
    %3033 = vmatpush1.msra.mxu0 0.0
    %3034 = vmatprep.subr.mxu0 0.0
    %3035 = vmatpush1.msra.mxu0 0.0
    %3036 = vmatprep.subr.mxu0 0.0
    %3037 = vmatpush1.msra.mxu0 0.0
    %3038 = vmatprep.subr.mxu0 0.0
    %3039 = vmatpush1.msra.mxu0 0.0
    %3040 = vmatprep.subr.mxu0 0.0
    %3041 = vmatpush1.msra.mxu0 0.0
    %3042 = vmatprep.subr.mxu0 0.0
    %3043 = vmatpush1.msra.mxu0 0.0
    %3044 = vmatprep.subr.mxu0 0.0
    %3045 = vmatpush1.msra.mxu0 0.0
    %3046 = vmatprep.subr.mxu0 0.0
    %3047 = vmatpush1.msra.mxu0 0.0
    %3048 = vmatprep.subr.mxu0 0.0
    %3049 = vmatpush1.msra.mxu0 0.0
    %3050 = vmatprep.subr.mxu0 0.0
    %3051 = vmatpush1.msra.mxu0 0.0
    %3052 = vmatprep.subr.mxu0 0.0
    %3053 = vmatpush1.msra.mxu0 0.0
    %3054 = vmatprep.subr.mxu0 0.0
    %3055 = vmatpush1.msra.mxu0 0.0
    %3056 = vmatprep.subr.mxu0 0.0
    %3057 = vmatpush1.msra.mxu0 0.0
    %3058 = vmatprep.subr.mxu0 0.0
    %3059 = vmatpush1.msra.mxu0 0.0
    %3060 = vmatprep.subr.mxu0 0.0
    %3061 = vmatpush1.msra.mxu0 0.0
    %3062 = vmatprep.subr.mxu0 0.0
    %3063 = vmatpush1.msra.mxu0 0.0
    %3064 = vmatprep.subr.mxu0 0.0
    %3065 = vmatpush1.msra.mxu0 0.0
    %3066 = vmatprep.subr.mxu0 0.0
    %3067 = vmatpush1.msra.mxu0 0.0
    %3068 = vmatprep.subr.mxu0 0.0
    %3069 = vmatpush1.msra.mxu0 0.0
    %3070 = vmatprep.subr.mxu0 0.0
    %3071 = vmatpush1.msra.mxu0 0.0
    %3072 = vmatprep.mubr.f32.mxu0 0.0
    %3073 = vmatmul.mubr.f32.gmra.mrb[0].mxu0 %v3006
    %v3074 = vpop.f32.mrb[0].mxu0
    %v3075 = vadd.f32 0.0, %v3074
    %v3076 = vpop.f32.mrb[0].mxu0
    %3077 = vdwg.mxu0
    %v3078 = vadd.f32 %v2161, %v3075
    %3080 = vrot.lane.b32.xlu0 %v3001, 32
    %v3081 = vpop.permute.xlu0 %3080
    %v3082 = vsel %vm259, %v3081, 0
    %3084 = vmatprep.subr.mxu0 0.0
    %3085 = vmatpush1.msra.mxu0 %v2167
    %3086 = vmatprep.subr.mxu0 0.0
    %3087 = vmatpush1.msra.mxu0 %v2168
    %3088 = vmatprep.subr.mxu0 0.0
    %3089 = vmatpush1.msra.mxu0 %v2169
    %3090 = vmatprep.subr.mxu0 0.0
    %3091 = vmatpush1.msra.mxu0 %v2170
    %3092 = vmatprep.subr.mxu0 0.0
    %3093 = vmatpush1.msra.mxu0 0.0
    %3094 = vmatprep.subr.mxu0 0.0
    %3095 = vmatpush1.msra.mxu0 0.0
    %3096 = vmatprep.subr.mxu0 0.0
    %3097 = vmatpush1.msra.mxu0 0.0
    %3098 = vmatprep.subr.mxu0 0.0
    %3099 = vmatpush1.msra.mxu0 0.0
    %3100 = vmatprep.subr.mxu0 0.0
    %3101 = vmatpush1.msra.mxu0 0.0
    %3102 = vmatprep.subr.mxu0 0.0
    %3103 = vmatpush1.msra.mxu0 0.0
    %3104 = vmatprep.subr.mxu0 0.0
    %3105 = vmatpush1.msra.mxu0 0.0
    %3106 = vmatprep.subr.mxu0 0.0
    %3107 = vmatpush1.msra.mxu0 0.0
    %3108 = vmatprep.subr.mxu0 0.0
    %3109 = vmatpush1.msra.mxu0 0.0
    %3110 = vmatprep.subr.mxu0 0.0
    %3111 = vmatpush1.msra.mxu0 0.0
    %3112 = vmatprep.subr.mxu0 0.0
    %3113 = vmatpush1.msra.mxu0 0.0
    %3114 = vmatprep.subr.mxu0 0.0
    %3115 = vmatpush1.msra.mxu0 0.0
    %3116 = vmatprep.subr.mxu0 0.0
    %3117 = vmatpush1.msra.mxu0 0.0
    %3118 = vmatprep.subr.mxu0 0.0
    %3119 = vmatpush1.msra.mxu0 0.0
    %3120 = vmatprep.subr.mxu0 0.0
    %3121 = vmatpush1.msra.mxu0 0.0
    %3122 = vmatprep.subr.mxu0 0.0
    %3123 = vmatpush1.msra.mxu0 0.0
    %3124 = vmatprep.subr.mxu0 0.0
    %3125 = vmatpush1.msra.mxu0 0.0
    %3126 = vmatprep.subr.mxu0 0.0
    %3127 = vmatpush1.msra.mxu0 0.0
    %3128 = vmatprep.subr.mxu0 0.0
    %3129 = vmatpush1.msra.mxu0 0.0
    %3130 = vmatprep.subr.mxu0 0.0
    %3131 = vmatpush1.msra.mxu0 0.0
    %3132 = vmatprep.subr.mxu0 0.0
    %3133 = vmatpush1.msra.mxu0 0.0
    %3134 = vmatprep.subr.mxu0 0.0
    %3135 = vmatpush1.msra.mxu0 0.0
    %3136 = vmatprep.subr.mxu0 0.0
    %3137 = vmatpush1.msra.mxu0 0.0
    %3138 = vmatprep.subr.mxu0 0.0
    %3139 = vmatpush1.msra.mxu0 0.0
    %3140 = vmatprep.subr.mxu0 0.0
    %3141 = vmatpush1.msra.mxu0 0.0
    %3142 = vmatprep.subr.mxu0 0.0
    %3143 = vmatpush1.msra.mxu0 0.0
    %3144 = vmatprep.subr.mxu0 0.0
    %3145 = vmatpush1.msra.mxu0 0.0
    %3146 = vmatprep.subr.mxu0 0.0
    %3147 = vmatpush1.msra.mxu0 0.0
    %3148 = vmatprep.mubr.f32.mxu0 0.0
    %3149 = vmatmul.mubr.f32.gmra.mrb[0].mxu0 %v3082
    %v3150 = vpop.f32.mrb[0].mxu0
    %v3151 = vadd.f32 0.0, %v3150
    %v3152 = vpop.f32.mrb[0].mxu0
    %3153 = vdwg.mxu0
    %v3155 = vrot.slane %v3151, 2
    %v3157 = vadd.f32 %v2160, %v3155
    %v3158 = vxor.u32 %v3078, 2147483648
    %v3159 = vmul.f32 %v3158, 1.442695
    %v3160 = vpow.pop %v3159
    %v3161 = vadd.f32 %v3160, 1.0
    %v3162 = vrcp.pop %v3161
    %v3163 = vmul.f32 1.0, %v3162
    %v3164 = vtanh.pop %v3078
    %v3166 = vrot.slane %v2968, 6
    %v3168 = vmul.f32 %v3163, %v3166
    %3170 = vrot.lane.b32.xlu0 %v3164, 64
    %v3171 = vpop.permute.xlu0 %3170
    %v3173 = vmul.f32 %v3163, %v3171
    %3175 = vrot.lane.b32.xlu0 %v3173, 32
    %v3176 = vpop.permute.xlu0 %3175
    %v3178 = vadd.f32 %v3168, %v3176
    %v3179 = vtanh.pop %v3178
    %3181 = vrot.lane.b32.xlu0 %v3179, 64
    %v3182 = vpop.permute.xlu0 %3181
    %v3184 = vmul.f32 %v3163, %v3182
    %v3185 = vxor.u32 %v3157, 2147483648
    %v3186 = vmul.f32 %v3185, 1.442695
    %v3187 = vpow.pop %v3186
    %v3188 = vadd.f32 %v3187, 1.0
    %v3189 = vrcp.pop %v3188
    %v3190 = vmul.f32 1.0, %v3189
    %v3191 = vtanh.pop %v3157
    %v3193 = vrot.slane %v2995, 2
    %v3195 = vmul.f32 %v3190, %v3193
    %3197 = vrot.lane.b32.xlu0 %v3191, 64
    %v3198 = vpop.permute.xlu0 %3197
    %v3200 = vmul.f32 %v3190, %v3198
    %3202 = vrot.lane.b32.xlu0 %v3200, 32
    %v3203 = vpop.permute.xlu0 %3202
    %v3205 = vadd.f32 %v3195, %v3203
    %v3206 = vtanh.pop %v3205
    %3208 = vrot.lane.b32.xlu0 %v3206, 64
    %v3209 = vpop.permute.xlu0 %3208
    %v3211 = vmul.f32 %v3190, %v3209
    %3213 = vrot.lane.b32.xlu0 %v3184, 32
    %v3214 = vpop.permute.xlu0 %3213
    %v3215 = vsel %vm259, %v3214, 0
    %3217 = vmatprep.subr.mxu0 0.0
    %3218 = vmatpush1.msra.mxu0 %v2163
    %3219 = vmatprep.subr.mxu0 0.0
    %3220 = vmatpush1.msra.mxu0 %v2164
    %3221 = vmatprep.subr.mxu0 0.0
    %3222 = vmatpush1.msra.mxu0 %v2165
    %3223 = vmatprep.subr.mxu0 0.0
    %3224 = vmatpush1.msra.mxu0 %v2166
    %3225 = vmatprep.subr.mxu0 0.0
    %3226 = vmatpush1.msra.mxu0 0.0
    %3227 = vmatprep.subr.mxu0 0.0
    %3228 = vmatpush1.msra.mxu0 0.0
    %3229 = vmatprep.subr.mxu0 0.0
    %3230 = vmatpush1.msra.mxu0 0.0
    %3231 = vmatprep.subr.mxu0 0.0
    %3232 = vmatpush1.msra.mxu0 0.0
    %3233 = vmatprep.subr.mxu0 0.0
    %3234 = vmatpush1.msra.mxu0 0.0
    %3235 = vmatprep.subr.mxu0 0.0
    %3236 = vmatpush1.msra.mxu0 0.0
    %3237 = vmatprep.subr.mxu0 0.0
    %3238 = vmatpush1.msra.mxu0 0.0
    %3239 = vmatprep.subr.mxu0 0.0
    %3240 = vmatpush1.msra.mxu0 0.0
    %3241 = vmatprep.subr.mxu0 0.0
    %3242 = vmatpush1.msra.mxu0 0.0
    %3243 = vmatprep.subr.mxu0 0.0
    %3244 = vmatpush1.msra.mxu0 0.0
    %3245 = vmatprep.subr.mxu0 0.0
    %3246 = vmatpush1.msra.mxu0 0.0
    %3247 = vmatprep.subr.mxu0 0.0
    %3248 = vmatpush1.msra.mxu0 0.0
    %3249 = vmatprep.subr.mxu0 0.0
    %3250 = vmatpush1.msra.mxu0 0.0
    %3251 = vmatprep.subr.mxu0 0.0
    %3252 = vmatpush1.msra.mxu0 0.0
    %3253 = vmatprep.subr.mxu0 0.0
    %3254 = vmatpush1.msra.mxu0 0.0
    %3255 = vmatprep.subr.mxu0 0.0
    %3256 = vmatpush1.msra.mxu0 0.0
    %3257 = vmatprep.subr.mxu0 0.0
    %3258 = vmatpush1.msra.mxu0 0.0
    %3259 = vmatprep.subr.mxu0 0.0
    %3260 = vmatpush1.msra.mxu0 0.0
    %3261 = vmatprep.subr.mxu0 0.0
    %3262 = vmatpush1.msra.mxu0 0.0
    %3263 = vmatprep.subr.mxu0 0.0
    %3264 = vmatpush1.msra.mxu0 0.0
    %3265 = vmatprep.subr.mxu0 0.0
    %3266 = vmatpush1.msra.mxu0 0.0
    %3267 = vmatprep.subr.mxu0 0.0
    %3268 = vmatpush1.msra.mxu0 0.0
    %3269 = vmatprep.subr.mxu0 0.0
    %3270 = vmatpush1.msra.mxu0 0.0
    %3271 = vmatprep.subr.mxu0 0.0
    %3272 = vmatpush1.msra.mxu0 0.0
    %3273 = vmatprep.subr.mxu0 0.0
    %3274 = vmatpush1.msra.mxu0 0.0
    %3275 = vmatprep.subr.mxu0 0.0
    %3276 = vmatpush1.msra.mxu0 0.0
    %3277 = vmatprep.subr.mxu0 0.0
    %3278 = vmatpush1.msra.mxu0 0.0
    %3279 = vmatprep.subr.mxu0 0.0
    %3280 = vmatpush1.msra.mxu0 0.0
    %3281 = vmatprep.mubr.f32.mxu0 0.0
    %3282 = vmatmul.mubr.f32.gmra.mrb[0].mxu0 %v3215
    %v3283 = vpop.f32.mrb[0].mxu0
    %v3284 = vadd.f32 0.0, %v3283
    %v3285 = vpop.f32.mrb[0].mxu0
    %3286 = vdwg.mxu0
    %v3288 = vrot.slane %v3284, 6
    %v3290 = vadd.f32 %v2161, %v3288
    %v3292 = vrot.slane %v3211, 6
    %3293 = vrot.lane.b32.xlu0 %v3292, 32
    %v3294 = vpop.permute.xlu0 %3293
    %v3295 = vsel %vm259, %v3294, 0
    %3297 = vmatprep.subr.mxu0 0.0
    %3298 = vmatpush1.msra.mxu0 %v2167
    %3299 = vmatprep.subr.mxu0 0.0
    %3300 = vmatpush1.msra.mxu0 %v2168
    %3301 = vmatprep.subr.mxu0 0.0
    %3302 = vmatpush1.msra.mxu0 %v2169
    %3303 = vmatprep.subr.mxu0 0.0
    %3304 = vmatpush1.msra.mxu0 %v2170
    %3305 = vmatprep.subr.mxu0 0.0
    %3306 = vmatpush1.msra.mxu0 0.0
    %3307 = vmatprep.subr.mxu0 0.0
    %3308 = vmatpush1.msra.mxu0 0.0
    %3309 = vmatprep.subr.mxu0 0.0
    %3310 = vmatpush1.msra.mxu0 0.0
    %3311 = vmatprep.subr.mxu0 0.0
    %3312 = vmatpush1.msra.mxu0 0.0
    %3313 = vmatprep.subr.mxu0 0.0
    %3314 = vmatpush1.msra.mxu0 0.0
    %3315 = vmatprep.subr.mxu0 0.0
    %3316 = vmatpush1.msra.mxu0 0.0
    %3317 = vmatprep.subr.mxu0 0.0
    %3318 = vmatpush1.msra.mxu0 0.0
    %3319 = vmatprep.subr.mxu0 0.0
    %3320 = vmatpush1.msra.mxu0 0.0
    %3321 = vmatprep.subr.mxu0 0.0
    %3322 = vmatpush1.msra.mxu0 0.0
    %3323 = vmatprep.subr.mxu0 0.0
    %3324 = vmatpush1.msra.mxu0 0.0
    %3325 = vmatprep.subr.mxu0 0.0
    %3326 = vmatpush1.msra.mxu0 0.0
    %3327 = vmatprep.subr.mxu0 0.0
    %3328 = vmatpush1.msra.mxu0 0.0
    %3329 = vmatprep.subr.mxu0 0.0
    %3330 = vmatpush1.msra.mxu0 0.0
    %3331 = vmatprep.subr.mxu0 0.0
    %3332 = vmatpush1.msra.mxu0 0.0
    %3333 = vmatprep.subr.mxu0 0.0
    %3334 = vmatpush1.msra.mxu0 0.0
    %3335 = vmatprep.subr.mxu0 0.0
    %3336 = vmatpush1.msra.mxu0 0.0
    %3337 = vmatprep.subr.mxu0 0.0
    %3338 = vmatpush1.msra.mxu0 0.0
    %3339 = vmatprep.subr.mxu0 0.0
    %3340 = vmatpush1.msra.mxu0 0.0
    %3341 = vmatprep.subr.mxu0 0.0
    %3342 = vmatpush1.msra.mxu0 0.0
    %3343 = vmatprep.subr.mxu0 0.0
    %3344 = vmatpush1.msra.mxu0 0.0
    %3345 = vmatprep.subr.mxu0 0.0
    %3346 = vmatpush1.msra.mxu0 0.0
    %3347 = vmatprep.subr.mxu0 0.0
    %3348 = vmatpush1.msra.mxu0 0.0
    %3349 = vmatprep.subr.mxu0 0.0
    %3350 = vmatpush1.msra.mxu0 0.0
    %3351 = vmatprep.subr.mxu0 0.0
    %3352 = vmatpush1.msra.mxu0 0.0
    %3353 = vmatprep.subr.mxu0 0.0
    %3354 = vmatpush1.msra.mxu0 0.0
    %3355 = vmatprep.subr.mxu0 0.0
    %3356 = vmatpush1.msra.mxu0 0.0
    %3357 = vmatprep.subr.mxu0 0.0
    %3358 = vmatpush1.msra.mxu0 0.0
    %3359 = vmatprep.subr.mxu0 0.0
    %3360 = vmatpush1.msra.mxu0 0.0
    %3361 = vmatprep.mubr.f32.mxu0 0.0
    %3362 = vmatmul.mubr.f32.gmra.mrb[0].mxu0 %v3295
    %v3363 = vpop.f32.mrb[0].mxu0
    %v3364 = vadd.f32 0.0, %v3363
    %v3365 = vpop.f32.mrb[0].mxu0
    %3366 = vdwg.mxu0
    %v3368 = vrot.slane %v3364, 4
    %v3370 = vadd.f32 %v2160, %v3368
    %v3371 = vxor.u32 %v3290, 2147483648
    %v3372 = vmul.f32 %v3371, 1.442695
    %v3373 = vpow.pop %v3372
    %v3374 = vadd.f32 %v3373, 1.0
    %v3375 = vrcp.pop %v3374
    %v3376 = vmul.f32 1.0, %v3375
    %v3377 = vtanh.pop %v3290
    %v3379 = vrot.slane %v3178, 6
    %v3381 = vmul.f32 %v3376, %v3379
    %3383 = vrot.lane.b32.xlu0 %v3377, 64
    %v3384 = vpop.permute.xlu0 %3383
    %v3386 = vmul.f32 %v3376, %v3384
    %3388 = vrot.lane.b32.xlu0 %v3386, 32
    %v3389 = vpop.permute.xlu0 %3388
    %v3391 = vadd.f32 %v3381, %v3389
    %v3392 = vtanh.pop %v3391
    %3394 = vrot.lane.b32.xlu0 %v3392, 64
    %v3395 = vpop.permute.xlu0 %3394
    %v3397 = vmul.f32 %v3376, %v3395
    %v3398 = vxor.u32 %v3370, 2147483648
    %v3399 = vmul.f32 %v3398, 1.442695
    %v3400 = vpow.pop %v3399
    %v3401 = vadd.f32 %v3400, 1.0
    %v3402 = vrcp.pop %v3401
    %v3403 = vmul.f32 1.0, %v3402
    %v3404 = vtanh.pop %v3370
    %v3406 = vrot.slane %v3205, 2
    %v3408 = vmul.f32 %v3403, %v3406
    %3410 = vrot.lane.b32.xlu0 %v3404, 64
    %v3411 = vpop.permute.xlu0 %3410
    %v3413 = vmul.f32 %v3403, %v3411
    %3415 = vrot.lane.b32.xlu0 %v3413, 32
    %v3416 = vpop.permute.xlu0 %3415
    %v3418 = vadd.f32 %v3408, %v3416
    %v3419 = vtanh.pop %v3418
    %3421 = vrot.lane.b32.xlu0 %v3419, 64
    %v3422 = vpop.permute.xlu0 %3421
    %v3424 = vmul.f32 %v3403, %v3422
    %v3426 = vrot.slane %v3397, 2
    %3427 = vrot.lane.b32.xlu0 %v3426, 32
    %v3428 = vpop.permute.xlu0 %3427
    %v3429 = vsel %vm259, %v3428, 0
    %3431 = vmatprep.subr.mxu0 0.0
    %3432 = vmatpush1.msra.mxu0 %v2163
    %3433 = vmatprep.subr.mxu0 0.0
    %3434 = vmatpush1.msra.mxu0 %v2164
    %3435 = vmatprep.subr.mxu0 0.0
    %3436 = vmatpush1.msra.mxu0 %v2165
    %3437 = vmatprep.subr.mxu0 0.0
    %3438 = vmatpush1.msra.mxu0 %v2166
    %3439 = vmatprep.subr.mxu0 0.0
    %3440 = vmatpush1.msra.mxu0 0.0
    %3441 = vmatprep.subr.mxu0 0.0
    %3442 = vmatpush1.msra.mxu0 0.0
    %3443 = vmatprep.subr.mxu0 0.0
    %3444 = vmatpush1.msra.mxu0 0.0
    %3445 = vmatprep.subr.mxu0 0.0
    %3446 = vmatpush1.msra.mxu0 0.0
    %3447 = vmatprep.subr.mxu0 0.0
    %3448 = vmatpush1.msra.mxu0 0.0
    %3449 = vmatprep.subr.mxu0 0.0
    %3450 = vmatpush1.msra.mxu0 0.0
    %3451 = vmatprep.subr.mxu0 0.0
    %3452 = vmatpush1.msra.mxu0 0.0
    %3453 = vmatprep.subr.mxu0 0.0
    %3454 = vmatpush1.msra.mxu0 0.0
    %3455 = vmatprep.subr.mxu0 0.0
    %3456 = vmatpush1.msra.mxu0 0.0
    %3457 = vmatprep.subr.mxu0 0.0
    %3458 = vmatpush1.msra.mxu0 0.0
    %3459 = vmatprep.subr.mxu0 0.0
    %3460 = vmatpush1.msra.mxu0 0.0
    %3461 = vmatprep.subr.mxu0 0.0
    %3462 = vmatpush1.msra.mxu0 0.0
    %3463 = vmatprep.subr.mxu0 0.0
    %3464 = vmatpush1.msra.mxu0 0.0
    %3465 = vmatprep.subr.mxu0 0.0
    %3466 = vmatpush1.msra.mxu0 0.0
    %3467 = vmatprep.subr.mxu0 0.0
    %3468 = vmatpush1.msra.mxu0 0.0
    %3469 = vmatprep.subr.mxu0 0.0
    %3470 = vmatpush1.msra.mxu0 0.0
    %3471 = vmatprep.subr.mxu0 0.0
    %3472 = vmatpush1.msra.mxu0 0.0
    %3473 = vmatprep.subr.mxu0 0.0
    %3474 = vmatpush1.msra.mxu0 0.0
    %3475 = vmatprep.subr.mxu0 0.0
    %3476 = vmatpush1.msra.mxu0 0.0
    %3477 = vmatprep.subr.mxu0 0.0
    %3478 = vmatpush1.msra.mxu0 0.0
    %3479 = vmatprep.subr.mxu0 0.0
    %3480 = vmatpush1.msra.mxu0 0.0
    %3481 = vmatprep.subr.mxu0 0.0
    %3482 = vmatpush1.msra.mxu0 0.0
    %3483 = vmatprep.subr.mxu0 0.0
    %3484 = vmatpush1.msra.mxu0 0.0
    %3485 = vmatprep.subr.mxu0 0.0
    %3486 = vmatpush1.msra.mxu0 0.0
    %3487 = vmatprep.subr.mxu0 0.0
    %3488 = vmatpush1.msra.mxu0 0.0
    %3489 = vmatprep.subr.mxu0 0.0
    %3490 = vmatpush1.msra.mxu0 0.0
    %3491 = vmatprep.subr.mxu0 0.0
    %3492 = vmatpush1.msra.mxu0 0.0
    %3493 = vmatprep.subr.mxu0 0.0
    %3494 = vmatpush1.msra.mxu0 0.0
    %3495 = vmatprep.mubr.f32.mxu0 0.0
    %3496 = vmatmul.mubr.f32.gmra.mrb[0].mxu0 %v3429
    %v3497 = vpop.f32.mrb[0].mxu0
    %v3498 = vadd.f32 0.0, %v3497
    %v3499 = vpop.f32.mrb[0].mxu0
    %3500 = vdwg.mxu0
    %v3502 = vrot.slane %v3498, 4
    %v3504 = vadd.f32 %v2161, %v3502
    %v3506 = vrot.slane %v3424, 4
    %3507 = vrot.lane.b32.xlu0 %v3506, 32
    %v3508 = vpop.permute.xlu0 %3507
    %v3509 = vsel %vm259, %v3508, 0
    %3511 = vmatprep.subr.mxu0 0.0
    %3512 = vmatpush1.msra.mxu0 %v2167
    %3513 = vmatprep.subr.mxu0 0.0
    %3514 = vmatpush1.msra.mxu0 %v2168
    %3515 = vmatprep.subr.mxu0 0.0
    %3516 = vmatpush1.msra.mxu0 %v2169
    %3517 = vmatprep.subr.mxu0 0.0
    %3518 = vmatpush1.msra.mxu0 %v2170
    %3519 = vmatprep.subr.mxu0 0.0
    %3520 = vmatpush1.msra.mxu0 0.0
    %3521 = vmatprep.subr.mxu0 0.0
    %3522 = vmatpush1.msra.mxu0 0.0
    %3523 = vmatprep.subr.mxu0 0.0
    %3524 = vmatpush1.msra.mxu0 0.0
    %3525 = vmatprep.subr.mxu0 0.0
    %3526 = vmatpush1.msra.mxu0 0.0
    %3527 = vmatprep.subr.mxu0 0.0
    %3528 = vmatpush1.msra.mxu0 0.0
    %3529 = vmatprep.subr.mxu0 0.0
    %3530 = vmatpush1.msra.mxu0 0.0
    %3531 = vmatprep.subr.mxu0 0.0
    %3532 = vmatpush1.msra.mxu0 0.0
    %3533 = vmatprep.subr.mxu0 0.0
    %3534 = vmatpush1.msra.mxu0 0.0
    %3535 = vmatprep.subr.mxu0 0.0
    %3536 = vmatpush1.msra.mxu0 0.0
    %3537 = vmatprep.subr.mxu0 0.0
    %3538 = vmatpush1.msra.mxu0 0.0
    %3539 = vmatprep.subr.mxu0 0.0
    %3540 = vmatpush1.msra.mxu0 0.0
    %3541 = vmatprep.subr.mxu0 0.0
    %3542 = vmatpush1.msra.mxu0 0.0
    %3543 = vmatprep.subr.mxu0 0.0
    %3544 = vmatpush1.msra.mxu0 0.0
    %3545 = vmatprep.subr.mxu0 0.0
    %3546 = vmatpush1.msra.mxu0 0.0
    %3547 = vmatprep.subr.mxu0 0.0
    %3548 = vmatpush1.msra.mxu0 0.0
    %3549 = vmatprep.subr.mxu0 0.0
    %3550 = vmatpush1.msra.mxu0 0.0
    %3551 = vmatprep.subr.mxu0 0.0
    %3552 = vmatpush1.msra.mxu0 0.0
    %3553 = vmatprep.subr.mxu0 0.0
    %3554 = vmatpush1.msra.mxu0 0.0
    %3555 = vmatprep.subr.mxu0 0.0
    %3556 = vmatpush1.msra.mxu0 0.0
    %3557 = vmatprep.subr.mxu0 0.0
    %3558 = vmatpush1.msra.mxu0 0.0
    %3559 = vmatprep.subr.mxu0 0.0
    %3560 = vmatpush1.msra.mxu0 0.0
    %3561 = vmatprep.subr.mxu0 0.0
    %3562 = vmatpush1.msra.mxu0 0.0
    %3563 = vmatprep.subr.mxu0 0.0
    %3564 = vmatpush1.msra.mxu0 0.0
    %3565 = vmatprep.subr.mxu0 0.0
    %3566 = vmatpush1.msra.mxu0 0.0
    %3567 = vmatprep.subr.mxu0 0.0
    %3568 = vmatpush1.msra.mxu0 0.0
    %3569 = vmatprep.subr.mxu0 0.0
    %3570 = vmatpush1.msra.mxu0 0.0
    %3571 = vmatprep.subr.mxu0 0.0
    %3572 = vmatpush1.msra.mxu0 0.0
    %3573 = vmatprep.subr.mxu0 0.0
    %3574 = vmatpush1.msra.mxu0 0.0
    %3575 = vmatprep.mubr.f32.mxu0 0.0
    %3576 = vmatmul.mubr.f32.gmra.mrb[0].mxu0 %v3509
    %v3577 = vpop.f32.mrb[0].mxu0
    %v3578 = vadd.f32 0.0, %v3577
    %v3579 = vpop.f32.mrb[0].mxu0
    %3580 = vdwg.mxu0
    %v3582 = vrot.slane %v3578, 6
    %v3584 = vadd.f32 %v2160, %v3582
    %v3585 = vxor.u32 %v3504, 2147483648
    %v3586 = vmul.f32 %v3585, 1.442695
    %v3587 = vpow.pop %v3586
    %v3588 = vadd.f32 %v3587, 1.0
    %v3589 = vrcp.pop %v3588
    %v3590 = vmul.f32 1.0, %v3589
    %v3591 = vtanh.pop %v3504
    %v3593 = vrot.slane %v3391, 6
    %v3595 = vmul.f32 %v3590, %v3593
    %3597 = vrot.lane.b32.xlu0 %v3591, 64
    %v3598 = vpop.permute.xlu0 %3597
    %v3600 = vmul.f32 %v3590, %v3598
    %3602 = vrot.lane.b32.xlu0 %v3600, 32
    %v3603 = vpop.permute.xlu0 %3602
    %v3605 = vadd.f32 %v3595, %v3603
    %v3606 = vtanh.pop %v3605
    %3608 = vrot.lane.b32.xlu0 %v3606, 64
    %v3609 = vpop.permute.xlu0 %3608
    %v3611 = vmul.f32 %v3590, %v3609
    %v3612 = vxor.u32 %v3584, 2147483648
    %v3613 = vmul.f32 %v3612, 1.442695
    %v3614 = vpow.pop %v3613
    %v3615 = vadd.f32 %v3614, 1.0
    %v3616 = vrcp.pop %v3615
    %v3617 = vmul.f32 1.0, %v3616
    %v3618 = vtanh.pop %v3584
    %v3620 = vrot.slane %v3418, 2
    %v3622 = vmul.f32 %v3617, %v3620
    %3624 = vrot.lane.b32.xlu0 %v3618, 64
    %v3625 = vpop.permute.xlu0 %3624
    %v3627 = vmul.f32 %v3617, %v3625
    %3629 = vrot.lane.b32.xlu0 %v3627, 32
    %v3630 = vpop.permute.xlu0 %3629
    %v3632 = vadd.f32 %v3622, %v3630
    %v3633 = vtanh.pop %v3632
    %3635 = vrot.lane.b32.xlu0 %v3633, 64
    %v3636 = vpop.permute.xlu0 %3635
    %v3638 = vmul.f32 %v3617, %v3636
    %v3640 = vrot.slane %v3611, 4
    %3641 = vrot.lane.b32.xlu0 %v3640, 32
    %v3642 = vpop.permute.xlu0 %3641
    %v3643 = vsel %vm259, %v3642, 0
    %3645 = vmatprep.subr.mxu0 0.0
    %3646 = vmatpush1.msra.mxu0 %v2163
    %3647 = vmatprep.subr.mxu0 0.0
    %3648 = vmatpush1.msra.mxu0 %v2164
    %3649 = vmatprep.subr.mxu0 0.0
    %3650 = vmatpush1.msra.mxu0 %v2165
    %3651 = vmatprep.subr.mxu0 0.0
    %3652 = vmatpush1.msra.mxu0 %v2166
    %3653 = vmatprep.subr.mxu0 0.0
    %3654 = vmatpush1.msra.mxu0 0.0
    %3655 = vmatprep.subr.mxu0 0.0
    %3656 = vmatpush1.msra.mxu0 0.0
    %3657 = vmatprep.subr.mxu0 0.0
    %3658 = vmatpush1.msra.mxu0 0.0
    %3659 = vmatprep.subr.mxu0 0.0
    %3660 = vmatpush1.msra.mxu0 0.0
    %3661 = vmatprep.subr.mxu0 0.0
    %3662 = vmatpush1.msra.mxu0 0.0
    %3663 = vmatprep.subr.mxu0 0.0
    %3664 = vmatpush1.msra.mxu0 0.0
    %3665 = vmatprep.subr.mxu0 0.0
    %3666 = vmatpush1.msra.mxu0 0.0
    %3667 = vmatprep.subr.mxu0 0.0
    %3668 = vmatpush1.msra.mxu0 0.0
    %3669 = vmatprep.subr.mxu0 0.0
    %3670 = vmatpush1.msra.mxu0 0.0
    %3671 = vmatprep.subr.mxu0 0.0
    %3672 = vmatpush1.msra.mxu0 0.0
    %3673 = vmatprep.subr.mxu0 0.0
    %3674 = vmatpush1.msra.mxu0 0.0
    %3675 = vmatprep.subr.mxu0 0.0
    %3676 = vmatpush1.msra.mxu0 0.0
    %3677 = vmatprep.subr.mxu0 0.0
    %3678 = vmatpush1.msra.mxu0 0.0
    %3679 = vmatprep.subr.mxu0 0.0
    %3680 = vmatpush1.msra.mxu0 0.0
    %3681 = vmatprep.subr.mxu0 0.0
    %3682 = vmatpush1.msra.mxu0 0.0
    %3683 = vmatprep.subr.mxu0 0.0
    %3684 = vmatpush1.msra.mxu0 0.0
    %3685 = vmatprep.subr.mxu0 0.0
    %3686 = vmatpush1.msra.mxu0 0.0
    %3687 = vmatprep.subr.mxu0 0.0
    %3688 = vmatpush1.msra.mxu0 0.0
    %3689 = vmatprep.subr.mxu0 0.0
    %3690 = vmatpush1.msra.mxu0 0.0
    %3691 = vmatprep.subr.mxu0 0.0
    %3692 = vmatpush1.msra.mxu0 0.0
    %3693 = vmatprep.subr.mxu0 0.0
    %3694 = vmatpush1.msra.mxu0 0.0
    %3695 = vmatprep.subr.mxu0 0.0
    %3696 = vmatpush1.msra.mxu0 0.0
    %3697 = vmatprep.subr.mxu0 0.0
    %3698 = vmatpush1.msra.mxu0 0.0
    %3699 = vmatprep.subr.mxu0 0.0
    %3700 = vmatpush1.msra.mxu0 0.0
    %3701 = vmatprep.subr.mxu0 0.0
    %3702 = vmatpush1.msra.mxu0 0.0
    %3703 = vmatprep.subr.mxu0 0.0
    %3704 = vmatpush1.msra.mxu0 0.0
    %3705 = vmatprep.subr.mxu0 0.0
    %3706 = vmatpush1.msra.mxu0 0.0
    %3707 = vmatprep.subr.mxu0 0.0
    %3708 = vmatpush1.msra.mxu0 0.0
    %3709 = vmatprep.mubr.f32.mxu0 0.0
    %3710 = vmatmul.mubr.f32.gmra.mrb[0].mxu0 %v3643
    %v3711 = vpop.f32.mrb[0].mxu0
    %v3712 = vadd.f32 0.0, %v3711
    %v3713 = vpop.f32.mrb[0].mxu0
    %3714 = vdwg.mxu0
    %v3716 = vrot.slane %v3712, 2
    %v3718 = vadd.f32 %v2161, %v3716
    %v3720 = vrot.slane %v3638, 2
    %3721 = vrot.lane.b32.xlu0 %v3720, 32
    %v3722 = vpop.permute.xlu0 %3721
    %v3723 = vsel %vm259, %v3722, 0
    %3725 = vmatprep.subr.mxu0 0.0
    %3726 = vmatpush1.msra.mxu0 %v2167
    %3727 = vmatprep.subr.mxu0 0.0
    %3728 = vmatpush1.msra.mxu0 %v2168
    %3729 = vmatprep.subr.mxu0 0.0
    %3730 = vmatpush1.msra.mxu0 %v2169
    %3731 = vmatprep.subr.mxu0 0.0
    %3732 = vmatpush1.msra.mxu0 %v2170
    %3733 = vmatprep.subr.mxu0 0.0
    %3734 = vmatpush1.msra.mxu0 0.0
    %3735 = vmatprep.subr.mxu0 0.0
    %3736 = vmatpush1.msra.mxu0 0.0
    %3737 = vmatprep.subr.mxu0 0.0
    %3738 = vmatpush1.msra.mxu0 0.0
    %3739 = vmatprep.subr.mxu0 0.0
    %3740 = vmatpush1.msra.mxu0 0.0
    %3741 = vmatprep.subr.mxu0 0.0
    %3742 = vmatpush1.msra.mxu0 0.0
    %3743 = vmatprep.subr.mxu0 0.0
    %3744 = vmatpush1.msra.mxu0 0.0
    %3745 = vmatprep.subr.mxu0 0.0
    %3746 = vmatpush1.msra.mxu0 0.0
    %3747 = vmatprep.subr.mxu0 0.0
    %3748 = vmatpush1.msra.mxu0 0.0
    %3749 = vmatprep.subr.mxu0 0.0
    %3750 = vmatpush1.msra.mxu0 0.0
    %3751 = vmatprep.subr.mxu0 0.0
    %3752 = vmatpush1.msra.mxu0 0.0
    %3753 = vmatprep.subr.mxu0 0.0
    %3754 = vmatpush1.msra.mxu0 0.0
    %3755 = vmatprep.subr.mxu0 0.0
    %3756 = vmatpush1.msra.mxu0 0.0
    %3757 = vmatprep.subr.mxu0 0.0
    %3758 = vmatpush1.msra.mxu0 0.0
    %3759 = vmatprep.subr.mxu0 0.0
    %3760 = vmatpush1.msra.mxu0 0.0
    %3761 = vmatprep.subr.mxu0 0.0
    %3762 = vmatpush1.msra.mxu0 0.0
    %3763 = vmatprep.subr.mxu0 0.0
    %3764 = vmatpush1.msra.mxu0 0.0
    %3765 = vmatprep.subr.mxu0 0.0
    %3766 = vmatpush1.msra.mxu0 0.0
    %3767 = vmatprep.subr.mxu0 0.0
    %3768 = vmatpush1.msra.mxu0 0.0
    %3769 = vmatprep.subr.mxu0 0.0
    %3770 = vmatpush1.msra.mxu0 0.0
    %3771 = vmatprep.subr.mxu0 0.0
    %3772 = vmatpush1.msra.mxu0 0.0
    %3773 = vmatprep.subr.mxu0 0.0
    %3774 = vmatpush1.msra.mxu0 0.0
    %3775 = vmatprep.subr.mxu0 0.0
    %3776 = vmatpush1.msra.mxu0 0.0
    %3777 = vmatprep.subr.mxu0 0.0
    %3778 = vmatpush1.msra.mxu0 0.0
    %3779 = vmatprep.subr.mxu0 0.0
    %3780 = vmatpush1.msra.mxu0 0.0
    %3781 = vmatprep.subr.mxu0 0.0
    %3782 = vmatpush1.msra.mxu0 0.0
    %3783 = vmatprep.subr.mxu0 0.0
    %3784 = vmatpush1.msra.mxu0 0.0
    %3785 = vmatprep.subr.mxu0 0.0
    %3786 = vmatpush1.msra.mxu0 0.0
    %3787 = vmatprep.subr.mxu0 0.0
    %3788 = vmatpush1.msra.mxu0 0.0
    %3789 = vmatprep.mubr.f32.mxu0 0.0
    %3790 = vmatmul.mubr.f32.gmra.mrb[0].mxu0 %v3723
    %v3791 = vpop.f32.mrb[0].mxu0
    %v3792 = vadd.f32 0.0, %v3791
    %v3793 = vpop.f32.mrb[0].mxu0
    %3794 = vdwg.mxu0
    %v3795 = vadd.f32 %v2160, %v3792
    %v3796 = vxor.u32 %v3718, 2147483648
    %v3797 = vmul.f32 %v3796, 1.442695
    %v3798 = vpow.pop %v3797
    %v3799 = vadd.f32 %v3798, 1.0
    %v3800 = vrcp.pop %v3799
    %v3801 = vmul.f32 1.0, %v3800
    %v3802 = vtanh.pop %v3718
    %v3804 = vrot.slane %v3605, 6
    %v3806 = vmul.f32 %v3801, %v3804
    %3808 = vrot.lane.b32.xlu0 %v3802, 64
    %v3809 = vpop.permute.xlu0 %3808
    %v3811 = vmul.f32 %v3801, %v3809
    %3813 = vrot.lane.b32.xlu0 %v3811, 32
    %v3814 = vpop.permute.xlu0 %3813
    %v3816 = vadd.f32 %v3806, %v3814
    %v3817 = vtanh.pop %v3816
    %3819 = vrot.lane.b32.xlu0 %v3817, 64
    %v3820 = vpop.permute.xlu0 %3819
    %v3822 = vmul.f32 %v3801, %v3820
    %v3823 = vxor.u32 %v3795, 2147483648
    %v3824 = vmul.f32 %v3823, 1.442695
    %v3825 = vpow.pop %v3824
    %v3826 = vadd.f32 %v3825, 1.0
    %v3827 = vrcp.pop %v3826
    %v3828 = vmul.f32 1.0, %v3827
    %v3829 = vtanh.pop %v3795
    %v3831 = vrot.slane %v3632, 2
    %v3833 = vmul.f32 %v3828, %v3831
    %3835 = vrot.lane.b32.xlu0 %v3829, 64
    %v3836 = vpop.permute.xlu0 %3835
    %v3838 = vmul.f32 %v3828, %v3836
    %3840 = vrot.lane.b32.xlu0 %v3838, 32
    %v3841 = vpop.permute.xlu0 %3840
    %v3843 = vadd.f32 %v3833, %v3841
    %v3844 = vtanh.pop %v3843
    %3846 = vrot.lane.b32.xlu0 %v3844, 64
    %v3847 = vpop.permute.xlu0 %3846
    %v3849 = vmul.f32 %v3828, %v3847
    %v3850 = vsel %vm1942, %v2339, %v2549
    %v3851 = vsel %vm1944, %v3850, %v2763
    %v3852 = vsel %vm1946, %v3851, %v2974
    %v3853 = vsel %vm1942, %v3184, %v3397
    %v3854 = vsel %vm1944, %v3853, %v3611
    %v3855 = vsel %vm1946, %v3854, %v3822
    %v3856 = vsel %vm1942, %v3849, %v3638
    %v3857 = vsel %vm1944, %v3856, %v3424
    %v3858 = vsel %vm1946, %v3857, %v3211
    %v3859 = vsel %vm1942, %v3001, %v2790
    %v3860 = vsel %vm1944, %v3859, %v2576
    %v3861 = vsel %vm1946, %v3860, %v2363
    %3864 = vrot.lane.b32.xlu0 %v3852, 32
    %v3865 = vpop.permute.xlu0 %3864
    %3866 = vrot.lane.b32.xlu0 %v3855, 32
    %v3867 = vpop.permute.xlu0 %3866
    %3872 = vrot.lane.b32.xlu0 %v3858, 64
    %v3873 = vpop.permute.xlu0 %3872
    %3874 = vrot.lane.b32.xlu0 %v3861, 64
    %v3875 = vpop.permute.xlu0 %3874
    %v3878 = vsel %vm259, %v3865, %v3873
    %v3879 = vsel %vm259, %v3867, %v3875
    %vm3880 = vcmask 523264
    %3881 = vst.msk [vmem:[#allocation14] sm:$0xff] %vm3880, %v3878
    %3882 = vst.msk [vmem:[#allocation14 + $0x8] sm:$0xff] %vm3880, %v3879
    // Predicated region
    $region70: #{tpu_custom_call.1} parent=1 // pred_check
      _
    $region71: #{tpu_custom_call.1} parent=1 // pred_check_branch
      %3884 = sbr.rel (0) target = $region73
    $region72: #{tpu_custom_call.1} parent=1 // pred_region
      %s3886 = ssub.s32 256, 256
      %3887 = vsyncadd [#allocation4], %s3886
      %s3888 = sshll.u32 [#allocation14], 4
      %s3889 = int_to_ptr.vmem [resolvable:$true] %s3888
      %3894 = dma.vmem_to_hbm [thread:$0]  %s3889, 256, %s10, [#allocation4], 128, 128, 8
    $region73: #{tpu_custom_call.1} parent=1 // pred_fallthru
      _
    // Predicated region
    $region74: #{tpu_custom_call.1} parent=1 // pred_check
      _
    $region75: #{tpu_custom_call.1} parent=1 // pred_check_branch
      %3896 = sbr.rel (0) target = $region77
    $region76: #{tpu_custom_call.1} parent=1 // pred_region
      %3897 = dma.done [#allocation4], 256
    $region77: #{tpu_custom_call.1} parent=1 // pred_fallthru
      _
    %3898 = vsyncpa [#allocation3], 1
    %3899 = vsyncpa [#allocation6], 1
    %3900 = vsyncpa [#allocation9], 1
    %3901 = vsyncpa [#allocation12], 1
    %3902 = vsyncpa [#allocation4], 1

</llo_original>
